<compile_context>
chip_gen: v7x
topology: tpu7x:2x2x1
jax: 0.10.0
libtpu: 0.0.40
codegen_flags: <defaults>
</compile_context>

<pallas_src>
import math
import numpy as np

import jax
import jax.numpy as jnp
from jax import lax
from jax.experimental import pallas as pl
from jax.experimental.pallas import tpu as pltpu


# ----------------------------- hyperparameters ------------------------------
N_MELS = 16
REF_ENC_FILTERS = [4, 8, 16]          # K = 3 conv layers
PROSODY_DIM = 8                       # GRU hidden = 2 * PROSODY_DIM = 16
GRU_HIDDEN = 2 * PROSODY_DIM
ENC_EMB_DIM = 32
REF_ATTN_DIM = 16
TY = 16                               # mel frames
SEQ_LEN = 8                           # text length
BATCH = 2
BN_EPS = 1e-5
SCORE_MASK_VALUE = 1e-9               # torch masked_fill value (NOT -inf)


# ------------------------------ fused kernel --------------------------------
def _fused_kernel(x_ref, emb_ref, mask_ref,
                  w0_ref, s0_ref, w1_ref, s1_ref, w2_ref, s2_ref,
                  wih_ref, bih_ref, whh_ref, bhh_ref, wqk_ref,
                  style_ref, align_ref):
    """Whole batch in one shot: conv stack -> GRU -> masked SDPA -> ReLU."""
    NT = x_ref.shape[0]                 # Ty * N (t-major rows: row = t*N + b)
    N = emb_ref.shape[0]                # batch
    Ty = NT // N
    Hh = whh_ref.shape[0]               # GRU hidden (= 2 * prosody_dim)
    P = Hh // 2                         # prosody dim (= attention d_k)

    # Boundary masks for the height shift (zero t==0 rows after +N roll,
    # t==Ty-1 rows after -N roll); the same masks also kill cross-batch bleed.
    rid = lax.broadcasted_iota(jnp.int32, (NT, 1), 0)
    not_first = (rid >= N).astype(jnp.float32)
    not_last = (rid < NT - N).astype(jnp.float32)

    def conv_layer(x, w_ref, s_ref):
        # x: [NT, Win*Cin]; w: [3*Win*Cin, Wout*Cout] (kh-stacked, BN scale folded);
        # s: [NT or 1, Wout*Cout] (bias + BN shift, + coord contribution for layer 0).
        x_prev = pltpu.roll(x, N, 0) * not_first          # row t-1 (0 at t == 0)
        x_next = pltpu.roll(x, NT - N, 0) * not_last      # row t+1 (0 at t == Ty-1)
        x_cat = jnp.concatenate([x_prev, x, x_next], axis=-1)
        y = jnp.dot(x_cat, w_ref[...], preferred_element_type=jnp.float32) + s_ref[...]
        return jnp.maximum(y, 0.0)

    x = conv_layer(x_ref[...], w0_ref, s0_ref)
    x = conv_layer(x, w1_ref, s1_ref)
    x = conv_layer(x, w2_ref, s2_ref)                     # [NT, Wlast*Clast]

    # ---- GRU (PyTorch gate order r|z|n), fully unrolled, batch on the sublane axis.
    x_proj = jnp.dot(x, wih_ref[...], preferred_element_type=jnp.float32) + bih_ref[...]
    whh = whh_ref[...]                                    # [Hh, 3*Hh], held resident
    bhh = bhh_ref[...]                                    # [1, 3*Hh]
    h = jnp.zeros((N, Hh), jnp.float32)
    hs = []
    for t in range(Ty):                                   # static unroll (Ty = 16)
        gh = jnp.dot(h, whh, preferred_element_type=jnp.float32) + bhh
        gx = x_proj[t * N:(t + 1) * N, :]                 # contiguous [N, 3*Hh] slice
        r = jax.nn.sigmoid(gx[:, 0:Hh] + gh[:, 0:Hh])
        z = jax.nn.sigmoid(gx[:, Hh:2 * Hh] + gh[:, Hh:2 * Hh])
        n = jnp.tanh(gx[:, 2 * Hh:] + r * gh[:, 2 * Hh:])
        h = (1.0 - z) * n + z * h
        hs.append(h)
    memory = jnp.stack(hs, axis=1)                        # [N, Ty, Hh]

    # ---- ScaledDotProductAttention (dropout = identity) + final ReLU.
    wqk = wqk_ref[...]                                    # [E, P], 1/sqrt(d_k) folded
    for b in range(N):                                    # tiny independent matmuls
        qf = jnp.dot(emb_ref[b], wqk, preferred_element_type=jnp.float32)   # [Lq, P]
        kb = memory[b, :, :P]                             # [Lk, P]
        vb = memory[b, :, P:]                             # [Lk, P]
        scores = lax.dot_general(qf, kb, (((1,), (1,)), ((), ())),
                                 preferred_element_type=jnp.float32)        # [Lq, Lk]
        scores = jnp.where(mask_ref[b] == 0.0, SCORE_MASK_VALUE, scores)
        m = jnp.max(scores, axis=-1, keepdims=True)
        e = jnp.exp(scores - m)
        wts = e / jnp.sum(e, axis=-1, keepdims=True)      # exact softmax
        ctx = jnp.dot(wts, vb, preferred_element_type=jnp.float32)
        style_ref[b] = jnp.maximum(ctx, 0.0)
        align_ref[b] = wts


# ----------------- one-time weight lowering (outside jit) -------------------
def prepare_operands(params, batch, n_frames):
    """Lower module weights into kernel-ready operands. Run ONCE at load time."""
    H, W = n_frames, N_MELS

    # mellotron AddCoords(rank=2, with_r=True) constant channels (xx, yy, rr).
    xx = np.broadcast_to(
        (np.arange(H, dtype=np.float32) / (H - 1) * 2.0 - 1.0)[:, None], (H, W))
    yy = np.broadcast_to(
        (np.arange(W, dtype=np.float32) / (W - 1) * 2.0 - 1.0)[None, :], (H, W))
    rr = np.sqrt((xx - 0.5) ** 2 + (yy - 0.5) ** 2)
    coords = np.stack([xx, yy, rr], axis=-1).astype(np.float32)        # [H, W, 3]

    def conv_row_mats(w, w_in):
        # Conv2d(3x3, stride=(1,2), pad=(1,1)) weight [Cout,Cin,3,3] ->
        # [3, w_in*Cin, w_out*Cout] matrices acting on rows laid out as (w*Cin + c).
        c_out, c_in = w.shape[0], w.shape[1]
        w_out = (w_in - 3 + 2) // 2 + 1
        mats = np.zeros((3, w_in * c_in, w_out * c_out), np.float32)
        for kh in range(3):
            for kw in range(3):
                sel = np.zeros((w_in, w_out), np.float32)
                for wo in range(w_out):
                    wi = 2 * wo + kw - 1
                    if 0 <= wi < w_in:
                        sel[wi, wo] = 1.0
                mats[kh] += np.einsum("ab,cd->acbd", sel, w[:, :, kh, kw].T
                                      ).reshape(w_in * c_in, w_out * c_out)
        return mats, w_out

    ops = {}
    w_in = W
    c_last = w_last = None
    for li, (w, bias, gamma, beta, rmean, rvar) in enumerate(params["convs"]):
        w = np.asarray(w); bias = np.asarray(bias)
        gamma = np.asarray(gamma); beta = np.asarray(beta)
        rmean = np.asarray(rmean); rvar = np.asarray(rvar)
        c_out, c_in = w.shape[0], w.shape[1]
        mats, w_out = conv_row_mats(w, w_in)
        inv_std = gamma / np.sqrt(rvar + BN_EPS)
        col_scale = np.tile(inv_std, w_out)[None, :]                    # co minor
        col_shift = np.tile(beta + inv_std * (bias - rmean), w_out)[None, :]
        if li == 0:
            # Split mel channel (c = 0) from coord channels (c = 1..3); the coord
            # contribution is input-independent -> fold it into a per-row shift.
            mel_mats = mats[:, 0::c_in, :]                              # [3, w_in, cols]
            rows = np.zeros((H, w_in, c_in), np.float32)
            rows[:, :, 1:] = coords
            rows = rows.reshape(H, w_in * c_in)
            zero = np.zeros((1, w_in * c_in), np.float32)
            prev = np.concatenate([zero, rows[:-1]], axis=0)
            nxt = np.concatenate([rows[1:], zero], axis=0)
            coord_add = prev @ mats[0] + rows @ mats[1] + nxt @ mats[2]  # [H, cols]
            w_stacked = mel_mats.reshape(3 * w_in, w_out * c_out) * col_scale
            shift = coord_add * col_scale + col_shift                    # [H, cols]
            shift = np.repeat(shift, batch, axis=0)                      # t-major rows
        else:
            w_stacked = mats.reshape(3 * w_in * c_in, w_out * c_out) * col_scale
            shift = col_shift
        ops[f"w{li}"] = jnp.asarray(w_stacked)
        ops[f"s{li}"] = jnp.asarray(shift)
        w_in = w_out
        c_last, w_last = c_out, w_out

    # GRU: fold the conv-row layout (w*C + c) -> torch layout (c*W + w) into W_ih.
    w_ih, w_hh, b_ih, b_hh = (np.asarray(a) for a in params["gru"])
    h2 = w_hh.shape[1]
    w_ih_perm = (w_ih.reshape(3 * h2, c_last, w_last)
                 .transpose(0, 2, 1).reshape(3 * h2, w_last * c_last))
    ops["w_ih"] = jnp.asarray(np.ascontiguousarray(w_ih_perm.T))        # [in, 3*H2]
    ops["b_ih"] = jnp.asarray(b_ih.reshape(1, -1))
    ops["w_hh"] = jnp.asarray(np.ascontiguousarray(w_hh.T))             # [H2, 3*H2]
    ops["b_hh"] = jnp.asarray(b_hh.reshape(1, -1))

    # Attention: fold Wq^T Wk and the 1/sqrt(d_k) scale into one [E, P] matrix.
    wq, wk = (np.asarray(a) for a in params["attn"])                    # [A,E], [A,P]
    ops["wqk"] = jnp.asarray((wq.T @ wk) / math.sqrt(PROSODY_DIM))
    return ops


# ------------------------------- forward -------------------------------------
def text_side_prosody_encoder(ops, embedded_text, text_lengths, mels, mels_lengths):
    N = mels.shape[0]
    # torch .view(N, 1, -1, n_mels): rows = conv height, lanes = n_mels.
    x = mels.reshape(N, -1, N_MELS)                        # [N, H, W]
    H = x.shape[1]
    assert ops["s0"].shape[0] == H * N, "prepare_operands batch/frames mismatch"
    x_tm = jnp.transpose(x, (1, 0, 2)).reshape(H * N, N_MELS)   # t-major rows

    Lq = embedded_text.shape[1]
    Lk = H
    text_mask = (jnp.arange(Lq)[None, :] < text_lengths[:, None]).astype(jnp.float32)
    mel_mask = (jnp.arange(Lk)[None, :] < mels_lengths[:, None]).astype(jnp.float32)
    attn_mask = text_mask[:, :, None] * mel_mask[:, None, :]          # [N, Lq, Lk]

    vmem = pl.BlockSpec(memory_space=pltpu.MemorySpace.VMEM)
    style, align = pl.pallas_call(
        _fused_kernel,
        out_shape=(jax.ShapeDtypeStruct((N, Lq, PROSODY_DIM), jnp.float32),
                   jax.ShapeDtypeStruct((N, Lq, Lk), jnp.float32)),
        in_specs=[vmem] * 14,
        out_specs=(vmem, vmem),
    )(x_tm, embedded_text, attn_mask,
      ops["w0"], ops["s0"], ops["w1"], ops["s1"], ops["w2"], ops["s2"],
      ops["w_ih"], ops["b_ih"], ops["w_hh"], ops["b_hh"], ops["wqk"])
    return style, align


# ----------------------------- parameter init --------------------------------
def init_params(key):
    keys = jax.random.split(key, 24)
    ki = iter(keys)
    filters = [1] + REF_ENC_FILTERS
    convs = []
    for i in range(len(REF_ENC_FILTERS)):
        cin = filters[i] + (3 if i == 0 else 0)    # CoordConv adds xx/yy/rr channels
        cout = filters[i + 1]
        w = 0.1 * jax.random.normal(next(ki), (cout, cin, 3, 3), jnp.float32)
        b = 0.05 * jax.random.normal(next(ki), (cout,), jnp.float32)
        gamma = 1.0 + 0.1 * jax.random.normal(next(ki), (cout,), jnp.float32)
        beta = 0.05 * jax.random.normal(next(ki), (cout,), jnp.float32)
        run_mean = jnp.zeros((cout,), jnp.float32)
        run_var = jnp.ones((cout,), jnp.float32)
        convs.append((w, b, gamma, beta, run_mean, run_var))

    L = N_MELS
    for _ in range(len(REF_ENC_FILTERS)):
        L = (L - 3 + 2) // 2 + 1
    gru_in = REF_ENC_FILTERS[-1] * L
    H2 = GRU_HIDDEN
    s = 1.0 / math.sqrt(H2)
    w_ih = s * jax.random.normal(next(ki), (3 * H2, gru_in), jnp.float32)
    w_hh = s * jax.random.normal(next(ki), (3 * H2, H2), jnp.float32)
    b_ih = s * jax.random.normal(next(ki), (3 * H2,), jnp.float32)
    b_hh = s * jax.random.normal(next(ki), (3 * H2,), jnp.float32)

    wq = 0.2 * jax.random.normal(next(ki), (REF_ATTN_DIM, ENC_EMB_DIM), jnp.float32)
    wk = 0.2 * jax.random.normal(next(ki), (REF_ATTN_DIM, PROSODY_DIM), jnp.float32)

    return {"convs": convs, "gru": (w_ih, w_hh, b_ih, b_hh), "attn": (wq, wk)}


# ---------------------------------- main --------------------------------------
if __name__ == "__main__":
    key = jax.random.PRNGKey(0)
    kp, k1, k2 = jax.random.split(key, 3)
    params = init_params(kp)

    # One-time weight lowering at "model load" time -- NOT inside the jitted forward.
    ops = prepare_operands(params, batch=BATCH, n_frames=TY)

    embedded_text = jax.random.normal(k1, (BATCH, SEQ_LEN, ENC_EMB_DIM), jnp.float32)
    mels = jax.random.normal(k2, (BATCH, N_MELS, TY), jnp.float32)
    text_lengths = jnp.array([SEQ_LEN, SEQ_LEN - 2], jnp.int32)
    mels_lengths = jnp.array([TY, TY - 4], jnp.int32)

    fwd = jax.jit(text_side_prosody_encoder)
    style_embed, alignments = fwd(ops, embedded_text, text_lengths, mels, mels_lengths)
    jax.block_until_ready((style_embed, alignments))

    assert style_embed.shape == (BATCH, SEQ_LEN, PROSODY_DIM)
    assert alignments.shape == (BATCH, SEQ_LEN, TY)
    assert bool(jnp.all(jnp.isfinite(style_embed)))
    assert bool(jnp.all(jnp.isfinite(alignments)))
    print("KERNEL_OK")
</pallas_src>

<mosaic_0001>
module attributes {stable_mosaic.version = 11 : i64} {
  func.func @_fused_kernel(%arg0: memref<32x16xf32, #tpu.memory_space<vmem>>, %arg1: memref<2x8x32xf32, #tpu.memory_space<vmem>>, %arg2: memref<2x8x16xf32, #tpu.memory_space<vmem>>, %arg3: memref<48x32xf32, #tpu.memory_space<vmem>>, %arg4: memref<32x32xf32, #tpu.memory_space<vmem>>, %arg5: memref<96x32xf32, #tpu.memory_space<vmem>>, %arg6: memref<1x32xf32, #tpu.memory_space<vmem>>, %arg7: memref<96x32xf32, #tpu.memory_space<vmem>>, %arg8: memref<1x32xf32, #tpu.memory_space<vmem>>, %arg9: memref<32x48xf32, #tpu.memory_space<vmem>>, %arg10: memref<1x48xf32, #tpu.memory_space<vmem>>, %arg11: memref<16x48xf32, #tpu.memory_space<vmem>>, %arg12: memref<1x48xf32, #tpu.memory_space<vmem>>, %arg13: memref<32x8xf32, #tpu.memory_space<vmem>>, %arg14: memref<2x8x8xf32, #tpu.memory_space<vmem>>, %arg15: memref<2x8x16xf32, #tpu.memory_space<vmem>>) attributes {dimension_semantics = [], scalar_prefetch = 0 : i64, scratch_operands = 0 : i64, tpu.core_type = #tpu.core_type<tc>} {
    %0 = tpu.iota {dimensions = array<i32: 0>} : vector<32x1xi32>
    %c2_i32 = arith.constant 2 : i32
    %1 = vector.broadcast %c2_i32 : i32 to vector<32x1xi32>
    %2 = arith.cmpi sge, %0, %1 : vector<32x1xi32>
    %3 = arith.extui %2 : vector<32x1xi1> to vector<32x1xi32>
    %4 = arith.sitofp %3 : vector<32x1xi32> to vector<32x1xf32>
    %c30_i32 = arith.constant 30 : i32
    %5 = vector.broadcast %c30_i32 : i32 to vector<32x1xi32>
    %6 = arith.cmpi slt, %0, %5 : vector<32x1xi32>
    %7 = arith.extui %6 : vector<32x1xi1> to vector<32x1xi32>
    %8 = arith.sitofp %7 : vector<32x1xi32> to vector<32x1xf32>
    %c0 = arith.constant 0 : index
    %c0_0 = arith.constant 0 : index
    %9 = vector.load %arg0[%c0, %c0_0] : memref<32x16xf32, #tpu.memory_space<vmem>>, vector<32x16xf32>
    %c2_i32_1 = arith.constant 2 : i32
    %10 = tpu.dynamic_rotate %9 by %c2_i32_1 dim 0 : vector<32x16xf32>, i32 -> vector<32x16xf32>
    %11 = vector.broadcast %4 : vector<32x1xf32> to vector<32x16xf32>
    %12 = arith.mulf %10, %11 : vector<32x16xf32>
    %c30_i32_2 = arith.constant 30 : i32
    %13 = tpu.dynamic_rotate %9 by %c30_i32_2 dim 0 : vector<32x16xf32>, i32 -> vector<32x16xf32>
    %14 = vector.broadcast %8 : vector<32x1xf32> to vector<32x16xf32>
    %15 = arith.mulf %13, %14 : vector<32x16xf32>
    %16 = tpu.concatenate %12, %9, %15 in 1 : vector<32x16xf32>, vector<32x16xf32>, vector<32x16xf32> -> vector<32x48xf32>
    %c0_3 = arith.constant 0 : index
    %c0_4 = arith.constant 0 : index
    %17 = vector.load %arg3[%c0_3, %c0_4] : memref<48x32xf32, #tpu.memory_space<vmem>>, vector<48x32xf32>
    %cst = arith.constant dense<0.000000e+00> : vector<32x32xf32>
    %18 = tpu.matmul %16, %17, %cst {dimension_numbers = #tpu.dot_dimension_numbers<[1], [0], [0], [1], [0, 0, 1, 1], [], []>} : vector<32x48xf32>, vector<48x32xf32>, vector<32x32xf32> -> vector<32x32xf32>
    %c0_5 = arith.constant 0 : index
    %c0_6 = arith.constant 0 : index
    %19 = vector.load %arg4[%c0_5, %c0_6] : memref<32x32xf32, #tpu.memory_space<vmem>>, vector<32x32xf32>
    %20 = arith.addf %18, %19 : vector<32x32xf32>
    %cst_7 = arith.constant 0.000000e+00 : f32
    %21 = vector.broadcast %cst_7 : f32 to vector<32x32xf32>
    %22 = arith.maximumf %20, %21 : vector<32x32xf32>
    %c2_i32_8 = arith.constant 2 : i32
    %23 = tpu.dynamic_rotate %22 by %c2_i32_8 dim 0 : vector<32x32xf32>, i32 -> vector<32x32xf32>
    %24 = vector.broadcast %4 : vector<32x1xf32> to vector<32x32xf32>
    %25 = arith.mulf %23, %24 : vector<32x32xf32>
    %c30_i32_9 = arith.constant 30 : i32
    %26 = tpu.dynamic_rotate %22 by %c30_i32_9 dim 0 : vector<32x32xf32>, i32 -> vector<32x32xf32>
    %27 = vector.broadcast %8 : vector<32x1xf32> to vector<32x32xf32>
    %28 = arith.mulf %26, %27 : vector<32x32xf32>
    %29 = tpu.concatenate %25, %22, %28 in 1 : vector<32x32xf32>, vector<32x32xf32>, vector<32x32xf32> -> vector<32x96xf32>
    %c0_10 = arith.constant 0 : index
    %c0_11 = arith.constant 0 : index
    %30 = vector.load %arg5[%c0_10, %c0_11] : memref<96x32xf32, #tpu.memory_space<vmem>>, vector<96x32xf32>
    %cst_12 = arith.constant dense<0.000000e+00> : vector<32x32xf32>
    %31 = tpu.matmul %29, %30, %cst_12 {dimension_numbers = #tpu.dot_dimension_numbers<[1], [0], [0], [1], [0, 0, 1, 1], [], []>} : vector<32x96xf32>, vector<96x32xf32>, vector<32x32xf32> -> vector<32x32xf32>
    %c0_13 = arith.constant 0 : index
    %c0_14 = arith.constant 0 : index
    %32 = vector.load %arg6[%c0_13, %c0_14] : memref<1x32xf32, #tpu.memory_space<vmem>>, vector<1x32xf32>
    %33 = vector.broadcast %32 : vector<1x32xf32> to vector<32x32xf32>
    %34 = arith.addf %31, %33 : vector<32x32xf32>
    %cst_15 = arith.constant 0.000000e+00 : f32
    %35 = vector.broadcast %cst_15 : f32 to vector<32x32xf32>
    %36 = arith.maximumf %34, %35 : vector<32x32xf32>
    %c2_i32_16 = arith.constant 2 : i32
    %37 = tpu.dynamic_rotate %36 by %c2_i32_16 dim 0 : vector<32x32xf32>, i32 -> vector<32x32xf32>
    %38 = vector.broadcast %4 : vector<32x1xf32> to vector<32x32xf32>
    %39 = arith.mulf %37, %38 : vector<32x32xf32>
    %c30_i32_17 = arith.constant 30 : i32
    %40 = tpu.dynamic_rotate %36 by %c30_i32_17 dim 0 : vector<32x32xf32>, i32 -> vector<32x32xf32>
    %41 = vector.broadcast %8 : vector<32x1xf32> to vector<32x32xf32>
    %42 = arith.mulf %40, %41 : vector<32x32xf32>
    %43 = tpu.concatenate %39, %36, %42 in 1 : vector<32x32xf32>, vector<32x32xf32>, vector<32x32xf32> -> vector<32x96xf32>
    %c0_18 = arith.constant 0 : index
    %c0_19 = arith.constant 0 : index
    %44 = vector.load %arg7[%c0_18, %c0_19] : memref<96x32xf32, #tpu.memory_space<vmem>>, vector<96x32xf32>
    %cst_20 = arith.constant dense<0.000000e+00> : vector<32x32xf32>
    %45 = tpu.matmul %43, %44, %cst_20 {dimension_numbers = #tpu.dot_dimension_numbers<[1], [0], [0], [1], [0, 0, 1, 1], [], []>} : vector<32x96xf32>, vector<96x32xf32>, vector<32x32xf32> -> vector<32x32xf32>
    %c0_21 = arith.constant 0 : index
    %c0_22 = arith.constant 0 : index
    %46 = vector.load %arg8[%c0_21, %c0_22] : memref<1x32xf32, #tpu.memory_space<vmem>>, vector<1x32xf32>
    %47 = vector.broadcast %46 : vector<1x32xf32> to vector<32x32xf32>
    %48 = arith.addf %45, %47 : vector<32x32xf32>
    %cst_23 = arith.constant 0.000000e+00 : f32
    %49 = vector.broadcast %cst_23 : f32 to vector<32x32xf32>
    %50 = arith.maximumf %48, %49 : vector<32x32xf32>
    %c0_24 = arith.constant 0 : index
    %c0_25 = arith.constant 0 : index
    %51 = vector.load %arg9[%c0_24, %c0_25] : memref<32x48xf32, #tpu.memory_space<vmem>>, vector<32x48xf32>
    %cst_26 = arith.constant dense<0.000000e+00> : vector<32x48xf32>
    %52 = tpu.matmul %50, %51, %cst_26 {dimension_numbers = #tpu.dot_dimension_numbers<[1], [0], [0], [1], [0, 0, 1, 1], [], []>} : vector<32x32xf32>, vector<32x48xf32>, vector<32x48xf32> -> vector<32x48xf32>
    %c0_27 = arith.constant 0 : index
    %c0_28 = arith.constant 0 : index
    %53 = vector.load %arg10[%c0_27, %c0_28] : memref<1x48xf32, #tpu.memory_space<vmem>>, vector<1x48xf32>
    %54 = vector.broadcast %53 : vector<1x48xf32> to vector<32x48xf32>
    %55 = arith.addf %52, %54 : vector<32x48xf32>
    %c0_29 = arith.constant 0 : index
    %c0_30 = arith.constant 0 : index
    %56 = vector.load %arg11[%c0_29, %c0_30] : memref<16x48xf32, #tpu.memory_space<vmem>>, vector<16x48xf32>
    %c0_31 = arith.constant 0 : index
    %c0_32 = arith.constant 0 : index
    %57 = vector.load %arg12[%c0_31, %c0_32] : memref<1x48xf32, #tpu.memory_space<vmem>>, vector<1x48xf32>
    %cst_33 = arith.constant 0.000000e+00 : f32
    %58 = vector.broadcast %cst_33 : f32 to vector<2x16xf32>
    %cst_34 = arith.constant dense<0.000000e+00> : vector<2x48xf32>
    %59 = tpu.matmul %58, %56, %cst_34 {dimension_numbers = #tpu.dot_dimension_numbers<[1], [0], [0], [1], [0, 0, 1, 1], [], []>} : vector<2x16xf32>, vector<16x48xf32>, vector<2x48xf32> -> vector<2x48xf32>
    %60 = vector.broadcast %57 : vector<1x48xf32> to vector<2x48xf32>
    %61 = arith.addf %59, %60 : vector<2x48xf32>
    %62 = vector.extract_strided_slice %55 {offsets = [0, 0], sizes = [2, 48], strides = [1, 1]} : vector<32x48xf32> to vector<2x48xf32>
    %63 = vector.extract_strided_slice %62 {offsets = [0, 0], sizes = [2, 16], strides = [1, 1]} : vector<2x48xf32> to vector<2x16xf32>
    %64 = vector.extract_strided_slice %61 {offsets = [0, 0], sizes = [2, 16], strides = [1, 1]} : vector<2x48xf32> to vector<2x16xf32>
    %65 = arith.addf %63, %64 : vector<2x16xf32>
    %66 = arith.negf %65 : vector<2x16xf32>
    %67 = math.exp %66 : vector<2x16xf32>
    %cst_35 = arith.constant 1.000000e+00 : f32
    %68 = vector.broadcast %cst_35 : f32 to vector<2x16xf32>
    %69 = arith.addf %68, %67 : vector<2x16xf32>
    %70 = arith.divf %68, %69 : vector<2x16xf32>
    %71 = vector.extract_strided_slice %62 {offsets = [0, 16], sizes = [2, 16], strides = [1, 1]} : vector<2x48xf32> to vector<2x16xf32>
    %72 = vector.extract_strided_slice %61 {offsets = [0, 16], sizes = [2, 16], strides = [1, 1]} : vector<2x48xf32> to vector<2x16xf32>
    %73 = arith.addf %71, %72 : vector<2x16xf32>
    %74 = arith.negf %73 : vector<2x16xf32>
    %75 = math.exp %74 : vector<2x16xf32>
    %cst_36 = arith.constant 1.000000e+00 : f32
    %76 = vector.broadcast %cst_36 : f32 to vector<2x16xf32>
    %77 = arith.addf %76, %75 : vector<2x16xf32>
    %78 = arith.divf %76, %77 : vector<2x16xf32>
    %79 = vector.extract_strided_slice %62 {offsets = [0, 32], sizes = [2, 16], strides = [1, 1]} : vector<2x48xf32> to vector<2x16xf32>
    %80 = vector.extract_strided_slice %61 {offsets = [0, 32], sizes = [2, 16], strides = [1, 1]} : vector<2x48xf32> to vector<2x16xf32>
    %81 = arith.mulf %70, %80 : vector<2x16xf32>
    %82 = arith.addf %79, %81 : vector<2x16xf32>
    %83 = math.tanh %82 : vector<2x16xf32>
    %cst_37 = arith.constant 1.000000e+00 : f32
    %84 = vector.broadcast %cst_37 : f32 to vector<2x16xf32>
    %85 = arith.subf %84, %78 : vector<2x16xf32>
    %86 = arith.mulf %85, %83 : vector<2x16xf32>
    %87 = arith.mulf %78, %58 : vector<2x16xf32>
    %88 = arith.addf %86, %87 : vector<2x16xf32>
    %cst_38 = arith.constant dense<0.000000e+00> : vector<2x48xf32>
    %89 = tpu.matmul %88, %56, %cst_38 {dimension_numbers = #tpu.dot_dimension_numbers<[1], [0], [0], [1], [0, 0, 1, 1], [], []>} : vector<2x16xf32>, vector<16x48xf32>, vector<2x48xf32> -> vector<2x48xf32>
    %90 = vector.broadcast %57 : vector<1x48xf32> to vector<2x48xf32>
    %91 = arith.addf %89, %90 : vector<2x48xf32>
    %92 = vector.extract_strided_slice %55 {offsets = [2, 0], sizes = [2, 48], strides = [1, 1]} : vector<32x48xf32> to vector<2x48xf32>
    %93 = vector.extract_strided_slice %92 {offsets = [0, 0], sizes = [2, 16], strides = [1, 1]} : vector<2x48xf32> to vector<2x16xf32>
    %94 = vector.extract_strided_slice %91 {offsets = [0, 0], sizes = [2, 16], strides = [1, 1]} : vector<2x48xf32> to vector<2x16xf32>
    %95 = arith.addf %93, %94 : vector<2x16xf32>
    %96 = arith.negf %95 : vector<2x16xf32>
    %97 = math.exp %96 : vector<2x16xf32>
    %cst_39 = arith.constant 1.000000e+00 : f32
    %98 = vector.broadcast %cst_39 : f32 to vector<2x16xf32>
    %99 = arith.addf %98, %97 : vector<2x16xf32>
    %100 = arith.divf %98, %99 : vector<2x16xf32>
    %101 = vector.extract_strided_slice %92 {offsets = [0, 16], sizes = [2, 16], strides = [1, 1]} : vector<2x48xf32> to vector<2x16xf32>
    %102 = vector.extract_strided_slice %91 {offsets = [0, 16], sizes = [2, 16], strides = [1, 1]} : vector<2x48xf32> to vector<2x16xf32>
    %103 = arith.addf %101, %102 : vector<2x16xf32>
    %104 = arith.negf %103 : vector<2x16xf32>
    %105 = math.exp %104 : vector<2x16xf32>
    %cst_40 = arith.constant 1.000000e+00 : f32
    %106 = vector.broadcast %cst_40 : f32 to vector<2x16xf32>
    %107 = arith.addf %106, %105 : vector<2x16xf32>
    %108 = arith.divf %106, %107 : vector<2x16xf32>
    %109 = vector.extract_strided_slice %92 {offsets = [0, 32], sizes = [2, 16], strides = [1, 1]} : vector<2x48xf32> to vector<2x16xf32>
    %110 = vector.extract_strided_slice %91 {offsets = [0, 32], sizes = [2, 16], strides = [1, 1]} : vector<2x48xf32> to vector<2x16xf32>
    %111 = arith.mulf %100, %110 : vector<2x16xf32>
    %112 = arith.addf %109, %111 : vector<2x16xf32>
    %113 = math.tanh %112 : vector<2x16xf32>
    %cst_41 = arith.constant 1.000000e+00 : f32
    %114 = vector.broadcast %cst_41 : f32 to vector<2x16xf32>
    %115 = arith.subf %114, %108 : vector<2x16xf32>
    %116 = arith.mulf %115, %113 : vector<2x16xf32>
    %117 = arith.mulf %108, %88 : vector<2x16xf32>
    %118 = arith.addf %116, %117 : vector<2x16xf32>
    %cst_42 = arith.constant dense<0.000000e+00> : vector<2x48xf32>
    %119 = tpu.matmul %118, %56, %cst_42 {dimension_numbers = #tpu.dot_dimension_numbers<[1], [0], [0], [1], [0, 0, 1, 1], [], []>} : vector<2x16xf32>, vector<16x48xf32>, vector<2x48xf32> -> vector<2x48xf32>
    %120 = vector.broadcast %57 : vector<1x48xf32> to vector<2x48xf32>
    %121 = arith.addf %119, %120 : vector<2x48xf32>
    %122 = vector.extract_strided_slice %55 {offsets = [4, 0], sizes = [2, 48], strides = [1, 1]} : vector<32x48xf32> to vector<2x48xf32>
    %123 = vector.extract_strided_slice %122 {offsets = [0, 0], sizes = [2, 16], strides = [1, 1]} : vector<2x48xf32> to vector<2x16xf32>
    %124 = vector.extract_strided_slice %121 {offsets = [0, 0], sizes = [2, 16], strides = [1, 1]} : vector<2x48xf32> to vector<2x16xf32>
    %125 = arith.addf %123, %124 : vector<2x16xf32>
    %126 = arith.negf %125 : vector<2x16xf32>
    %127 = math.exp %126 : vector<2x16xf32>
    %cst_43 = arith.constant 1.000000e+00 : f32
    %128 = vector.broadcast %cst_43 : f32 to vector<2x16xf32>
    %129 = arith.addf %128, %127 : vector<2x16xf32>
    %130 = arith.divf %128, %129 : vector<2x16xf32>
    %131 = vector.extract_strided_slice %122 {offsets = [0, 16], sizes = [2, 16], strides = [1, 1]} : vector<2x48xf32> to vector<2x16xf32>
    %132 = vector.extract_strided_slice %121 {offsets = [0, 16], sizes = [2, 16], strides = [1, 1]} : vector<2x48xf32> to vector<2x16xf32>
    %133 = arith.addf %131, %132 : vector<2x16xf32>
    %134 = arith.negf %133 : vector<2x16xf32>
    %135 = math.exp %134 : vector<2x16xf32>
    %cst_44 = arith.constant 1.000000e+00 : f32
    %136 = vector.broadcast %cst_44 : f32 to vector<2x16xf32>
    %137 = arith.addf %136, %135 : vector<2x16xf32>
    %138 = arith.divf %136, %137 : vector<2x16xf32>
    %139 = vector.extract_strided_slice %122 {offsets = [0, 32], sizes = [2, 16], strides = [1, 1]} : vector<2x48xf32> to vector<2x16xf32>
    %140 = vector.extract_strided_slice %121 {offsets = [0, 32], sizes = [2, 16], strides = [1, 1]} : vector<2x48xf32> to vector<2x16xf32>
    %141 = arith.mulf %130, %140 : vector<2x16xf32>
    %142 = arith.addf %139, %141 : vector<2x16xf32>
    %143 = math.tanh %142 : vector<2x16xf32>
    %cst_45 = arith.constant 1.000000e+00 : f32
    %144 = vector.broadcast %cst_45 : f32 to vector<2x16xf32>
    %145 = arith.subf %144, %138 : vector<2x16xf32>
    %146 = arith.mulf %145, %143 : vector<2x16xf32>
    %147 = arith.mulf %138, %118 : vector<2x16xf32>
    %148 = arith.addf %146, %147 : vector<2x16xf32>
    %cst_46 = arith.constant dense<0.000000e+00> : vector<2x48xf32>
    %149 = tpu.matmul %148, %56, %cst_46 {dimension_numbers = #tpu.dot_dimension_numbers<[1], [0], [0], [1], [0, 0, 1, 1], [], []>} : vector<2x16xf32>, vector<16x48xf32>, vector<2x48xf32> -> vector<2x48xf32>
    %150 = vector.broadcast %57 : vector<1x48xf32> to vector<2x48xf32>
    %151 = arith.addf %149, %150 : vector<2x48xf32>
    %152 = vector.extract_strided_slice %55 {offsets = [6, 0], sizes = [2, 48], strides = [1, 1]} : vector<32x48xf32> to vector<2x48xf32>
    %153 = vector.extract_strided_slice %152 {offsets = [0, 0], sizes = [2, 16], strides = [1, 1]} : vector<2x48xf32> to vector<2x16xf32>
    %154 = vector.extract_strided_slice %151 {offsets = [0, 0], sizes = [2, 16], strides = [1, 1]} : vector<2x48xf32> to vector<2x16xf32>
    %155 = arith.addf %153, %154 : vector<2x16xf32>
    %156 = arith.negf %155 : vector<2x16xf32>
    %157 = math.exp %156 : vector<2x16xf32>
    %cst_47 = arith.constant 1.000000e+00 : f32
    %158 = vector.broadcast %cst_47 : f32 to vector<2x16xf32>
    %159 = arith.addf %158, %157 : vector<2x16xf32>
    %160 = arith.divf %158, %159 : vector<2x16xf32>
    %161 = vector.extract_strided_slice %152 {offsets = [0, 16], sizes = [2, 16], strides = [1, 1]} : vector<2x48xf32> to vector<2x16xf32>
    %162 = vector.extract_strided_slice %151 {offsets = [0, 16], sizes = [2, 16], strides = [1, 1]} : vector<2x48xf32> to vector<2x16xf32>
    %163 = arith.addf %161, %162 : vector<2x16xf32>
    %164 = arith.negf %163 : vector<2x16xf32>
    %165 = math.exp %164 : vector<2x16xf32>
    %cst_48 = arith.constant 1.000000e+00 : f32
    %166 = vector.broadcast %cst_48 : f32 to vector<2x16xf32>
    %167 = arith.addf %166, %165 : vector<2x16xf32>
    %168 = arith.divf %166, %167 : vector<2x16xf32>
    %169 = vector.extract_strided_slice %152 {offsets = [0, 32], sizes = [2, 16], strides = [1, 1]} : vector<2x48xf32> to vector<2x16xf32>
    %170 = vector.extract_strided_slice %151 {offsets = [0, 32], sizes = [2, 16], strides = [1, 1]} : vector<2x48xf32> to vector<2x16xf32>
    %171 = arith.mulf %160, %170 : vector<2x16xf32>
    %172 = arith.addf %169, %171 : vector<2x16xf32>
    %173 = math.tanh %172 : vector<2x16xf32>
    %cst_49 = arith.constant 1.000000e+00 : f32
    %174 = vector.broadcast %cst_49 : f32 to vector<2x16xf32>
    %175 = arith.subf %174, %168 : vector<2x16xf32>
    %176 = arith.mulf %175, %173 : vector<2x16xf32>
    %177 = arith.mulf %168, %148 : vector<2x16xf32>
    %178 = arith.addf %176, %177 : vector<2x16xf32>
    %cst_50 = arith.constant dense<0.000000e+00> : vector<2x48xf32>
    %179 = tpu.matmul %178, %56, %cst_50 {dimension_numbers = #tpu.dot_dimension_numbers<[1], [0], [0], [1], [0, 0, 1, 1], [], []>} : vector<2x16xf32>, vector<16x48xf32>, vector<2x48xf32> -> vector<2x48xf32>
    %180 = vector.broadcast %57 : vector<1x48xf32> to vector<2x48xf32>
    %181 = arith.addf %179, %180 : vector<2x48xf32>
    %182 = vector.extract_strided_slice %55 {offsets = [8, 0], sizes = [2, 48], strides = [1, 1]} : vector<32x48xf32> to vector<2x48xf32>
    %183 = vector.extract_strided_slice %182 {offsets = [0, 0], sizes = [2, 16], strides = [1, 1]} : vector<2x48xf32> to vector<2x16xf32>
    %184 = vector.extract_strided_slice %181 {offsets = [0, 0], sizes = [2, 16], strides = [1, 1]} : vector<2x48xf32> to vector<2x16xf32>
    %185 = arith.addf %183, %184 : vector<2x16xf32>
    %186 = arith.negf %185 : vector<2x16xf32>
    %187 = math.exp %186 : vector<2x16xf32>
    %cst_51 = arith.constant 1.000000e+00 : f32
    %188 = vector.broadcast %cst_51 : f32 to vector<2x16xf32>
    %189 = arith.addf %188, %187 : vector<2x16xf32>
    %190 = arith.divf %188, %189 : vector<2x16xf32>
    %191 = vector.extract_strided_slice %182 {offsets = [0, 16], sizes = [2, 16], strides = [1, 1]} : vector<2x48xf32> to vector<2x16xf32>
    %192 = vector.extract_strided_slice %181 {offsets = [0, 16], sizes = [2, 16], strides = [1, 1]} : vector<2x48xf32> to vector<2x16xf32>
    %193 = arith.addf %191, %192 : vector<2x16xf32>
    %194 = arith.negf %193 : vector<2x16xf32>
    %195 = math.exp %194 : vector<2x16xf32>
    %cst_52 = arith.constant 1.000000e+00 : f32
    %196 = vector.broadcast %cst_52 : f32 to vector<2x16xf32>
    %197 = arith.addf %196, %195 : vector<2x16xf32>
    %198 = arith.divf %196, %197 : vector<2x16xf32>
    %199 = vector.extract_strided_slice %182 {offsets = [0, 32], sizes = [2, 16], strides = [1, 1]} : vector<2x48xf32> to vector<2x16xf32>
    %200 = vector.extract_strided_slice %181 {offsets = [0, 32], sizes = [2, 16], strides = [1, 1]} : vector<2x48xf32> to vector<2x16xf32>
    %201 = arith.mulf %190, %200 : vector<2x16xf32>
    %202 = arith.addf %199, %201 : vector<2x16xf32>
    %203 = math.tanh %202 : vector<2x16xf32>
    %cst_53 = arith.constant 1.000000e+00 : f32
    %204 = vector.broadcast %cst_53 : f32 to vector<2x16xf32>
    %205 = arith.subf %204, %198 : vector<2x16xf32>
    %206 = arith.mulf %205, %203 : vector<2x16xf32>
    %207 = arith.mulf %198, %178 : vector<2x16xf32>
    %208 = arith.addf %206, %207 : vector<2x16xf32>
    %cst_54 = arith.constant dense<0.000000e+00> : vector<2x48xf32>
    %209 = tpu.matmul %208, %56, %cst_54 {dimension_numbers = #tpu.dot_dimension_numbers<[1], [0], [0], [1], [0, 0, 1, 1], [], []>} : vector<2x16xf32>, vector<16x48xf32>, vector<2x48xf32> -> vector<2x48xf32>
    %210 = vector.broadcast %57 : vector<1x48xf32> to vector<2x48xf32>
    %211 = arith.addf %209, %210 : vector<2x48xf32>
    %212 = vector.extract_strided_slice %55 {offsets = [10, 0], sizes = [2, 48], strides = [1, 1]} : vector<32x48xf32> to vector<2x48xf32>
    %213 = vector.extract_strided_slice %212 {offsets = [0, 0], sizes = [2, 16], strides = [1, 1]} : vector<2x48xf32> to vector<2x16xf32>
    %214 = vector.extract_strided_slice %211 {offsets = [0, 0], sizes = [2, 16], strides = [1, 1]} : vector<2x48xf32> to vector<2x16xf32>
    %215 = arith.addf %213, %214 : vector<2x16xf32>
    %216 = arith.negf %215 : vector<2x16xf32>
    %217 = math.exp %216 : vector<2x16xf32>
    %cst_55 = arith.constant 1.000000e+00 : f32
    %218 = vector.broadcast %cst_55 : f32 to vector<2x16xf32>
    %219 = arith.addf %218, %217 : vector<2x16xf32>
    %220 = arith.divf %218, %219 : vector<2x16xf32>
    %221 = vector.extract_strided_slice %212 {offsets = [0, 16], sizes = [2, 16], strides = [1, 1]} : vector<2x48xf32> to vector<2x16xf32>
    %222 = vector.extract_strided_slice %211 {offsets = [0, 16], sizes = [2, 16], strides = [1, 1]} : vector<2x48xf32> to vector<2x16xf32>
    %223 = arith.addf %221, %222 : vector<2x16xf32>
    %224 = arith.negf %223 : vector<2x16xf32>
    %225 = math.exp %224 : vector<2x16xf32>
    %cst_56 = arith.constant 1.000000e+00 : f32
    %226 = vector.broadcast %cst_56 : f32 to vector<2x16xf32>
    %227 = arith.addf %226, %225 : vector<2x16xf32>
    %228 = arith.divf %226, %227 : vector<2x16xf32>
    %229 = vector.extract_strided_slice %212 {offsets = [0, 32], sizes = [2, 16], strides = [1, 1]} : vector<2x48xf32> to vector<2x16xf32>
    %230 = vector.extract_strided_slice %211 {offsets = [0, 32], sizes = [2, 16], strides = [1, 1]} : vector<2x48xf32> to vector<2x16xf32>
    %231 = arith.mulf %220, %230 : vector<2x16xf32>
    %232 = arith.addf %229, %231 : vector<2x16xf32>
    %233 = math.tanh %232 : vector<2x16xf32>
    %cst_57 = arith.constant 1.000000e+00 : f32
    %234 = vector.broadcast %cst_57 : f32 to vector<2x16xf32>
    %235 = arith.subf %234, %228 : vector<2x16xf32>
    %236 = arith.mulf %235, %233 : vector<2x16xf32>
    %237 = arith.mulf %228, %208 : vector<2x16xf32>
    %238 = arith.addf %236, %237 : vector<2x16xf32>
    %cst_58 = arith.constant dense<0.000000e+00> : vector<2x48xf32>
    %239 = tpu.matmul %238, %56, %cst_58 {dimension_numbers = #tpu.dot_dimension_numbers<[1], [0], [0], [1], [0, 0, 1, 1], [], []>} : vector<2x16xf32>, vector<16x48xf32>, vector<2x48xf32> -> vector<2x48xf32>
    %240 = vector.broadcast %57 : vector<1x48xf32> to vector<2x48xf32>
    %241 = arith.addf %239, %240 : vector<2x48xf32>
    %242 = vector.extract_strided_slice %55 {offsets = [12, 0], sizes = [2, 48], strides = [1, 1]} : vector<32x48xf32> to vector<2x48xf32>
    %243 = vector.extract_strided_slice %242 {offsets = [0, 0], sizes = [2, 16], strides = [1, 1]} : vector<2x48xf32> to vector<2x16xf32>
    %244 = vector.extract_strided_slice %241 {offsets = [0, 0], sizes = [2, 16], strides = [1, 1]} : vector<2x48xf32> to vector<2x16xf32>
    %245 = arith.addf %243, %244 : vector<2x16xf32>
    %246 = arith.negf %245 : vector<2x16xf32>
    %247 = math.exp %246 : vector<2x16xf32>
    %cst_59 = arith.constant 1.000000e+00 : f32
    %248 = vector.broadcast %cst_59 : f32 to vector<2x16xf32>
    %249 = arith.addf %248, %247 : vector<2x16xf32>
    %250 = arith.divf %248, %249 : vector<2x16xf32>
    %251 = vector.extract_strided_slice %242 {offsets = [0, 16], sizes = [2, 16], strides = [1, 1]} : vector<2x48xf32> to vector<2x16xf32>
    %252 = vector.extract_strided_slice %241 {offsets = [0, 16], sizes = [2, 16], strides = [1, 1]} : vector<2x48xf32> to vector<2x16xf32>
    %253 = arith.addf %251, %252 : vector<2x16xf32>
    %254 = arith.negf %253 : vector<2x16xf32>
    %255 = math.exp %254 : vector<2x16xf32>
    %cst_60 = arith.constant 1.000000e+00 : f32
    %256 = vector.broadcast %cst_60 : f32 to vector<2x16xf32>
    %257 = arith.addf %256, %255 : vector<2x16xf32>
    %258 = arith.divf %256, %257 : vector<2x16xf32>
    %259 = vector.extract_strided_slice %242 {offsets = [0, 32], sizes = [2, 16], strides = [1, 1]} : vector<2x48xf32> to vector<2x16xf32>
    %260 = vector.extract_strided_slice %241 {offsets = [0, 32], sizes = [2, 16], strides = [1, 1]} : vector<2x48xf32> to vector<2x16xf32>
    %261 = arith.mulf %250, %260 : vector<2x16xf32>
    %262 = arith.addf %259, %261 : vector<2x16xf32>
    %263 = math.tanh %262 : vector<2x16xf32>
    %cst_61 = arith.constant 1.000000e+00 : f32
    %264 = vector.broadcast %cst_61 : f32 to vector<2x16xf32>
    %265 = arith.subf %264, %258 : vector<2x16xf32>
    %266 = arith.mulf %265, %263 : vector<2x16xf32>
    %267 = arith.mulf %258, %238 : vector<2x16xf32>
    %268 = arith.addf %266, %267 : vector<2x16xf32>
    %cst_62 = arith.constant dense<0.000000e+00> : vector<2x48xf32>
    %269 = tpu.matmul %268, %56, %cst_62 {dimension_numbers = #tpu.dot_dimension_numbers<[1], [0], [0], [1], [0, 0, 1, 1], [], []>} : vector<2x16xf32>, vector<16x48xf32>, vector<2x48xf32> -> vector<2x48xf32>
    %270 = vector.broadcast %57 : vector<1x48xf32> to vector<2x48xf32>
    %271 = arith.addf %269, %270 : vector<2x48xf32>
    %272 = vector.extract_strided_slice %55 {offsets = [14, 0], sizes = [2, 48], strides = [1, 1]} : vector<32x48xf32> to vector<2x48xf32>
    %273 = vector.extract_strided_slice %272 {offsets = [0, 0], sizes = [2, 16], strides = [1, 1]} : vector<2x48xf32> to vector<2x16xf32>
    %274 = vector.extract_strided_slice %271 {offsets = [0, 0], sizes = [2, 16], strides = [1, 1]} : vector<2x48xf32> to vector<2x16xf32>
    %275 = arith.addf %273, %274 : vector<2x16xf32>
    %276 = arith.negf %275 : vector<2x16xf32>
    %277 = math.exp %276 : vector<2x16xf32>
    %cst_63 = arith.constant 1.000000e+00 : f32
    %278 = vector.broadcast %cst_63 : f32 to vector<2x16xf32>
    %279 = arith.addf %278, %277 : vector<2x16xf32>
    %280 = arith.divf %278, %279 : vector<2x16xf32>
    %281 = vector.extract_strided_slice %272 {offsets = [0, 16], sizes = [2, 16], strides = [1, 1]} : vector<2x48xf32> to vector<2x16xf32>
    %282 = vector.extract_strided_slice %271 {offsets = [0, 16], sizes = [2, 16], strides = [1, 1]} : vector<2x48xf32> to vector<2x16xf32>
    %283 = arith.addf %281, %282 : vector<2x16xf32>
    %284 = arith.negf %283 : vector<2x16xf32>
    %285 = math.exp %284 : vector<2x16xf32>
    %cst_64 = arith.constant 1.000000e+00 : f32
    %286 = vector.broadcast %cst_64 : f32 to vector<2x16xf32>
    %287 = arith.addf %286, %285 : vector<2x16xf32>
    %288 = arith.divf %286, %287 : vector<2x16xf32>
    %289 = vector.extract_strided_slice %272 {offsets = [0, 32], sizes = [2, 16], strides = [1, 1]} : vector<2x48xf32> to vector<2x16xf32>
    %290 = vector.extract_strided_slice %271 {offsets = [0, 32], sizes = [2, 16], strides = [1, 1]} : vector<2x48xf32> to vector<2x16xf32>
    %291 = arith.mulf %280, %290 : vector<2x16xf32>
    %292 = arith.addf %289, %291 : vector<2x16xf32>
    %293 = math.tanh %292 : vector<2x16xf32>
    %cst_65 = arith.constant 1.000000e+00 : f32
    %294 = vector.broadcast %cst_65 : f32 to vector<2x16xf32>
    %295 = arith.subf %294, %288 : vector<2x16xf32>
    %296 = arith.mulf %295, %293 : vector<2x16xf32>
    %297 = arith.mulf %288, %268 : vector<2x16xf32>
    %298 = arith.addf %296, %297 : vector<2x16xf32>
    %cst_66 = arith.constant dense<0.000000e+00> : vector<2x48xf32>
    %299 = tpu.matmul %298, %56, %cst_66 {dimension_numbers = #tpu.dot_dimension_numbers<[1], [0], [0], [1], [0, 0, 1, 1], [], []>} : vector<2x16xf32>, vector<16x48xf32>, vector<2x48xf32> -> vector<2x48xf32>
    %300 = vector.broadcast %57 : vector<1x48xf32> to vector<2x48xf32>
    %301 = arith.addf %299, %300 : vector<2x48xf32>
    %302 = vector.extract_strided_slice %55 {offsets = [16, 0], sizes = [2, 48], strides = [1, 1]} : vector<32x48xf32> to vector<2x48xf32>
    %303 = vector.extract_strided_slice %302 {offsets = [0, 0], sizes = [2, 16], strides = [1, 1]} : vector<2x48xf32> to vector<2x16xf32>
    %304 = vector.extract_strided_slice %301 {offsets = [0, 0], sizes = [2, 16], strides = [1, 1]} : vector<2x48xf32> to vector<2x16xf32>
    %305 = arith.addf %303, %304 : vector<2x16xf32>
    %306 = arith.negf %305 : vector<2x16xf32>
    %307 = math.exp %306 : vector<2x16xf32>
    %cst_67 = arith.constant 1.000000e+00 : f32
    %308 = vector.broadcast %cst_67 : f32 to vector<2x16xf32>
    %309 = arith.addf %308, %307 : vector<2x16xf32>
    %310 = arith.divf %308, %309 : vector<2x16xf32>
    %311 = vector.extract_strided_slice %302 {offsets = [0, 16], sizes = [2, 16], strides = [1, 1]} : vector<2x48xf32> to vector<2x16xf32>
    %312 = vector.extract_strided_slice %301 {offsets = [0, 16], sizes = [2, 16], strides = [1, 1]} : vector<2x48xf32> to vector<2x16xf32>
    %313 = arith.addf %311, %312 : vector<2x16xf32>
    %314 = arith.negf %313 : vector<2x16xf32>
    %315 = math.exp %314 : vector<2x16xf32>
    %cst_68 = arith.constant 1.000000e+00 : f32
    %316 = vector.broadcast %cst_68 : f32 to vector<2x16xf32>
    %317 = arith.addf %316, %315 : vector<2x16xf32>
    %318 = arith.divf %316, %317 : vector<2x16xf32>
    %319 = vector.extract_strided_slice %302 {offsets = [0, 32], sizes = [2, 16], strides = [1, 1]} : vector<2x48xf32> to vector<2x16xf32>
    %320 = vector.extract_strided_slice %301 {offsets = [0, 32], sizes = [2, 16], strides = [1, 1]} : vector<2x48xf32> to vector<2x16xf32>
    %321 = arith.mulf %310, %320 : vector<2x16xf32>
    %322 = arith.addf %319, %321 : vector<2x16xf32>
    %323 = math.tanh %322 : vector<2x16xf32>
    %cst_69 = arith.constant 1.000000e+00 : f32
    %324 = vector.broadcast %cst_69 : f32 to vector<2x16xf32>
    %325 = arith.subf %324, %318 : vector<2x16xf32>
    %326 = arith.mulf %325, %323 : vector<2x16xf32>
    %327 = arith.mulf %318, %298 : vector<2x16xf32>
    %328 = arith.addf %326, %327 : vector<2x16xf32>
    %cst_70 = arith.constant dense<0.000000e+00> : vector<2x48xf32>
    %329 = tpu.matmul %328, %56, %cst_70 {dimension_numbers = #tpu.dot_dimension_numbers<[1], [0], [0], [1], [0, 0, 1, 1], [], []>} : vector<2x16xf32>, vector<16x48xf32>, vector<2x48xf32> -> vector<2x48xf32>
    %330 = vector.broadcast %57 : vector<1x48xf32> to vector<2x48xf32>
    %331 = arith.addf %329, %330 : vector<2x48xf32>
    %332 = vector.extract_strided_slice %55 {offsets = [18, 0], sizes = [2, 48], strides = [1, 1]} : vector<32x48xf32> to vector<2x48xf32>
    %333 = vector.extract_strided_slice %332 {offsets = [0, 0], sizes = [2, 16], strides = [1, 1]} : vector<2x48xf32> to vector<2x16xf32>
    %334 = vector.extract_strided_slice %331 {offsets = [0, 0], sizes = [2, 16], strides = [1, 1]} : vector<2x48xf32> to vector<2x16xf32>
    %335 = arith.addf %333, %334 : vector<2x16xf32>
    %336 = arith.negf %335 : vector<2x16xf32>
    %337 = math.exp %336 : vector<2x16xf32>
    %cst_71 = arith.constant 1.000000e+00 : f32
    %338 = vector.broadcast %cst_71 : f32 to vector<2x16xf32>
    %339 = arith.addf %338, %337 : vector<2x16xf32>
    %340 = arith.divf %338, %339 : vector<2x16xf32>
    %341 = vector.extract_strided_slice %332 {offsets = [0, 16], sizes = [2, 16], strides = [1, 1]} : vector<2x48xf32> to vector<2x16xf32>
    %342 = vector.extract_strided_slice %331 {offsets = [0, 16], sizes = [2, 16], strides = [1, 1]} : vector<2x48xf32> to vector<2x16xf32>
    %343 = arith.addf %341, %342 : vector<2x16xf32>
    %344 = arith.negf %343 : vector<2x16xf32>
    %345 = math.exp %344 : vector<2x16xf32>
    %cst_72 = arith.constant 1.000000e+00 : f32
    %346 = vector.broadcast %cst_72 : f32 to vector<2x16xf32>
    %347 = arith.addf %346, %345 : vector<2x16xf32>
    %348 = arith.divf %346, %347 : vector<2x16xf32>
    %349 = vector.extract_strided_slice %332 {offsets = [0, 32], sizes = [2, 16], strides = [1, 1]} : vector<2x48xf32> to vector<2x16xf32>
    %350 = vector.extract_strided_slice %331 {offsets = [0, 32], sizes = [2, 16], strides = [1, 1]} : vector<2x48xf32> to vector<2x16xf32>
    %351 = arith.mulf %340, %350 : vector<2x16xf32>
    %352 = arith.addf %349, %351 : vector<2x16xf32>
    %353 = math.tanh %352 : vector<2x16xf32>
    %cst_73 = arith.constant 1.000000e+00 : f32
    %354 = vector.broadcast %cst_73 : f32 to vector<2x16xf32>
    %355 = arith.subf %354, %348 : vector<2x16xf32>
    %356 = arith.mulf %355, %353 : vector<2x16xf32>
    %357 = arith.mulf %348, %328 : vector<2x16xf32>
    %358 = arith.addf %356, %357 : vector<2x16xf32>
    %cst_74 = arith.constant dense<0.000000e+00> : vector<2x48xf32>
    %359 = tpu.matmul %358, %56, %cst_74 {dimension_numbers = #tpu.dot_dimension_numbers<[1], [0], [0], [1], [0, 0, 1, 1], [], []>} : vector<2x16xf32>, vector<16x48xf32>, vector<2x48xf32> -> vector<2x48xf32>
    %360 = vector.broadcast %57 : vector<1x48xf32> to vector<2x48xf32>
    %361 = arith.addf %359, %360 : vector<2x48xf32>
    %362 = vector.extract_strided_slice %55 {offsets = [20, 0], sizes = [2, 48], strides = [1, 1]} : vector<32x48xf32> to vector<2x48xf32>
    %363 = vector.extract_strided_slice %362 {offsets = [0, 0], sizes = [2, 16], strides = [1, 1]} : vector<2x48xf32> to vector<2x16xf32>
    %364 = vector.extract_strided_slice %361 {offsets = [0, 0], sizes = [2, 16], strides = [1, 1]} : vector<2x48xf32> to vector<2x16xf32>
    %365 = arith.addf %363, %364 : vector<2x16xf32>
    %366 = arith.negf %365 : vector<2x16xf32>
    %367 = math.exp %366 : vector<2x16xf32>
    %cst_75 = arith.constant 1.000000e+00 : f32
    %368 = vector.broadcast %cst_75 : f32 to vector<2x16xf32>
    %369 = arith.addf %368, %367 : vector<2x16xf32>
    %370 = arith.divf %368, %369 : vector<2x16xf32>
    %371 = vector.extract_strided_slice %362 {offsets = [0, 16], sizes = [2, 16], strides = [1, 1]} : vector<2x48xf32> to vector<2x16xf32>
    %372 = vector.extract_strided_slice %361 {offsets = [0, 16], sizes = [2, 16], strides = [1, 1]} : vector<2x48xf32> to vector<2x16xf32>
    %373 = arith.addf %371, %372 : vector<2x16xf32>
    %374 = arith.negf %373 : vector<2x16xf32>
    %375 = math.exp %374 : vector<2x16xf32>
    %cst_76 = arith.constant 1.000000e+00 : f32
    %376 = vector.broadcast %cst_76 : f32 to vector<2x16xf32>
    %377 = arith.addf %376, %375 : vector<2x16xf32>
    %378 = arith.divf %376, %377 : vector<2x16xf32>
    %379 = vector.extract_strided_slice %362 {offsets = [0, 32], sizes = [2, 16], strides = [1, 1]} : vector<2x48xf32> to vector<2x16xf32>
    %380 = vector.extract_strided_slice %361 {offsets = [0, 32], sizes = [2, 16], strides = [1, 1]} : vector<2x48xf32> to vector<2x16xf32>
    %381 = arith.mulf %370, %380 : vector<2x16xf32>
    %382 = arith.addf %379, %381 : vector<2x16xf32>
    %383 = math.tanh %382 : vector<2x16xf32>
    %cst_77 = arith.constant 1.000000e+00 : f32
    %384 = vector.broadcast %cst_77 : f32 to vector<2x16xf32>
    %385 = arith.subf %384, %378 : vector<2x16xf32>
    %386 = arith.mulf %385, %383 : vector<2x16xf32>
    %387 = arith.mulf %378, %358 : vector<2x16xf32>
    %388 = arith.addf %386, %387 : vector<2x16xf32>
    %cst_78 = arith.constant dense<0.000000e+00> : vector<2x48xf32>
    %389 = tpu.matmul %388, %56, %cst_78 {dimension_numbers = #tpu.dot_dimension_numbers<[1], [0], [0], [1], [0, 0, 1, 1], [], []>} : vector<2x16xf32>, vector<16x48xf32>, vector<2x48xf32> -> vector<2x48xf32>
    %390 = vector.broadcast %57 : vector<1x48xf32> to vector<2x48xf32>
    %391 = arith.addf %389, %390 : vector<2x48xf32>
    %392 = vector.extract_strided_slice %55 {offsets = [22, 0], sizes = [2, 48], strides = [1, 1]} : vector<32x48xf32> to vector<2x48xf32>
    %393 = vector.extract_strided_slice %392 {offsets = [0, 0], sizes = [2, 16], strides = [1, 1]} : vector<2x48xf32> to vector<2x16xf32>
    %394 = vector.extract_strided_slice %391 {offsets = [0, 0], sizes = [2, 16], strides = [1, 1]} : vector<2x48xf32> to vector<2x16xf32>
    %395 = arith.addf %393, %394 : vector<2x16xf32>
    %396 = arith.negf %395 : vector<2x16xf32>
    %397 = math.exp %396 : vector<2x16xf32>
    %cst_79 = arith.constant 1.000000e+00 : f32
    %398 = vector.broadcast %cst_79 : f32 to vector<2x16xf32>
    %399 = arith.addf %398, %397 : vector<2x16xf32>
    %400 = arith.divf %398, %399 : vector<2x16xf32>
    %401 = vector.extract_strided_slice %392 {offsets = [0, 16], sizes = [2, 16], strides = [1, 1]} : vector<2x48xf32> to vector<2x16xf32>
    %402 = vector.extract_strided_slice %391 {offsets = [0, 16], sizes = [2, 16], strides = [1, 1]} : vector<2x48xf32> to vector<2x16xf32>
    %403 = arith.addf %401, %402 : vector<2x16xf32>
    %404 = arith.negf %403 : vector<2x16xf32>
    %405 = math.exp %404 : vector<2x16xf32>
    %cst_80 = arith.constant 1.000000e+00 : f32
    %406 = vector.broadcast %cst_80 : f32 to vector<2x16xf32>
    %407 = arith.addf %406, %405 : vector<2x16xf32>
    %408 = arith.divf %406, %407 : vector<2x16xf32>
    %409 = vector.extract_strided_slice %392 {offsets = [0, 32], sizes = [2, 16], strides = [1, 1]} : vector<2x48xf32> to vector<2x16xf32>
    %410 = vector.extract_strided_slice %391 {offsets = [0, 32], sizes = [2, 16], strides = [1, 1]} : vector<2x48xf32> to vector<2x16xf32>
    %411 = arith.mulf %400, %410 : vector<2x16xf32>
    %412 = arith.addf %409, %411 : vector<2x16xf32>
    %413 = math.tanh %412 : vector<2x16xf32>
    %cst_81 = arith.constant 1.000000e+00 : f32
    %414 = vector.broadcast %cst_81 : f32 to vector<2x16xf32>
    %415 = arith.subf %414, %408 : vector<2x16xf32>
    %416 = arith.mulf %415, %413 : vector<2x16xf32>
    %417 = arith.mulf %408, %388 : vector<2x16xf32>
    %418 = arith.addf %416, %417 : vector<2x16xf32>
    %cst_82 = arith.constant dense<0.000000e+00> : vector<2x48xf32>
    %419 = tpu.matmul %418, %56, %cst_82 {dimension_numbers = #tpu.dot_dimension_numbers<[1], [0], [0], [1], [0, 0, 1, 1], [], []>} : vector<2x16xf32>, vector<16x48xf32>, vector<2x48xf32> -> vector<2x48xf32>
    %420 = vector.broadcast %57 : vector<1x48xf32> to vector<2x48xf32>
    %421 = arith.addf %419, %420 : vector<2x48xf32>
    %422 = vector.extract_strided_slice %55 {offsets = [24, 0], sizes = [2, 48], strides = [1, 1]} : vector<32x48xf32> to vector<2x48xf32>
    %423 = vector.extract_strided_slice %422 {offsets = [0, 0], sizes = [2, 16], strides = [1, 1]} : vector<2x48xf32> to vector<2x16xf32>
    %424 = vector.extract_strided_slice %421 {offsets = [0, 0], sizes = [2, 16], strides = [1, 1]} : vector<2x48xf32> to vector<2x16xf32>
    %425 = arith.addf %423, %424 : vector<2x16xf32>
    %426 = arith.negf %425 : vector<2x16xf32>
    %427 = math.exp %426 : vector<2x16xf32>
    %cst_83 = arith.constant 1.000000e+00 : f32
    %428 = vector.broadcast %cst_83 : f32 to vector<2x16xf32>
    %429 = arith.addf %428, %427 : vector<2x16xf32>
    %430 = arith.divf %428, %429 : vector<2x16xf32>
    %431 = vector.extract_strided_slice %422 {offsets = [0, 16], sizes = [2, 16], strides = [1, 1]} : vector<2x48xf32> to vector<2x16xf32>
    %432 = vector.extract_strided_slice %421 {offsets = [0, 16], sizes = [2, 16], strides = [1, 1]} : vector<2x48xf32> to vector<2x16xf32>
    %433 = arith.addf %431, %432 : vector<2x16xf32>
    %434 = arith.negf %433 : vector<2x16xf32>
    %435 = math.exp %434 : vector<2x16xf32>
    %cst_84 = arith.constant 1.000000e+00 : f32
    %436 = vector.broadcast %cst_84 : f32 to vector<2x16xf32>
    %437 = arith.addf %436, %435 : vector<2x16xf32>
    %438 = arith.divf %436, %437 : vector<2x16xf32>
    %439 = vector.extract_strided_slice %422 {offsets = [0, 32], sizes = [2, 16], strides = [1, 1]} : vector<2x48xf32> to vector<2x16xf32>
    %440 = vector.extract_strided_slice %421 {offsets = [0, 32], sizes = [2, 16], strides = [1, 1]} : vector<2x48xf32> to vector<2x16xf32>
    %441 = arith.mulf %430, %440 : vector<2x16xf32>
    %442 = arith.addf %439, %441 : vector<2x16xf32>
    %443 = math.tanh %442 : vector<2x16xf32>
    %cst_85 = arith.constant 1.000000e+00 : f32
    %444 = vector.broadcast %cst_85 : f32 to vector<2x16xf32>
    %445 = arith.subf %444, %438 : vector<2x16xf32>
    %446 = arith.mulf %445, %443 : vector<2x16xf32>
    %447 = arith.mulf %438, %418 : vector<2x16xf32>
    %448 = arith.addf %446, %447 : vector<2x16xf32>
    %cst_86 = arith.constant dense<0.000000e+00> : vector<2x48xf32>
    %449 = tpu.matmul %448, %56, %cst_86 {dimension_numbers = #tpu.dot_dimension_numbers<[1], [0], [0], [1], [0, 0, 1, 1], [], []>} : vector<2x16xf32>, vector<16x48xf32>, vector<2x48xf32> -> vector<2x48xf32>
    %450 = vector.broadcast %57 : vector<1x48xf32> to vector<2x48xf32>
    %451 = arith.addf %449, %450 : vector<2x48xf32>
    %452 = vector.extract_strided_slice %55 {offsets = [26, 0], sizes = [2, 48], strides = [1, 1]} : vector<32x48xf32> to vector<2x48xf32>
    %453 = vector.extract_strided_slice %452 {offsets = [0, 0], sizes = [2, 16], strides = [1, 1]} : vector<2x48xf32> to vector<2x16xf32>
    %454 = vector.extract_strided_slice %451 {offsets = [0, 0], sizes = [2, 16], strides = [1, 1]} : vector<2x48xf32> to vector<2x16xf32>
    %455 = arith.addf %453, %454 : vector<2x16xf32>
    %456 = arith.negf %455 : vector<2x16xf32>
    %457 = math.exp %456 : vector<2x16xf32>
    %cst_87 = arith.constant 1.000000e+00 : f32
    %458 = vector.broadcast %cst_87 : f32 to vector<2x16xf32>
    %459 = arith.addf %458, %457 : vector<2x16xf32>
    %460 = arith.divf %458, %459 : vector<2x16xf32>
    %461 = vector.extract_strided_slice %452 {offsets = [0, 16], sizes = [2, 16], strides = [1, 1]} : vector<2x48xf32> to vector<2x16xf32>
    %462 = vector.extract_strided_slice %451 {offsets = [0, 16], sizes = [2, 16], strides = [1, 1]} : vector<2x48xf32> to vector<2x16xf32>
    %463 = arith.addf %461, %462 : vector<2x16xf32>
    %464 = arith.negf %463 : vector<2x16xf32>
    %465 = math.exp %464 : vector<2x16xf32>
    %cst_88 = arith.constant 1.000000e+00 : f32
    %466 = vector.broadcast %cst_88 : f32 to vector<2x16xf32>
    %467 = arith.addf %466, %465 : vector<2x16xf32>
    %468 = arith.divf %466, %467 : vector<2x16xf32>
    %469 = vector.extract_strided_slice %452 {offsets = [0, 32], sizes = [2, 16], strides = [1, 1]} : vector<2x48xf32> to vector<2x16xf32>
    %470 = vector.extract_strided_slice %451 {offsets = [0, 32], sizes = [2, 16], strides = [1, 1]} : vector<2x48xf32> to vector<2x16xf32>
    %471 = arith.mulf %460, %470 : vector<2x16xf32>
    %472 = arith.addf %469, %471 : vector<2x16xf32>
    %473 = math.tanh %472 : vector<2x16xf32>
    %cst_89 = arith.constant 1.000000e+00 : f32
    %474 = vector.broadcast %cst_89 : f32 to vector<2x16xf32>
    %475 = arith.subf %474, %468 : vector<2x16xf32>
    %476 = arith.mulf %475, %473 : vector<2x16xf32>
    %477 = arith.mulf %468, %448 : vector<2x16xf32>
    %478 = arith.addf %476, %477 : vector<2x16xf32>
    %cst_90 = arith.constant dense<0.000000e+00> : vector<2x48xf32>
    %479 = tpu.matmul %478, %56, %cst_90 {dimension_numbers = #tpu.dot_dimension_numbers<[1], [0], [0], [1], [0, 0, 1, 1], [], []>} : vector<2x16xf32>, vector<16x48xf32>, vector<2x48xf32> -> vector<2x48xf32>
    %480 = vector.broadcast %57 : vector<1x48xf32> to vector<2x48xf32>
    %481 = arith.addf %479, %480 : vector<2x48xf32>
    %482 = vector.extract_strided_slice %55 {offsets = [28, 0], sizes = [2, 48], strides = [1, 1]} : vector<32x48xf32> to vector<2x48xf32>
    %483 = vector.extract_strided_slice %482 {offsets = [0, 0], sizes = [2, 16], strides = [1, 1]} : vector<2x48xf32> to vector<2x16xf32>
    %484 = vector.extract_strided_slice %481 {offsets = [0, 0], sizes = [2, 16], strides = [1, 1]} : vector<2x48xf32> to vector<2x16xf32>
    %485 = arith.addf %483, %484 : vector<2x16xf32>
    %486 = arith.negf %485 : vector<2x16xf32>
    %487 = math.exp %486 : vector<2x16xf32>
    %cst_91 = arith.constant 1.000000e+00 : f32
    %488 = vector.broadcast %cst_91 : f32 to vector<2x16xf32>
    %489 = arith.addf %488, %487 : vector<2x16xf32>
    %490 = arith.divf %488, %489 : vector<2x16xf32>
    %491 = vector.extract_strided_slice %482 {offsets = [0, 16], sizes = [2, 16], strides = [1, 1]} : vector<2x48xf32> to vector<2x16xf32>
    %492 = vector.extract_strided_slice %481 {offsets = [0, 16], sizes = [2, 16], strides = [1, 1]} : vector<2x48xf32> to vector<2x16xf32>
    %493 = arith.addf %491, %492 : vector<2x16xf32>
    %494 = arith.negf %493 : vector<2x16xf32>
    %495 = math.exp %494 : vector<2x16xf32>
    %cst_92 = arith.constant 1.000000e+00 : f32
    %496 = vector.broadcast %cst_92 : f32 to vector<2x16xf32>
    %497 = arith.addf %496, %495 : vector<2x16xf32>
    %498 = arith.divf %496, %497 : vector<2x16xf32>
    %499 = vector.extract_strided_slice %482 {offsets = [0, 32], sizes = [2, 16], strides = [1, 1]} : vector<2x48xf32> to vector<2x16xf32>
    %500 = vector.extract_strided_slice %481 {offsets = [0, 32], sizes = [2, 16], strides = [1, 1]} : vector<2x48xf32> to vector<2x16xf32>
    %501 = arith.mulf %490, %500 : vector<2x16xf32>
    %502 = arith.addf %499, %501 : vector<2x16xf32>
    %503 = math.tanh %502 : vector<2x16xf32>
    %cst_93 = arith.constant 1.000000e+00 : f32
    %504 = vector.broadcast %cst_93 : f32 to vector<2x16xf32>
    %505 = arith.subf %504, %498 : vector<2x16xf32>
    %506 = arith.mulf %505, %503 : vector<2x16xf32>
    %507 = arith.mulf %498, %478 : vector<2x16xf32>
    %508 = arith.addf %506, %507 : vector<2x16xf32>
    %cst_94 = arith.constant dense<0.000000e+00> : vector<2x48xf32>
    %509 = tpu.matmul %508, %56, %cst_94 {dimension_numbers = #tpu.dot_dimension_numbers<[1], [0], [0], [1], [0, 0, 1, 1], [], []>} : vector<2x16xf32>, vector<16x48xf32>, vector<2x48xf32> -> vector<2x48xf32>
    %510 = vector.broadcast %57 : vector<1x48xf32> to vector<2x48xf32>
    %511 = arith.addf %509, %510 : vector<2x48xf32>
    %512 = vector.extract_strided_slice %55 {offsets = [30, 0], sizes = [2, 48], strides = [1, 1]} : vector<32x48xf32> to vector<2x48xf32>
    %513 = vector.extract_strided_slice %512 {offsets = [0, 0], sizes = [2, 16], strides = [1, 1]} : vector<2x48xf32> to vector<2x16xf32>
    %514 = vector.extract_strided_slice %511 {offsets = [0, 0], sizes = [2, 16], strides = [1, 1]} : vector<2x48xf32> to vector<2x16xf32>
    %515 = arith.addf %513, %514 : vector<2x16xf32>
    %516 = arith.negf %515 : vector<2x16xf32>
    %517 = math.exp %516 : vector<2x16xf32>
    %cst_95 = arith.constant 1.000000e+00 : f32
    %518 = vector.broadcast %cst_95 : f32 to vector<2x16xf32>
    %519 = arith.addf %518, %517 : vector<2x16xf32>
    %520 = arith.divf %518, %519 : vector<2x16xf32>
    %521 = vector.extract_strided_slice %512 {offsets = [0, 16], sizes = [2, 16], strides = [1, 1]} : vector<2x48xf32> to vector<2x16xf32>
    %522 = vector.extract_strided_slice %511 {offsets = [0, 16], sizes = [2, 16], strides = [1, 1]} : vector<2x48xf32> to vector<2x16xf32>
    %523 = arith.addf %521, %522 : vector<2x16xf32>
    %524 = arith.negf %523 : vector<2x16xf32>
    %525 = math.exp %524 : vector<2x16xf32>
    %cst_96 = arith.constant 1.000000e+00 : f32
    %526 = vector.broadcast %cst_96 : f32 to vector<2x16xf32>
    %527 = arith.addf %526, %525 : vector<2x16xf32>
    %528 = arith.divf %526, %527 : vector<2x16xf32>
    %529 = vector.extract_strided_slice %512 {offsets = [0, 32], sizes = [2, 16], strides = [1, 1]} : vector<2x48xf32> to vector<2x16xf32>
    %530 = vector.extract_strided_slice %511 {offsets = [0, 32], sizes = [2, 16], strides = [1, 1]} : vector<2x48xf32> to vector<2x16xf32>
    %531 = arith.mulf %520, %530 : vector<2x16xf32>
    %532 = arith.addf %529, %531 : vector<2x16xf32>
    %533 = math.tanh %532 : vector<2x16xf32>
    %cst_97 = arith.constant 1.000000e+00 : f32
    %534 = vector.broadcast %cst_97 : f32 to vector<2x16xf32>
    %535 = arith.subf %534, %528 : vector<2x16xf32>
    %536 = arith.mulf %535, %533 : vector<2x16xf32>
    %537 = arith.mulf %528, %508 : vector<2x16xf32>
    %538 = arith.addf %536, %537 : vector<2x16xf32>
    %539 = vector.shape_cast %88 : vector<2x16xf32> to vector<2x1x16xf32>
    %540 = vector.shape_cast %118 : vector<2x16xf32> to vector<2x1x16xf32>
    %541 = vector.shape_cast %148 : vector<2x16xf32> to vector<2x1x16xf32>
    %542 = vector.shape_cast %178 : vector<2x16xf32> to vector<2x1x16xf32>
    %543 = vector.shape_cast %208 : vector<2x16xf32> to vector<2x1x16xf32>
    %544 = vector.shape_cast %238 : vector<2x16xf32> to vector<2x1x16xf32>
    %545 = vector.shape_cast %268 : vector<2x16xf32> to vector<2x1x16xf32>
    %546 = vector.shape_cast %298 : vector<2x16xf32> to vector<2x1x16xf32>
    %547 = vector.shape_cast %328 : vector<2x16xf32> to vector<2x1x16xf32>
    %548 = vector.shape_cast %358 : vector<2x16xf32> to vector<2x1x16xf32>
    %549 = vector.shape_cast %388 : vector<2x16xf32> to vector<2x1x16xf32>
    %550 = vector.shape_cast %418 : vector<2x16xf32> to vector<2x1x16xf32>
    %551 = vector.shape_cast %448 : vector<2x16xf32> to vector<2x1x16xf32>
    %552 = vector.shape_cast %478 : vector<2x16xf32> to vector<2x1x16xf32>
    %553 = vector.shape_cast %508 : vector<2x16xf32> to vector<2x1x16xf32>
    %554 = vector.shape_cast %538 : vector<2x16xf32> to vector<2x1x16xf32>
    %555 = tpu.concatenate %539, %540, %541, %542, %543, %544, %545, %546, %547, %548, %549, %550, %551, %552, %553, %554 in 1 : vector<2x1x16xf32>, vector<2x1x16xf32>, vector<2x1x16xf32>, vector<2x1x16xf32>, vector<2x1x16xf32>, vector<2x1x16xf32>, vector<2x1x16xf32>, vector<2x1x16xf32>, vector<2x1x16xf32>, vector<2x1x16xf32>, vector<2x1x16xf32>, vector<2x1x16xf32>, vector<2x1x16xf32>, vector<2x1x16xf32>, vector<2x1x16xf32>, vector<2x1x16xf32> -> vector<2x16x16xf32>
    %c0_98 = arith.constant 0 : index
    %c0_99 = arith.constant 0 : index
    %556 = vector.load %arg13[%c0_98, %c0_99] : memref<32x8xf32, #tpu.memory_space<vmem>>, vector<32x8xf32>
    %c0_100 = arith.constant 0 : index
    %c0_101 = arith.constant 0 : index
    %c0_102 = arith.constant 0 : index
    %557 = vector.load %arg1[%c0_100, %c0_101, %c0_102] : memref<2x8x32xf32, #tpu.memory_space<vmem>>, vector<1x8x32xf32>
    %558 = vector.shape_cast %557 : vector<1x8x32xf32> to vector<8x32xf32>
    %cst_103 = arith.constant dense<0.000000e+00> : vector<8x8xf32>
    %559 = tpu.matmul %558, %556, %cst_103 {dimension_numbers = #tpu.dot_dimension_numbers<[1], [0], [0], [1], [0, 0, 1, 1], [], []>} : vector<8x32xf32>, vector<32x8xf32>, vector<8x8xf32> -> vector<8x8xf32>
    %560 = vector.extract_strided_slice %555 {offsets = [0, 0, 0], sizes = [1, 16, 8], strides = [1, 1, 1]} : vector<2x16x16xf32> to vector<1x16x8xf32>
    %561 = vector.shape_cast %560 : vector<1x16x8xf32> to vector<16x8xf32>
    %562 = vector.extract_strided_slice %555 {offsets = [0, 0, 8], sizes = [1, 16, 8], strides = [1, 1, 1]} : vector<2x16x16xf32> to vector<1x16x8xf32>
    %563 = vector.shape_cast %562 : vector<1x16x8xf32> to vector<16x8xf32>
    %cst_104 = arith.constant dense<0.000000e+00> : vector<8x16xf32>
    %564 = tpu.matmul %559, %561, %cst_104 {dimension_numbers = #tpu.dot_dimension_numbers<[1], [1], [0], [0], [0, 0, 1, 0], [], []>} : vector<8x8xf32>, vector<16x8xf32>, vector<8x16xf32> -> vector<8x16xf32>
    %c0_105 = arith.constant 0 : index
    %c0_106 = arith.constant 0 : index
    %c0_107 = arith.constant 0 : index
    %565 = vector.load %arg2[%c0_105, %c0_106, %c0_107] : memref<2x8x16xf32, #tpu.memory_space<vmem>>, vector<1x8x16xf32>
    %566 = vector.shape_cast %565 : vector<1x8x16xf32> to vector<8x16xf32>
    %cst_108 = arith.constant 0.000000e+00 : f32
    %567 = vector.broadcast %cst_108 : f32 to vector<8x16xf32>
    %568 = arith.cmpf oeq, %566, %567 : vector<8x16xf32>
    %cst_109 = arith.constant 9.99999971E-10 : f32
    %569 = vector.broadcast %cst_109 : f32 to vector<8x16xf32>
    %570 = arith.select %568, %569, %564 : vector<8x16xi1>, vector<8x16xf32>
    %cst_110 = arith.constant dense<0xFF800000> : vector<8xf32>
    %571 = vector.multi_reduction <maximumf>, %570, %cst_110 [1] : vector<8x16xf32> to vector<8xf32>
    %572 = vector.shape_cast %571 : vector<8xf32> to vector<8x1xf32>
    %573 = vector.broadcast %572 : vector<8x1xf32> to vector<8x16xf32>
    %574 = arith.subf %570, %573 : vector<8x16xf32>
    %575 = math.exp %574 : vector<8x16xf32>
    %cst_111 = arith.constant dense<0.000000e+00> : vector<8xf32>
    %576 = vector.multi_reduction <add>, %575, %cst_111 [1] : vector<8x16xf32> to vector<8xf32>
    %577 = vector.shape_cast %576 : vector<8xf32> to vector<8x1xf32>
    %578 = vector.broadcast %577 : vector<8x1xf32> to vector<8x16xf32>
    %579 = arith.divf %575, %578 : vector<8x16xf32>
    %cst_112 = arith.constant dense<0.000000e+00> : vector<8x8xf32>
    %580 = tpu.matmul %579, %563, %cst_112 {dimension_numbers = #tpu.dot_dimension_numbers<[1], [0], [0], [1], [0, 0, 1, 1], [], []>} : vector<8x16xf32>, vector<16x8xf32>, vector<8x8xf32> -> vector<8x8xf32>
    %cst_113 = arith.constant 0.000000e+00 : f32
    %581 = vector.broadcast %cst_113 : f32 to vector<8x8xf32>
    %582 = arith.maximumf %580, %581 : vector<8x8xf32>
    %c0_114 = arith.constant 0 : index
    %c0_115 = arith.constant 0 : index
    %c0_116 = arith.constant 0 : index
    %583 = vector.load %arg14[%c0_114, %c0_115, %c0_116] : memref<2x8x8xf32, #tpu.memory_space<vmem>>, vector<1x8x8xf32>
    %584 = vector.shape_cast %583 : vector<1x8x8xf32> to vector<8x8xf32>
    %585 = vector.shape_cast %582 : vector<8x8xf32> to vector<1x8x8xf32>
    tpu.vector_store %arg14[%c0_114, %c0_115, %c0_116], %585 {strides = array<i32>} : memref<2x8x8xf32, #tpu.memory_space<vmem>>, vector<1x8x8xf32>,
    %c0_117 = arith.constant 0 : index
    %c0_118 = arith.constant 0 : index
    %c0_119 = arith.constant 0 : index
    %586 = vector.load %arg15[%c0_117, %c0_118, %c0_119] : memref<2x8x16xf32, #tpu.memory_space<vmem>>, vector<1x8x16xf32>
    %587 = vector.shape_cast %586 : vector<1x8x16xf32> to vector<8x16xf32>
    %588 = vector.shape_cast %579 : vector<8x16xf32> to vector<1x8x16xf32>
    tpu.vector_store %arg15[%c0_117, %c0_118, %c0_119], %588 {strides = array<i32>} : memref<2x8x16xf32, #tpu.memory_space<vmem>>, vector<1x8x16xf32>,
    %c1 = arith.constant 1 : index
    %c0_120 = arith.constant 0 : index
    %c0_121 = arith.constant 0 : index
    %589 = vector.load %arg1[%c1, %c0_120, %c0_121] : memref<2x8x32xf32, #tpu.memory_space<vmem>>, vector<1x8x32xf32>
    %590 = vector.shape_cast %589 : vector<1x8x32xf32> to vector<8x32xf32>
    %cst_122 = arith.constant dense<0.000000e+00> : vector<8x8xf32>
    %591 = tpu.matmul %590, %556, %cst_122 {dimension_numbers = #tpu.dot_dimension_numbers<[1], [0], [0], [1], [0, 0, 1, 1], [], []>} : vector<8x32xf32>, vector<32x8xf32>, vector<8x8xf32> -> vector<8x8xf32>
    %592 = vector.extract_strided_slice %555 {offsets = [1, 0, 0], sizes = [1, 16, 8], strides = [1, 1, 1]} : vector<2x16x16xf32> to vector<1x16x8xf32>
    %593 = vector.shape_cast %592 : vector<1x16x8xf32> to vector<16x8xf32>
    %594 = vector.extract_strided_slice %555 {offsets = [1, 0, 8], sizes = [1, 16, 8], strides = [1, 1, 1]} : vector<2x16x16xf32> to vector<1x16x8xf32>
    %595 = vector.shape_cast %594 : vector<1x16x8xf32> to vector<16x8xf32>
    %cst_123 = arith.constant dense<0.000000e+00> : vector<8x16xf32>
    %596 = tpu.matmul %591, %593, %cst_123 {dimension_numbers = #tpu.dot_dimension_numbers<[1], [1], [0], [0], [0, 0, 1, 0], [], []>} : vector<8x8xf32>, vector<16x8xf32>, vector<8x16xf32> -> vector<8x16xf32>
    %c1_124 = arith.constant 1 : index
    %c0_125 = arith.constant 0 : index
    %c0_126 = arith.constant 0 : index
    %597 = vector.load %arg2[%c1_124, %c0_125, %c0_126] : memref<2x8x16xf32, #tpu.memory_space<vmem>>, vector<1x8x16xf32>
    %598 = vector.shape_cast %597 : vector<1x8x16xf32> to vector<8x16xf32>
    %cst_127 = arith.constant 0.000000e+00 : f32
    %599 = vector.broadcast %cst_127 : f32 to vector<8x16xf32>
    %600 = arith.cmpf oeq, %598, %599 : vector<8x16xf32>
    %cst_128 = arith.constant 9.99999971E-10 : f32
    %601 = vector.broadcast %cst_128 : f32 to vector<8x16xf32>
    %602 = arith.select %600, %601, %596 : vector<8x16xi1>, vector<8x16xf32>
    %cst_129 = arith.constant dense<0xFF800000> : vector<8xf32>
    %603 = vector.multi_reduction <maximumf>, %602, %cst_129 [1] : vector<8x16xf32> to vector<8xf32>
    %604 = vector.shape_cast %603 : vector<8xf32> to vector<8x1xf32>
    %605 = vector.broadcast %604 : vector<8x1xf32> to vector<8x16xf32>
    %606 = arith.subf %602, %605 : vector<8x16xf32>
    %607 = math.exp %606 : vector<8x16xf32>
    %cst_130 = arith.constant dense<0.000000e+00> : vector<8xf32>
    %608 = vector.multi_reduction <add>, %607, %cst_130 [1] : vector<8x16xf32> to vector<8xf32>
    %609 = vector.shape_cast %608 : vector<8xf32> to vector<8x1xf32>
    %610 = vector.broadcast %609 : vector<8x1xf32> to vector<8x16xf32>
    %611 = arith.divf %607, %610 : vector<8x16xf32>
    %cst_131 = arith.constant dense<0.000000e+00> : vector<8x8xf32>
    %612 = tpu.matmul %611, %595, %cst_131 {dimension_numbers = #tpu.dot_dimension_numbers<[1], [0], [0], [1], [0, 0, 1, 1], [], []>} : vector<8x16xf32>, vector<16x8xf32>, vector<8x8xf32> -> vector<8x8xf32>
    %cst_132 = arith.constant 0.000000e+00 : f32
    %613 = vector.broadcast %cst_132 : f32 to vector<8x8xf32>
    %614 = arith.maximumf %612, %613 : vector<8x8xf32>
    %c1_133 = arith.constant 1 : index
    %c0_134 = arith.constant 0 : index
    %c0_135 = arith.constant 0 : index
    %615 = vector.load %arg14[%c1_133, %c0_134, %c0_135] : memref<2x8x8xf32, #tpu.memory_space<vmem>>, vector<1x8x8xf32>
    %616 = vector.shape_cast %615 : vector<1x8x8xf32> to vector<8x8xf32>
    %617 = vector.shape_cast %614 : vector<8x8xf32> to vector<1x8x8xf32>
    tpu.vector_store %arg14[%c1_133, %c0_134, %c0_135], %617 {strides = array<i32>} : memref<2x8x8xf32, #tpu.memory_space<vmem>>, vector<1x8x8xf32>,
    %c1_136 = arith.constant 1 : index
    %c0_137 = arith.constant 0 : index
    %c0_138 = arith.constant 0 : index
    %618 = vector.load %arg15[%c1_136, %c0_137, %c0_138] : memref<2x8x16xf32, #tpu.memory_space<vmem>>, vector<1x8x16xf32>
    %619 = vector.shape_cast %618 : vector<1x8x16xf32> to vector<8x16xf32>
    %620 = vector.shape_cast %611 : vector<8x16xf32> to vector<1x8x16xf32>
    tpu.vector_store %arg15[%c1_136, %c0_137, %c0_138], %620 {strides = array<i32>} : memref<2x8x16xf32, #tpu.memory_space<vmem>>, vector<1x8x16xf32>,
    return
  }
}

</mosaic_0001>

<llo_original>
// kernel: text_side_prosody_encoder.1
$region0: #{text_side_prosody_encoder.1}
  #allocation0 [shape = 'u32[]', space=smem, size = 0x4, offset = 0x4, fixed_abs, tag = 'smem constant byte address 0x4 - core index']
  #allocation1 [shape = 'u32[144,128]{1,0:T(1,128)}', space=vmem, size = 0x12000, scoped, tag = 'internal scratch']
  %s0 = inlined_call_operand.vmem [shape: f32[32,16], index: 0, kind: input, shape index: {}]
  %s1 = inlined_call_operand.vmem [shape: f32[2,8,32], index: 1, kind: input, shape index: {}]
  %s2 = inlined_call_operand.vmem [shape: f32[2,8,16], index: 2, kind: input, shape index: {}]
  %s3 = inlined_call_operand.vmem [shape: f32[48,32], index: 3, kind: input, shape index: {}]
  %s4 = inlined_call_operand.vmem [shape: f32[32,32], index: 4, kind: input, shape index: {}]
  %s5 = inlined_call_operand.vmem [shape: f32[96,32], index: 5, kind: input, shape index: {}]
  %s6 = inlined_call_operand.vmem [shape: f32[1,32], index: 6, kind: input, shape index: {}]
  %s7 = inlined_call_operand.vmem [shape: f32[96,32], index: 7, kind: input, shape index: {}]
  %s8 = inlined_call_operand.vmem [shape: f32[1,32], index: 8, kind: input, shape index: {}]
  %s9 = inlined_call_operand.vmem [shape: f32[32,48], index: 9, kind: input, shape index: {}]
  %s10 = inlined_call_operand.vmem [shape: f32[1,48], index: 10, kind: input, shape index: {}]
  %s11 = inlined_call_operand.vmem [shape: f32[16,48], index: 11, kind: input, shape index: {}]
  %s12 = inlined_call_operand.vmem [shape: f32[1,48], index: 12, kind: input, shape index: {}]
  %s13 = inlined_call_operand.vmem [shape: f32[32,8], index: 13, kind: input, shape index: {}]
  %s14 = inlined_call_operand.hbm [shape: f32[2,8,8], index: 14, kind: output, shape index: {0}]
  %s15 = inlined_call_operand.hbm [shape: f32[2,8,16], index: 15, kind: output, shape index: {1}]
  %16 = xla_tuple %s14, %s15
  %s17 = sld [smem:[#allocation0]]
  $region74: #{text_side_prosody_encoder.1} parent=0
    _
  %s19 = ssub.s32 1, %s17
  %s20 = scalar_select 0, %s19, %s17
  $region1: #{text_side_prosody_encoder.1} parent=0
    #allocation2 [shape = 'u8[8192]{0}', space=vmem, size = 0x2000, scoped, tag = 'output window, operand 0, single buffered']
    #allocation3 [shape = 's32[1]{0}', space=sflag, size = 0x4, scoped, tag = 'scoped memory for text_side_prosody_encoder.1']
    #allocation4 [shape = 'u8[8192]{0}', space=vmem, size = 0x2000, scoped, tag = 'output window, operand 1, single buffered']
    #allocation5 [shape = 's32[1]{0}', space=sflag, size = 0x4, scoped, tag = 'scoped memory for text_side_prosody_encoder.1']
    %21 = vsyncpa [#allocation3], 0
    %22 = vsyncpa [#allocation5], 0
    // Predicated region
    $region2: #{text_side_prosody_encoder.1} parent=1 // pred_check
      _
    $region3: #{text_side_prosody_encoder.1} parent=1 // pred_check_branch
      %24 = sbr.rel (0) target = $region5
    $region4: #{text_side_prosody_encoder.1} parent=1 // pred_region
      _
    $region5: #{text_side_prosody_encoder.1} parent=1 // pred_fallthru
      _
    // Predicated region
    $region6: #{text_side_prosody_encoder.1} parent=1 // pred_check
      _
    $region7: #{text_side_prosody_encoder.1} parent=1 // pred_check_branch
      %26 = sbr.rel (0) target = $region9
    $region8: #{text_side_prosody_encoder.1} parent=1 // pred_region
      _
    $region9: #{text_side_prosody_encoder.1} parent=1 // pred_fallthru
      _
    // Predicated region
    $region10: #{text_side_prosody_encoder.1} parent=1 // pred_check
      _
    $region11: #{text_side_prosody_encoder.1} parent=1 // pred_check_branch
      %28 = sbr.rel (0) target = $region13
    $region12: #{text_side_prosody_encoder.1} parent=1 // pred_region
      _
    $region13: #{text_side_prosody_encoder.1} parent=1 // pred_fallthru
      _
    // Predicated region
    $region14: #{text_side_prosody_encoder.1} parent=1 // pred_check
      _
    $region15: #{text_side_prosody_encoder.1} parent=1 // pred_check_branch
      %30 = sbr.rel (0) target = $region17
    $region16: #{text_side_prosody_encoder.1} parent=1 // pred_region
      _
    $region17: #{text_side_prosody_encoder.1} parent=1 // pred_fallthru
      _
    // Predicated region
    $region18: #{text_side_prosody_encoder.1} parent=1 // pred_check
      _
    $region19: #{text_side_prosody_encoder.1} parent=1 // pred_check_branch
      %32 = sbr.rel (0) target = $region21
    $region20: #{text_side_prosody_encoder.1} parent=1 // pred_region
      _
    $region21: #{text_side_prosody_encoder.1} parent=1 // pred_fallthru
      _
    // Predicated region
    $region22: #{text_side_prosody_encoder.1} parent=1 // pred_check
      _
    $region23: #{text_side_prosody_encoder.1} parent=1 // pred_check_branch
      %34 = sbr.rel (0) target = $region25
    $region24: #{text_side_prosody_encoder.1} parent=1 // pred_region
      _
    $region25: #{text_side_prosody_encoder.1} parent=1 // pred_fallthru
      _
    // Predicated region
    $region26: #{text_side_prosody_encoder.1} parent=1 // pred_check
      _
    $region27: #{text_side_prosody_encoder.1} parent=1 // pred_check_branch
      %36 = sbr.rel (0) target = $region29
    $region28: #{text_side_prosody_encoder.1} parent=1 // pred_region
      _
    $region29: #{text_side_prosody_encoder.1} parent=1 // pred_fallthru
      _
    // Predicated region
    $region30: #{text_side_prosody_encoder.1} parent=1 // pred_check
      _
    $region31: #{text_side_prosody_encoder.1} parent=1 // pred_check_branch
      %38 = sbr.rel (0) target = $region33
    $region32: #{text_side_prosody_encoder.1} parent=1 // pred_region
      _
    $region33: #{text_side_prosody_encoder.1} parent=1 // pred_fallthru
      _
    // Predicated region
    $region34: #{text_side_prosody_encoder.1} parent=1 // pred_check
      _
    $region35: #{text_side_prosody_encoder.1} parent=1 // pred_check_branch
      %40 = sbr.rel (0) target = $region37
    $region36: #{text_side_prosody_encoder.1} parent=1 // pred_region
      _
    $region37: #{text_side_prosody_encoder.1} parent=1 // pred_fallthru
      _
    // Predicated region
    $region38: #{text_side_prosody_encoder.1} parent=1 // pred_check
      _
    $region39: #{text_side_prosody_encoder.1} parent=1 // pred_check_branch
      %42 = sbr.rel (0) target = $region41
    $region40: #{text_side_prosody_encoder.1} parent=1 // pred_region
      _
    $region41: #{text_side_prosody_encoder.1} parent=1 // pred_fallthru
      _
    // Predicated region
    $region42: #{text_side_prosody_encoder.1} parent=1 // pred_check
      _
    $region43: #{text_side_prosody_encoder.1} parent=1 // pred_check_branch
      %44 = sbr.rel (0) target = $region45
    $region44: #{text_side_prosody_encoder.1} parent=1 // pred_region
      _
    $region45: #{text_side_prosody_encoder.1} parent=1 // pred_fallthru
      _
    // Predicated region
    $region46: #{text_side_prosody_encoder.1} parent=1 // pred_check
      _
    $region47: #{text_side_prosody_encoder.1} parent=1 // pred_check_branch
      %46 = sbr.rel (0) target = $region49
    $region48: #{text_side_prosody_encoder.1} parent=1 // pred_region
      _
    $region49: #{text_side_prosody_encoder.1} parent=1 // pred_fallthru
      _
    // Predicated region
    $region50: #{text_side_prosody_encoder.1} parent=1 // pred_check
      _
    $region51: #{text_side_prosody_encoder.1} parent=1 // pred_check_branch
      %48 = sbr.rel (0) target = $region53
    $region52: #{text_side_prosody_encoder.1} parent=1 // pred_region
      _
    $region53: #{text_side_prosody_encoder.1} parent=1 // pred_fallthru
      _
    // Predicated region
    $region54: #{text_side_prosody_encoder.1} parent=1 // pred_check
      _
    $region55: #{text_side_prosody_encoder.1} parent=1 // pred_check_branch
      %50 = sbr.rel (0) target = $region57
    $region56: #{text_side_prosody_encoder.1} parent=1 // pred_region
      _
    $region57: #{text_side_prosody_encoder.1} parent=1 // pred_fallthru
      _
    %v51 = vlaneseq
    %v52 = vshrl.u32 %v51, 7
    %v53 = vadd.s32 %v52, 8
    %v54 = vadd.s32 %v52, 16
    %v55 = vadd.s32 %v52, 24
    %vm56 = vcmp.ge.s32.totalorder %v52, 2
    %vm57 = vcmp.ge.s32.totalorder %v53, 2
    %vm58 = vcmp.ge.s32.totalorder %v54, 2
    %vm59 = vcmp.ge.s32.totalorder %v55, 2
    %v60 = vsel %vm56, 1, 0
    %v61 = vsel %vm57, 1, 0
    %v62 = vsel %vm58, 1, 0
    %v63 = vsel %vm59, 1, 0
    %v64 = vcvt.s32.f32 %v60
    %v65 = vcvt.s32.f32 %v61
    %v66 = vcvt.s32.f32 %v62
    %v67 = vcvt.s32.f32 %v63
    %vm68 = vcmp.lt.s32.totalorder %v52, 30
    %vm69 = vcmp.lt.s32.totalorder %v53, 30
    %vm70 = vcmp.lt.s32.totalorder %v54, 30
    %vm71 = vcmp.lt.s32.totalorder %v55, 30
    %v72 = vsel %vm68, 1, 0
    %v73 = vsel %vm69, 1, 0
    %v74 = vsel %vm70, 1, 0
    %v75 = vsel %vm71, 1, 0
    %v76 = vcvt.s32.f32 %v72
    %v77 = vcvt.s32.f32 %v73
    %v78 = vcvt.s32.f32 %v74
    %v79 = vcvt.s32.f32 %v75
    %v80 = vld [vmem:[%s0] sm:$0xff]
    %v81 = vld [vmem:[%s0 + $0x8] sm:$0xff]
    %v82 = vld [vmem:[%s0 + $0x10] sm:$0xff]
    %v83 = vld [vmem:[%s0 + $0x18] sm:$0xff]
    %v84 = vrot.slane %v80, 6
    %v85 = vrot.slane %v81, 6
    %v86 = vrot.slane %v82, 6
    %v87 = vrot.slane %v83, 6
    %vm88 = vcmp.lt.s32.totalorder %v52, 2
    %v89 = vsel %vm88, %v86, %v87
    %v90 = vsel %vm88, %v85, %v86
    %v91 = vsel %vm88, %v84, %v85
    %v92 = vsel %vm88, %v87, %v84
    %v93 = vmul.f32 %v92, %v64
    %v94 = vmul.f32 %v91, %v65
    %v95 = vmul.f32 %v90, %v66
    %v96 = vmul.f32 %v89, %v67
    %v97 = vrot.slane %v80, 2
    %v98 = vrot.slane %v81, 2
    %v99 = vrot.slane %v82, 2
    %v100 = vrot.slane %v83, 2
    %vm101 = vcmp.lt.s32.totalorder %v52, 6
    %v102 = vsel %vm101, %v99, %v100
    %v103 = vsel %vm101, %v98, %v99
    %v104 = vsel %vm101, %v97, %v98
    %v105 = vsel %vm101, %v100, %v97
    %v106 = vmul.f32 %v104, %v76
    %v107 = vmul.f32 %v103, %v77
    %v108 = vmul.f32 %v102, %v78
    %v109 = vmul.f32 %v105, %v79
    %114 = vrot.lane.b32.xlu0 %v80, 16
    %v115 = vpop.permute.xlu0 %114
    %116 = vrot.lane.b32.xlu0 %v81, 16
    %v117 = vpop.permute.xlu0 %116
    %118 = vrot.lane.b32.xlu0 %v82, 16
    %v119 = vpop.permute.xlu0 %118
    %120 = vrot.lane.b32.xlu0 %v83, 16
    %v121 = vpop.permute.xlu0 %120
    %130 = vrot.lane.b32.xlu0 %v106, 32
    %v131 = vpop.permute.xlu0 %130
    %132 = vrot.lane.b32.xlu0 %v107, 32
    %v133 = vpop.permute.xlu0 %132
    %134 = vrot.lane.b32.xlu0 %v108, 32
    %v135 = vpop.permute.xlu0 %134
    %136 = vrot.lane.b32.xlu0 %v109, 32
    %v137 = vpop.permute.xlu0 %136
    %vm142 = vcmask 130048
    %v143 = vsel %vm142, %v93, %v115
    %v144 = vsel %vm142, %v94, %v117
    %v145 = vsel %vm142, %v95, %v119
    %v146 = vsel %vm142, %v96, %v121
    %vm147 = vcmask 261120
    %v148 = vsel %vm147, %v143, %v131
    %v149 = vsel %vm147, %v144, %v133
    %v150 = vsel %vm147, %v145, %v135
    %v151 = vsel %vm147, %v146, %v137
    %v152 = vld [vmem:[%s3] sm:$0xff]
    %v153 = vld [vmem:[%s3 + $0x8] sm:$0xff]
    %v154 = vld [vmem:[%s3 + $0x10] sm:$0xff]
    %v155 = vld [vmem:[%s3 + $0x18] sm:$0xff]
    %v156 = vld [vmem:[%s3 + $0x20] sm:$0xff]
    %v157 = vld [vmem:[%s3 + $0x28] sm:$0xff]
    %v158 = vld [vmem:[%s4] sm:$0xff]
    %v159 = vld [vmem:[%s4 + $0x8] sm:$0xff]
    %v160 = vld [vmem:[%s4 + $0x10] sm:$0xff]
    %v161 = vld [vmem:[%s4 + $0x18] sm:$0xff]
    %vm162 = vcmask 392192
    %v164 = vsel %vm162, %v148, 0
    %v167 = vsel %vm162, %v149, 0
    %v170 = vsel %vm162, %v150, 0
    %v173 = vsel %vm162, %v151, 0
    %175 = vmatprep.subr.mxu0 0.0
    %176 = vmatpush1.msra.mxu0 %v152
    %177 = vmatprep.subr.mxu0 0.0
    %178 = vmatpush1.msra.mxu0 %v153
    %179 = vmatprep.subr.mxu0 0.0
    %180 = vmatpush1.msra.mxu0 %v154
    %181 = vmatprep.subr.mxu0 0.0
    %182 = vmatpush1.msra.mxu0 %v155
    %183 = vmatprep.subr.mxu0 0.0
    %184 = vmatpush1.msra.mxu0 %v156
    %185 = vmatprep.subr.mxu0 0.0
    %186 = vmatpush1.msra.mxu0 %v157
    %187 = vmatprep.subr.mxu0 0.0
    %188 = vmatpush1.msra.mxu0 0.0
    %189 = vmatprep.subr.mxu0 0.0
    %190 = vmatpush1.msra.mxu0 0.0
    %191 = vmatprep.subr.mxu0 0.0
    %192 = vmatpush1.msra.mxu0 0.0
    %193 = vmatprep.subr.mxu0 0.0
    %194 = vmatpush1.msra.mxu0 0.0
    %195 = vmatprep.subr.mxu0 0.0
    %196 = vmatpush1.msra.mxu0 0.0
    %197 = vmatprep.subr.mxu0 0.0
    %198 = vmatpush1.msra.mxu0 0.0
    %199 = vmatprep.subr.mxu0 0.0
    %200 = vmatpush1.msra.mxu0 0.0
    %201 = vmatprep.subr.mxu0 0.0
    %202 = vmatpush1.msra.mxu0 0.0
    %203 = vmatprep.subr.mxu0 0.0
    %204 = vmatpush1.msra.mxu0 0.0
    %205 = vmatprep.subr.mxu0 0.0
    %206 = vmatpush1.msra.mxu0 0.0
    %207 = vmatprep.subr.mxu0 0.0
    %208 = vmatpush1.msra.mxu0 0.0
    %209 = vmatprep.subr.mxu0 0.0
    %210 = vmatpush1.msra.mxu0 0.0
    %211 = vmatprep.subr.mxu0 0.0
    %212 = vmatpush1.msra.mxu0 0.0
    %213 = vmatprep.subr.mxu0 0.0
    %214 = vmatpush1.msra.mxu0 0.0
    %215 = vmatprep.subr.mxu0 0.0
    %216 = vmatpush1.msra.mxu0 0.0
    %217 = vmatprep.subr.mxu0 0.0
    %218 = vmatpush1.msra.mxu0 0.0
    %219 = vmatprep.subr.mxu0 0.0
    %220 = vmatpush1.msra.mxu0 0.0
    %221 = vmatprep.subr.mxu0 0.0
    %222 = vmatpush1.msra.mxu0 0.0
    %223 = vmatprep.subr.mxu0 0.0
    %224 = vmatpush1.msra.mxu0 0.0
    %225 = vmatprep.subr.mxu0 0.0
    %226 = vmatpush1.msra.mxu0 0.0
    %227 = vmatprep.subr.mxu0 0.0
    %228 = vmatpush1.msra.mxu0 0.0
    %229 = vmatprep.subr.mxu0 0.0
    %230 = vmatpush1.msra.mxu0 0.0
    %231 = vmatprep.subr.mxu0 0.0
    %232 = vmatpush1.msra.mxu0 0.0
    %233 = vmatprep.subr.mxu0 0.0
    %234 = vmatpush1.msra.mxu0 0.0
    %235 = vmatprep.subr.mxu0 0.0
    %236 = vmatpush1.msra.mxu0 0.0
    %237 = vmatprep.subr.mxu0 0.0
    %238 = vmatpush1.msra.mxu0 0.0
    %239 = vmatprep.mubr.f32.mxu0 0.0
    %240 = vmatmul.mubr.f32.gmra.mrb[0].mxu0 %v164
    %v241 = vpop.f32.mrb[0].mxu0
    %v242 = vadd.f32 %v158, %v241
    %v243 = vpop.f32.mrb[0].mxu0
    %244 = vmatprep.mubr.f32.mxu0 0.0
    %245 = vmatmul.mubr.f32.gmra.mrb[0].mxu0 %v167
    %v246 = vpop.f32.mrb[0].mxu0
    %v247 = vadd.f32 %v159, %v246
    %v248 = vpop.f32.mrb[0].mxu0
    %249 = vmatprep.mubr.f32.mxu0 0.0
    %250 = vmatmul.mubr.f32.gmra.mrb[0].mxu0 %v170
    %v251 = vpop.f32.mrb[0].mxu0
    %v252 = vadd.f32 %v160, %v251
    %v253 = vpop.f32.mrb[0].mxu0
    %254 = vmatprep.mubr.f32.mxu0 0.0
    %255 = vmatmul.mubr.f32.gmra.mrb[0].mxu0 %v173
    %v256 = vpop.f32.mrb[0].mxu0
    %v257 = vadd.f32 %v161, %v256
    %v258 = vpop.f32.mrb[0].mxu0
    %259 = vdwg.mxu0
    %v260 = vmax.f32 %v242, 0.0
    %v261 = vmax.f32 %v247, 0.0
    %v262 = vmax.f32 %v252, 0.0
    %v263 = vmax.f32 %v257, 0.0
    %v264 = vrot.slane %v260, 6
    %v265 = vrot.slane %v261, 6
    %v266 = vrot.slane %v262, 6
    %v267 = vrot.slane %v263, 6
    %v268 = vsel %vm88, %v266, %v267
    %v269 = vsel %vm88, %v265, %v266
    %v270 = vsel %vm88, %v264, %v265
    %v271 = vsel %vm88, %v267, %v264
    %v272 = vmul.f32 %v271, %v64
    %v273 = vmul.f32 %v270, %v65
    %v274 = vmul.f32 %v269, %v66
    %v275 = vmul.f32 %v268, %v67
    %v276 = vrot.slane %v260, 2
    %v277 = vrot.slane %v261, 2
    %v278 = vrot.slane %v262, 2
    %v279 = vrot.slane %v263, 2
    %v280 = vsel %vm101, %v278, %v279
    %v281 = vsel %vm101, %v277, %v278
    %v282 = vsel %vm101, %v276, %v277
    %v283 = vsel %vm101, %v279, %v276
    %v284 = vmul.f32 %v282, %v76
    %v285 = vmul.f32 %v281, %v77
    %v286 = vmul.f32 %v280, %v78
    %v287 = vmul.f32 %v283, %v79
    %292 = vrot.lane.b32.xlu0 %v260, 32
    %v293 = vpop.permute.xlu0 %292
    %294 = vrot.lane.b32.xlu0 %v261, 32
    %v295 = vpop.permute.xlu0 %294
    %296 = vrot.lane.b32.xlu0 %v262, 32
    %v297 = vpop.permute.xlu0 %296
    %298 = vrot.lane.b32.xlu0 %v263, 32
    %v299 = vpop.permute.xlu0 %298
    %308 = vrot.lane.b32.xlu0 %v284, 64
    %v309 = vpop.permute.xlu0 %308
    %310 = vrot.lane.b32.xlu0 %v285, 64
    %v311 = vpop.permute.xlu0 %310
    %312 = vrot.lane.b32.xlu0 %v286, 64
    %v313 = vpop.permute.xlu0 %312
    %314 = vrot.lane.b32.xlu0 %v287, 64
    %v315 = vpop.permute.xlu0 %314
    %v320 = vsel %vm147, %v272, %v293
    %v321 = vsel %vm147, %v273, %v295
    %v322 = vsel %vm147, %v274, %v297
    %v323 = vsel %vm147, %v275, %v299
    %vm324 = vcmask 523264
    %v325 = vsel %vm324, %v320, %v309
    %v326 = vsel %vm324, %v321, %v311
    %v327 = vsel %vm324, %v322, %v313
    %v328 = vsel %vm324, %v323, %v315
    %v329 = vld [vmem:[%s5] sm:$0xff]
    %v330 = vld [vmem:[%s5 + $0x8] sm:$0xff]
    %v331 = vld [vmem:[%s5 + $0x10] sm:$0xff]
    %v332 = vld [vmem:[%s5 + $0x18] sm:$0xff]
    %v333 = vld [vmem:[%s5 + $0x20] sm:$0xff]
    %v334 = vld [vmem:[%s5 + $0x28] sm:$0xff]
    %v335 = vld [vmem:[%s5 + $0x30] sm:$0xff]
    %v336 = vld [vmem:[%s5 + $0x38] sm:$0xff]
    %v337 = vld [vmem:[%s5 + $0x40] sm:$0xff]
    %v338 = vld [vmem:[%s5 + $0x48] sm:$0xff]
    %v339 = vld [vmem:[%s5 + $0x50] sm:$0xff]
    %v340 = vld [vmem:[%s5 + $0x58] sm:$0xff]
    %v341 = vld [vmem:[%s6] sm:$0x1]
    %v343 = vlaneseq
    %v344 = vshrl.u32 %v343, 7
    %v345 = vsub.s32 0, %v344
    %v346 = vrot.slane %v341, %v345
    %vm348 = vcmask 785408
    %v350 = vsel %vm348, %v325, 0
    %v353 = vsel %vm348, %v326, 0
    %v356 = vsel %vm348, %v327, 0
    %v359 = vsel %vm348, %v328, 0
    %361 = vmatprep.subr.mxu0 0.0
    %362 = vmatpush1.msra.mxu0 %v329
    %363 = vmatprep.subr.mxu0 0.0
    %364 = vmatpush1.msra.mxu0 %v330
    %365 = vmatprep.subr.mxu0 0.0
    %366 = vmatpush1.msra.mxu0 %v331
    %367 = vmatprep.subr.mxu0 0.0
    %368 = vmatpush1.msra.mxu0 %v332
    %369 = vmatprep.subr.mxu0 0.0
    %370 = vmatpush1.msra.mxu0 %v333
    %371 = vmatprep.subr.mxu0 0.0
    %372 = vmatpush1.msra.mxu0 %v334
    %373 = vmatprep.subr.mxu0 0.0
    %374 = vmatpush1.msra.mxu0 %v335
    %375 = vmatprep.subr.mxu0 0.0
    %376 = vmatpush1.msra.mxu0 %v336
    %377 = vmatprep.subr.mxu0 0.0
    %378 = vmatpush1.msra.mxu0 %v337
    %379 = vmatprep.subr.mxu0 0.0
    %380 = vmatpush1.msra.mxu0 %v338
    %381 = vmatprep.subr.mxu0 0.0
    %382 = vmatpush1.msra.mxu0 %v339
    %383 = vmatprep.subr.mxu0 0.0
    %384 = vmatpush1.msra.mxu0 %v340
    %385 = vmatprep.subr.mxu0 0.0
    %386 = vmatpush1.msra.mxu0 0.0
    %387 = vmatprep.subr.mxu0 0.0
    %388 = vmatpush1.msra.mxu0 0.0
    %389 = vmatprep.subr.mxu0 0.0
    %390 = vmatpush1.msra.mxu0 0.0
    %391 = vmatprep.subr.mxu0 0.0
    %392 = vmatpush1.msra.mxu0 0.0
    %393 = vmatprep.subr.mxu0 0.0
    %394 = vmatpush1.msra.mxu0 0.0
    %395 = vmatprep.subr.mxu0 0.0
    %396 = vmatpush1.msra.mxu0 0.0
    %397 = vmatprep.subr.mxu0 0.0
    %398 = vmatpush1.msra.mxu0 0.0
    %399 = vmatprep.subr.mxu0 0.0
    %400 = vmatpush1.msra.mxu0 0.0
    %401 = vmatprep.subr.mxu0 0.0
    %402 = vmatpush1.msra.mxu0 0.0
    %403 = vmatprep.subr.mxu0 0.0
    %404 = vmatpush1.msra.mxu0 0.0
    %405 = vmatprep.subr.mxu0 0.0
    %406 = vmatpush1.msra.mxu0 0.0
    %407 = vmatprep.subr.mxu0 0.0
    %408 = vmatpush1.msra.mxu0 0.0
    %409 = vmatprep.subr.mxu0 0.0
    %410 = vmatpush1.msra.mxu0 0.0
    %411 = vmatprep.subr.mxu0 0.0
    %412 = vmatpush1.msra.mxu0 0.0
    %413 = vmatprep.subr.mxu0 0.0
    %414 = vmatpush1.msra.mxu0 0.0
    %415 = vmatprep.subr.mxu0 0.0
    %416 = vmatpush1.msra.mxu0 0.0
    %417 = vmatprep.subr.mxu0 0.0
    %418 = vmatpush1.msra.mxu0 0.0
    %419 = vmatprep.subr.mxu0 0.0
    %420 = vmatpush1.msra.mxu0 0.0
    %421 = vmatprep.subr.mxu0 0.0
    %422 = vmatpush1.msra.mxu0 0.0
    %423 = vmatprep.subr.mxu0 0.0
    %424 = vmatpush1.msra.mxu0 0.0
    %425 = vmatprep.mubr.f32.mxu0 0.0
    %426 = vmatmul.mubr.f32.gmra.mrb[0].mxu0 %v350
    %v427 = vpop.f32.mrb[0].mxu0
    %v428 = vadd.f32 %v346, %v427
    %v429 = vpop.f32.mrb[0].mxu0
    %430 = vmatprep.mubr.f32.mxu0 0.0
    %431 = vmatmul.mubr.f32.gmra.mrb[0].mxu0 %v353
    %v432 = vpop.f32.mrb[0].mxu0
    %v433 = vadd.f32 %v346, %v432
    %v434 = vpop.f32.mrb[0].mxu0
    %435 = vmatprep.mubr.f32.mxu0 0.0
    %436 = vmatmul.mubr.f32.gmra.mrb[0].mxu0 %v356
    %v437 = vpop.f32.mrb[0].mxu0
    %v438 = vadd.f32 %v346, %v437
    %v439 = vpop.f32.mrb[0].mxu0
    %440 = vmatprep.mubr.f32.mxu0 0.0
    %441 = vmatmul.mubr.f32.gmra.mrb[0].mxu0 %v359
    %v442 = vpop.f32.mrb[0].mxu0
    %v443 = vadd.f32 %v346, %v442
    %v444 = vpop.f32.mrb[0].mxu0
    %445 = vdwg.mxu0
    %v446 = vmax.f32 %v428, 0.0
    %v447 = vmax.f32 %v433, 0.0
    %v448 = vmax.f32 %v438, 0.0
    %v449 = vmax.f32 %v443, 0.0
    %v450 = vrot.slane %v446, 6
    %v451 = vrot.slane %v447, 6
    %v452 = vrot.slane %v448, 6
    %v453 = vrot.slane %v449, 6
    %v454 = vsel %vm88, %v452, %v453
    %v455 = vsel %vm88, %v451, %v452
    %v456 = vsel %vm88, %v450, %v451
    %v457 = vsel %vm88, %v453, %v450
    %v458 = vmul.f32 %v457, %v64
    %v459 = vmul.f32 %v456, %v65
    %v460 = vmul.f32 %v455, %v66
    %v461 = vmul.f32 %v454, %v67
    %v462 = vrot.slane %v446, 2
    %v463 = vrot.slane %v447, 2
    %v464 = vrot.slane %v448, 2
    %v465 = vrot.slane %v449, 2
    %v466 = vsel %vm101, %v464, %v465
    %v467 = vsel %vm101, %v463, %v464
    %v468 = vsel %vm101, %v462, %v463
    %v469 = vsel %vm101, %v465, %v462
    %v470 = vmul.f32 %v468, %v76
    %v471 = vmul.f32 %v467, %v77
    %v472 = vmul.f32 %v466, %v78
    %v473 = vmul.f32 %v469, %v79
    %478 = vrot.lane.b32.xlu0 %v446, 32
    %v479 = vpop.permute.xlu0 %478
    %480 = vrot.lane.b32.xlu0 %v447, 32
    %v481 = vpop.permute.xlu0 %480
    %482 = vrot.lane.b32.xlu0 %v448, 32
    %v483 = vpop.permute.xlu0 %482
    %484 = vrot.lane.b32.xlu0 %v449, 32
    %v485 = vpop.permute.xlu0 %484
    %494 = vrot.lane.b32.xlu0 %v470, 64
    %v495 = vpop.permute.xlu0 %494
    %496 = vrot.lane.b32.xlu0 %v471, 64
    %v497 = vpop.permute.xlu0 %496
    %498 = vrot.lane.b32.xlu0 %v472, 64
    %v499 = vpop.permute.xlu0 %498
    %500 = vrot.lane.b32.xlu0 %v473, 64
    %v501 = vpop.permute.xlu0 %500
    %v506 = vsel %vm147, %v458, %v479
    %v507 = vsel %vm147, %v459, %v481
    %v508 = vsel %vm147, %v460, %v483
    %v509 = vsel %vm147, %v461, %v485
    %v510 = vsel %vm324, %v506, %v495
    %v511 = vsel %vm324, %v507, %v497
    %v512 = vsel %vm324, %v508, %v499
    %v513 = vsel %vm324, %v509, %v501
    %v514 = vld [vmem:[%s7] sm:$0xff]
    %v515 = vld [vmem:[%s7 + $0x8] sm:$0xff]
    %v516 = vld [vmem:[%s7 + $0x10] sm:$0xff]
    %v517 = vld [vmem:[%s7 + $0x18] sm:$0xff]
    %v518 = vld [vmem:[%s7 + $0x20] sm:$0xff]
    %v519 = vld [vmem:[%s7 + $0x28] sm:$0xff]
    %v520 = vld [vmem:[%s7 + $0x30] sm:$0xff]
    %v521 = vld [vmem:[%s7 + $0x38] sm:$0xff]
    %v522 = vld [vmem:[%s7 + $0x40] sm:$0xff]
    %v523 = vld [vmem:[%s7 + $0x48] sm:$0xff]
    %v524 = vld [vmem:[%s7 + $0x50] sm:$0xff]
    %v525 = vld [vmem:[%s7 + $0x58] sm:$0xff]
    %v526 = vld [vmem:[%s8] sm:$0x1]
    %v528 = vlaneseq
    %v529 = vshrl.u32 %v528, 7
    %v530 = vsub.s32 0, %v529
    %v531 = vrot.slane %v526, %v530
    %v534 = vsel %vm348, %v510, 0
    %v537 = vsel %vm348, %v511, 0
    %v540 = vsel %vm348, %v512, 0
    %v543 = vsel %vm348, %v513, 0
    %545 = vmatprep.subr.mxu0 0.0
    %546 = vmatpush1.msra.mxu0 %v514
    %547 = vmatprep.subr.mxu0 0.0
    %548 = vmatpush1.msra.mxu0 %v515
    %549 = vmatprep.subr.mxu0 0.0
    %550 = vmatpush1.msra.mxu0 %v516
    %551 = vmatprep.subr.mxu0 0.0
    %552 = vmatpush1.msra.mxu0 %v517
    %553 = vmatprep.subr.mxu0 0.0
    %554 = vmatpush1.msra.mxu0 %v518
    %555 = vmatprep.subr.mxu0 0.0
    %556 = vmatpush1.msra.mxu0 %v519
    %557 = vmatprep.subr.mxu0 0.0
    %558 = vmatpush1.msra.mxu0 %v520
    %559 = vmatprep.subr.mxu0 0.0
    %560 = vmatpush1.msra.mxu0 %v521
    %561 = vmatprep.subr.mxu0 0.0
    %562 = vmatpush1.msra.mxu0 %v522
    %563 = vmatprep.subr.mxu0 0.0
    %564 = vmatpush1.msra.mxu0 %v523
    %565 = vmatprep.subr.mxu0 0.0
    %566 = vmatpush1.msra.mxu0 %v524
    %567 = vmatprep.subr.mxu0 0.0
    %568 = vmatpush1.msra.mxu0 %v525
    %569 = vmatprep.subr.mxu0 0.0
    %570 = vmatpush1.msra.mxu0 0.0
    %571 = vmatprep.subr.mxu0 0.0
    %572 = vmatpush1.msra.mxu0 0.0
    %573 = vmatprep.subr.mxu0 0.0
    %574 = vmatpush1.msra.mxu0 0.0
    %575 = vmatprep.subr.mxu0 0.0
    %576 = vmatpush1.msra.mxu0 0.0
    %577 = vmatprep.subr.mxu0 0.0
    %578 = vmatpush1.msra.mxu0 0.0
    %579 = vmatprep.subr.mxu0 0.0
    %580 = vmatpush1.msra.mxu0 0.0
    %581 = vmatprep.subr.mxu0 0.0
    %582 = vmatpush1.msra.mxu0 0.0
    %583 = vmatprep.subr.mxu0 0.0
    %584 = vmatpush1.msra.mxu0 0.0
    %585 = vmatprep.subr.mxu0 0.0
    %586 = vmatpush1.msra.mxu0 0.0
    %587 = vmatprep.subr.mxu0 0.0
    %588 = vmatpush1.msra.mxu0 0.0
    %589 = vmatprep.subr.mxu0 0.0
    %590 = vmatpush1.msra.mxu0 0.0
    %591 = vmatprep.subr.mxu0 0.0
    %592 = vmatpush1.msra.mxu0 0.0
    %593 = vmatprep.subr.mxu0 0.0
    %594 = vmatpush1.msra.mxu0 0.0
    %595 = vmatprep.subr.mxu0 0.0
    %596 = vmatpush1.msra.mxu0 0.0
    %597 = vmatprep.subr.mxu0 0.0
    %598 = vmatpush1.msra.mxu0 0.0
    %599 = vmatprep.subr.mxu0 0.0
    %600 = vmatpush1.msra.mxu0 0.0
    %601 = vmatprep.subr.mxu0 0.0
    %602 = vmatpush1.msra.mxu0 0.0
    %603 = vmatprep.subr.mxu0 0.0
    %604 = vmatpush1.msra.mxu0 0.0
    %605 = vmatprep.subr.mxu0 0.0
    %606 = vmatpush1.msra.mxu0 0.0
    %607 = vmatprep.subr.mxu0 0.0
    %608 = vmatpush1.msra.mxu0 0.0
    %609 = vmatprep.mubr.f32.mxu0 0.0
    %610 = vmatmul.mubr.f32.gmra.mrb[0].mxu0 %v534
    %v611 = vpop.f32.mrb[0].mxu0
    %v612 = vadd.f32 %v531, %v611
    %v613 = vpop.f32.mrb[0].mxu0
    %614 = vmatprep.mubr.f32.mxu0 0.0
    %615 = vmatmul.mubr.f32.gmra.mrb[0].mxu0 %v537
    %v616 = vpop.f32.mrb[0].mxu0
    %v617 = vadd.f32 %v531, %v616
    %v618 = vpop.f32.mrb[0].mxu0
    %619 = vmatprep.mubr.f32.mxu0 0.0
    %620 = vmatmul.mubr.f32.gmra.mrb[0].mxu0 %v540
    %v621 = vpop.f32.mrb[0].mxu0
    %v622 = vadd.f32 %v531, %v621
    %v623 = vpop.f32.mrb[0].mxu0
    %624 = vmatprep.mubr.f32.mxu0 0.0
    %625 = vmatmul.mubr.f32.gmra.mrb[0].mxu0 %v543
    %v626 = vpop.f32.mrb[0].mxu0
    %v627 = vadd.f32 %v531, %v626
    %v628 = vpop.f32.mrb[0].mxu0
    %629 = vdwg.mxu0
    %v630 = vmax.f32 %v612, 0.0
    %v631 = vmax.f32 %v617, 0.0
    %v632 = vmax.f32 %v622, 0.0
    %v633 = vmax.f32 %v627, 0.0
    %v634 = vld [vmem:[%s9] sm:$0xff]
    %v635 = vld [vmem:[%s9 + $0x8] sm:$0xff]
    %v636 = vld [vmem:[%s9 + $0x10] sm:$0xff]
    %v637 = vld [vmem:[%s9 + $0x18] sm:$0xff]
    %v638 = vld [vmem:[%s10] sm:$0x1]
    %v640 = vlaneseq
    %v641 = vshrl.u32 %v640, 7
    %v642 = vsub.s32 0, %v641
    %v643 = vrot.slane %v638, %v642
    %v646 = vsel %vm147, %v630, 0
    %v649 = vsel %vm147, %v631, 0
    %v652 = vsel %vm147, %v632, 0
    %v655 = vsel %vm147, %v633, 0
    %657 = vmatprep.subr.mxu0 0.0
    %658 = vmatpush1.msra.mxu0 %v634
    %659 = vmatprep.subr.mxu0 0.0
    %660 = vmatpush1.msra.mxu0 %v635
    %661 = vmatprep.subr.mxu0 0.0
    %662 = vmatpush1.msra.mxu0 %v636
    %663 = vmatprep.subr.mxu0 0.0
    %664 = vmatpush1.msra.mxu0 %v637
    %665 = vmatprep.subr.mxu0 0.0
    %666 = vmatpush1.msra.mxu0 0.0
    %667 = vmatprep.subr.mxu0 0.0
    %668 = vmatpush1.msra.mxu0 0.0
    %669 = vmatprep.subr.mxu0 0.0
    %670 = vmatpush1.msra.mxu0 0.0
    %671 = vmatprep.subr.mxu0 0.0
    %672 = vmatpush1.msra.mxu0 0.0
    %673 = vmatprep.subr.mxu0 0.0
    %674 = vmatpush1.msra.mxu0 0.0
    %675 = vmatprep.subr.mxu0 0.0
    %676 = vmatpush1.msra.mxu0 0.0
    %677 = vmatprep.subr.mxu0 0.0
    %678 = vmatpush1.msra.mxu0 0.0
    %679 = vmatprep.subr.mxu0 0.0
    %680 = vmatpush1.msra.mxu0 0.0
    %681 = vmatprep.subr.mxu0 0.0
    %682 = vmatpush1.msra.mxu0 0.0
    %683 = vmatprep.subr.mxu0 0.0
    %684 = vmatpush1.msra.mxu0 0.0
    %685 = vmatprep.subr.mxu0 0.0
    %686 = vmatpush1.msra.mxu0 0.0
    %687 = vmatprep.subr.mxu0 0.0
    %688 = vmatpush1.msra.mxu0 0.0
    %689 = vmatprep.subr.mxu0 0.0
    %690 = vmatpush1.msra.mxu0 0.0
    %691 = vmatprep.subr.mxu0 0.0
    %692 = vmatpush1.msra.mxu0 0.0
    %693 = vmatprep.subr.mxu0 0.0
    %694 = vmatpush1.msra.mxu0 0.0
    %695 = vmatprep.subr.mxu0 0.0
    %696 = vmatpush1.msra.mxu0 0.0
    %697 = vmatprep.subr.mxu0 0.0
    %698 = vmatpush1.msra.mxu0 0.0
    %699 = vmatprep.subr.mxu0 0.0
    %700 = vmatpush1.msra.mxu0 0.0
    %701 = vmatprep.subr.mxu0 0.0
    %702 = vmatpush1.msra.mxu0 0.0
    %703 = vmatprep.subr.mxu0 0.0
    %704 = vmatpush1.msra.mxu0 0.0
    %705 = vmatprep.subr.mxu0 0.0
    %706 = vmatpush1.msra.mxu0 0.0
    %707 = vmatprep.subr.mxu0 0.0
    %708 = vmatpush1.msra.mxu0 0.0
    %709 = vmatprep.subr.mxu0 0.0
    %710 = vmatpush1.msra.mxu0 0.0
    %711 = vmatprep.subr.mxu0 0.0
    %712 = vmatpush1.msra.mxu0 0.0
    %713 = vmatprep.subr.mxu0 0.0
    %714 = vmatpush1.msra.mxu0 0.0
    %715 = vmatprep.subr.mxu0 0.0
    %716 = vmatpush1.msra.mxu0 0.0
    %717 = vmatprep.subr.mxu0 0.0
    %718 = vmatpush1.msra.mxu0 0.0
    %719 = vmatprep.subr.mxu0 0.0
    %720 = vmatpush1.msra.mxu0 0.0
    %721 = vmatprep.mubr.f32.mxu0 0.0
    %722 = vmatmul.mubr.f32.gmra.mrb[0].mxu0 %v646
    %v723 = vpop.f32.mrb[0].mxu0
    %v724 = vadd.f32 %v643, %v723
    %v725 = vpop.f32.mrb[0].mxu0
    %726 = vmatprep.mubr.f32.mxu0 0.0
    %727 = vmatmul.mubr.f32.gmra.mrb[0].mxu0 %v649
    %v728 = vpop.f32.mrb[0].mxu0
    %v729 = vadd.f32 %v643, %v728
    %v730 = vpop.f32.mrb[0].mxu0
    %731 = vmatprep.mubr.f32.mxu0 0.0
    %732 = vmatmul.mubr.f32.gmra.mrb[0].mxu0 %v652
    %v733 = vpop.f32.mrb[0].mxu0
    %v734 = vadd.f32 %v643, %v733
    %v735 = vpop.f32.mrb[0].mxu0
    %736 = vmatprep.mubr.f32.mxu0 0.0
    %737 = vmatmul.mubr.f32.gmra.mrb[0].mxu0 %v655
    %v738 = vpop.f32.mrb[0].mxu0
    %v739 = vadd.f32 %v643, %v738
    %v740 = vpop.f32.mrb[0].mxu0
    %741 = vdwg.mxu0
    %v742 = vld [vmem:[%s11] sm:$0xff]
    %v743 = vld [vmem:[%s11 + $0x8] sm:$0xff]
    %v744 = vld [vmem:[%s12] sm:$0x1]
    %v746 = vlaneseq
    %v747 = vshrl.u32 %v746, 7
    %v748 = vsub.s32 0, %v747
    %v749 = vrot.slane %v744, %v748
    %v752 = vsel %vm142, 0.0, 0
    %754 = vmatprep.subr.mxu0 0.0
    %755 = vmatpush1.msra.mxu0 %v742
    %756 = vmatprep.subr.mxu0 0.0
    %757 = vmatpush1.msra.mxu0 %v743
    %758 = vmatprep.subr.mxu0 0.0
    %759 = vmatpush1.msra.mxu0 0.0
    %760 = vmatprep.subr.mxu0 0.0
    %761 = vmatpush1.msra.mxu0 0.0
    %762 = vmatprep.subr.mxu0 0.0
    %763 = vmatpush1.msra.mxu0 0.0
    %764 = vmatprep.subr.mxu0 0.0
    %765 = vmatpush1.msra.mxu0 0.0
    %766 = vmatprep.subr.mxu0 0.0
    %767 = vmatpush1.msra.mxu0 0.0
    %768 = vmatprep.subr.mxu0 0.0
    %769 = vmatpush1.msra.mxu0 0.0
    %770 = vmatprep.subr.mxu0 0.0
    %771 = vmatpush1.msra.mxu0 0.0
    %772 = vmatprep.subr.mxu0 0.0
    %773 = vmatpush1.msra.mxu0 0.0
    %774 = vmatprep.subr.mxu0 0.0
    %775 = vmatpush1.msra.mxu0 0.0
    %776 = vmatprep.subr.mxu0 0.0
    %777 = vmatpush1.msra.mxu0 0.0
    %778 = vmatprep.subr.mxu0 0.0
    %779 = vmatpush1.msra.mxu0 0.0
    %780 = vmatprep.subr.mxu0 0.0
    %781 = vmatpush1.msra.mxu0 0.0
    %782 = vmatprep.subr.mxu0 0.0
    %783 = vmatpush1.msra.mxu0 0.0
    %784 = vmatprep.subr.mxu0 0.0
    %785 = vmatpush1.msra.mxu0 0.0
    %786 = vmatprep.subr.mxu0 0.0
    %787 = vmatpush1.msra.mxu0 0.0
    %788 = vmatprep.subr.mxu0 0.0
    %789 = vmatpush1.msra.mxu0 0.0
    %790 = vmatprep.subr.mxu0 0.0
    %791 = vmatpush1.msra.mxu0 0.0
    %792 = vmatprep.subr.mxu0 0.0
    %793 = vmatpush1.msra.mxu0 0.0
    %794 = vmatprep.subr.mxu0 0.0
    %795 = vmatpush1.msra.mxu0 0.0
    %796 = vmatprep.subr.mxu0 0.0
    %797 = vmatpush1.msra.mxu0 0.0
    %798 = vmatprep.subr.mxu0 0.0
    %799 = vmatpush1.msra.mxu0 0.0
    %800 = vmatprep.subr.mxu0 0.0
    %801 = vmatpush1.msra.mxu0 0.0
    %802 = vmatprep.subr.mxu0 0.0
    %803 = vmatpush1.msra.mxu0 0.0
    %804 = vmatprep.subr.mxu0 0.0
    %805 = vmatpush1.msra.mxu0 0.0
    %806 = vmatprep.subr.mxu0 0.0
    %807 = vmatpush1.msra.mxu0 0.0
    %808 = vmatprep.subr.mxu0 0.0
    %809 = vmatpush1.msra.mxu0 0.0
    %810 = vmatprep.subr.mxu0 0.0
    %811 = vmatpush1.msra.mxu0 0.0
    %812 = vmatprep.subr.mxu0 0.0
    %813 = vmatpush1.msra.mxu0 0.0
    %814 = vmatprep.subr.mxu0 0.0
    %815 = vmatpush1.msra.mxu0 0.0
    %816 = vmatprep.subr.mxu0 0.0
    %817 = vmatpush1.msra.mxu0 0.0
    %818 = vmatprep.mubr.f32.mxu0 0.0
    %819 = vmatmul.mubr.f32.gmra.mrb[0].mxu0 %v752
    %v820 = vpop.f32.mrb[0].mxu0
    %v821 = vadd.f32 %v749, %v820
    %v822 = vpop.f32.mrb[0].mxu0
    %823 = vdwg.mxu0
    %v824 = vadd.f32 %v724, %v821
    %v825 = vxor.u32 %v824, 2147483648
    %v826 = vmul.f32 %v825, 1.442695
    %v827 = vpow.pop %v826
    %v828 = vadd.f32 %v827, 1.0
    %v829 = vrcp.pop %v828
    %v830 = vmul.f32 1.0, %v829
    %832 = vrot.lane.b32.xlu0 %v821, 96
    %v833 = vpop.permute.xlu0 %832
    %v835 = vmul.f32 %v830, %v833
    %837 = vrot.lane.b32.xlu0 %v835, 32
    %v838 = vpop.permute.xlu0 %837
    %v840 = vadd.f32 %v724, %v838
    %v841 = vtanh.pop %v840
    %v842 = vsub.f32 1.0, %v830
    %844 = vrot.lane.b32.xlu0 %v841, 112
    %v845 = vpop.permute.xlu0 %844
    %v847 = vmul.f32 %v842, %v845
    %v848 = vmul.f32 %v830, 0.0
    %v849 = vadd.f32 %v847, %v848
    %851 = vrot.lane.b32.xlu0 %v849, 112
    %v852 = vpop.permute.xlu0 %851
    %v853 = vsel %vm142, %v852, 0
    %855 = vmatprep.subr.mxu0 0.0
    %856 = vmatpush1.msra.mxu0 %v742
    %857 = vmatprep.subr.mxu0 0.0
    %858 = vmatpush1.msra.mxu0 %v743
    %859 = vmatprep.subr.mxu0 0.0
    %860 = vmatpush1.msra.mxu0 0.0
    %861 = vmatprep.subr.mxu0 0.0
    %862 = vmatpush1.msra.mxu0 0.0
    %863 = vmatprep.subr.mxu0 0.0
    %864 = vmatpush1.msra.mxu0 0.0
    %865 = vmatprep.subr.mxu0 0.0
    %866 = vmatpush1.msra.mxu0 0.0
    %867 = vmatprep.subr.mxu0 0.0
    %868 = vmatpush1.msra.mxu0 0.0
    %869 = vmatprep.subr.mxu0 0.0
    %870 = vmatpush1.msra.mxu0 0.0
    %871 = vmatprep.subr.mxu0 0.0
    %872 = vmatpush1.msra.mxu0 0.0
    %873 = vmatprep.subr.mxu0 0.0
    %874 = vmatpush1.msra.mxu0 0.0
    %875 = vmatprep.subr.mxu0 0.0
    %876 = vmatpush1.msra.mxu0 0.0
    %877 = vmatprep.subr.mxu0 0.0
    %878 = vmatpush1.msra.mxu0 0.0
    %879 = vmatprep.subr.mxu0 0.0
    %880 = vmatpush1.msra.mxu0 0.0
    %881 = vmatprep.subr.mxu0 0.0
    %882 = vmatpush1.msra.mxu0 0.0
    %883 = vmatprep.subr.mxu0 0.0
    %884 = vmatpush1.msra.mxu0 0.0
    %885 = vmatprep.subr.mxu0 0.0
    %886 = vmatpush1.msra.mxu0 0.0
    %887 = vmatprep.subr.mxu0 0.0
    %888 = vmatpush1.msra.mxu0 0.0
    %889 = vmatprep.subr.mxu0 0.0
    %890 = vmatpush1.msra.mxu0 0.0
    %891 = vmatprep.subr.mxu0 0.0
    %892 = vmatpush1.msra.mxu0 0.0
    %893 = vmatprep.subr.mxu0 0.0
    %894 = vmatpush1.msra.mxu0 0.0
    %895 = vmatprep.subr.mxu0 0.0
    %896 = vmatpush1.msra.mxu0 0.0
    %897 = vmatprep.subr.mxu0 0.0
    %898 = vmatpush1.msra.mxu0 0.0
    %899 = vmatprep.subr.mxu0 0.0
    %900 = vmatpush1.msra.mxu0 0.0
    %901 = vmatprep.subr.mxu0 0.0
    %902 = vmatpush1.msra.mxu0 0.0
    %903 = vmatprep.subr.mxu0 0.0
    %904 = vmatpush1.msra.mxu0 0.0
    %905 = vmatprep.subr.mxu0 0.0
    %906 = vmatpush1.msra.mxu0 0.0
    %907 = vmatprep.subr.mxu0 0.0
    %908 = vmatpush1.msra.mxu0 0.0
    %909 = vmatprep.subr.mxu0 0.0
    %910 = vmatpush1.msra.mxu0 0.0
    %911 = vmatprep.subr.mxu0 0.0
    %912 = vmatpush1.msra.mxu0 0.0
    %913 = vmatprep.subr.mxu0 0.0
    %914 = vmatpush1.msra.mxu0 0.0
    %915 = vmatprep.subr.mxu0 0.0
    %916 = vmatpush1.msra.mxu0 0.0
    %917 = vmatprep.subr.mxu0 0.0
    %918 = vmatpush1.msra.mxu0 0.0
    %919 = vmatprep.mubr.f32.mxu0 0.0
    %920 = vmatmul.mubr.f32.gmra.mrb[0].mxu0 %v853
    %v921 = vpop.f32.mrb[0].mxu0
    %v922 = vadd.f32 %v749, %v921
    %v923 = vpop.f32.mrb[0].mxu0
    %924 = vdwg.mxu0
    %v926 = vrot.slane %v922, 6
    %v928 = vadd.f32 %v724, %v926
    %v929 = vxor.u32 %v928, 2147483648
    %v930 = vmul.f32 %v929, 1.442695
    %v931 = vpow.pop %v930
    %v932 = vadd.f32 %v931, 1.0
    %v933 = vrcp.pop %v932
    %v934 = vmul.f32 1.0, %v933
    %935 = vrot.lane.b32.xlu0 %v926, 96
    %v936 = vpop.permute.xlu0 %935
    %v938 = vmul.f32 %v934, %v936
    %940 = vrot.lane.b32.xlu0 %v938, 32
    %v941 = vpop.permute.xlu0 %940
    %v943 = vadd.f32 %v724, %v941
    %v944 = vtanh.pop %v943
    %v945 = vsub.f32 1.0, %v934
    %947 = vrot.lane.b32.xlu0 %v944, 112
    %v948 = vpop.permute.xlu0 %947
    %v950 = vmul.f32 %v945, %v948
    %v951 = vrot.slane %v849, 6
    %v953 = vmul.f32 %v934, %v951
    %v954 = vadd.f32 %v950, %v953
    %v956 = vrot.slane %v954, 2
    %957 = vrot.lane.b32.xlu0 %v956, 112
    %v958 = vpop.permute.xlu0 %957
    %v959 = vsel %vm142, %v958, 0
    %961 = vmatprep.subr.mxu0 0.0
    %962 = vmatpush1.msra.mxu0 %v742
    %963 = vmatprep.subr.mxu0 0.0
    %964 = vmatpush1.msra.mxu0 %v743
    %965 = vmatprep.subr.mxu0 0.0
    %966 = vmatpush1.msra.mxu0 0.0
    %967 = vmatprep.subr.mxu0 0.0
    %968 = vmatpush1.msra.mxu0 0.0
    %969 = vmatprep.subr.mxu0 0.0
    %970 = vmatpush1.msra.mxu0 0.0
    %971 = vmatprep.subr.mxu0 0.0
    %972 = vmatpush1.msra.mxu0 0.0
    %973 = vmatprep.subr.mxu0 0.0
    %974 = vmatpush1.msra.mxu0 0.0
    %975 = vmatprep.subr.mxu0 0.0
    %976 = vmatpush1.msra.mxu0 0.0
    %977 = vmatprep.subr.mxu0 0.0
    %978 = vmatpush1.msra.mxu0 0.0
    %979 = vmatprep.subr.mxu0 0.0
    %980 = vmatpush1.msra.mxu0 0.0
    %981 = vmatprep.subr.mxu0 0.0
    %982 = vmatpush1.msra.mxu0 0.0
    %983 = vmatprep.subr.mxu0 0.0
    %984 = vmatpush1.msra.mxu0 0.0
    %985 = vmatprep.subr.mxu0 0.0
    %986 = vmatpush1.msra.mxu0 0.0
    %987 = vmatprep.subr.mxu0 0.0
    %988 = vmatpush1.msra.mxu0 0.0
    %989 = vmatprep.subr.mxu0 0.0
    %990 = vmatpush1.msra.mxu0 0.0
    %991 = vmatprep.subr.mxu0 0.0
    %992 = vmatpush1.msra.mxu0 0.0
    %993 = vmatprep.subr.mxu0 0.0
    %994 = vmatpush1.msra.mxu0 0.0
    %995 = vmatprep.subr.mxu0 0.0
    %996 = vmatpush1.msra.mxu0 0.0
    %997 = vmatprep.subr.mxu0 0.0
    %998 = vmatpush1.msra.mxu0 0.0
    %999 = vmatprep.subr.mxu0 0.0
    %1000 = vmatpush1.msra.mxu0 0.0
    %1001 = vmatprep.subr.mxu0 0.0
    %1002 = vmatpush1.msra.mxu0 0.0
    %1003 = vmatprep.subr.mxu0 0.0
    %1004 = vmatpush1.msra.mxu0 0.0
    %1005 = vmatprep.subr.mxu0 0.0
    %1006 = vmatpush1.msra.mxu0 0.0
    %1007 = vmatprep.subr.mxu0 0.0
    %1008 = vmatpush1.msra.mxu0 0.0
    %1009 = vmatprep.subr.mxu0 0.0
    %1010 = vmatpush1.msra.mxu0 0.0
    %1011 = vmatprep.subr.mxu0 0.0
    %1012 = vmatpush1.msra.mxu0 0.0
    %1013 = vmatprep.subr.mxu0 0.0
    %1014 = vmatpush1.msra.mxu0 0.0
    %1015 = vmatprep.subr.mxu0 0.0
    %1016 = vmatpush1.msra.mxu0 0.0
    %1017 = vmatprep.subr.mxu0 0.0
    %1018 = vmatpush1.msra.mxu0 0.0
    %1019 = vmatprep.subr.mxu0 0.0
    %1020 = vmatpush1.msra.mxu0 0.0
    %1021 = vmatprep.subr.mxu0 0.0
    %1022 = vmatpush1.msra.mxu0 0.0
    %1023 = vmatprep.subr.mxu0 0.0
    %1024 = vmatpush1.msra.mxu0 0.0
    %1025 = vmatprep.mubr.f32.mxu0 0.0
    %1026 = vmatmul.mubr.f32.gmra.mrb[0].mxu0 %v959
    %v1027 = vpop.f32.mrb[0].mxu0
    %v1028 = vadd.f32 %v749, %v1027
    %v1029 = vpop.f32.mrb[0].mxu0
    %1030 = vdwg.mxu0
    %v1032 = vrot.slane %v1028, 4
    %v1034 = vadd.f32 %v724, %v1032
    %v1035 = vxor.u32 %v1034, 2147483648
    %v1036 = vmul.f32 %v1035, 1.442695
    %v1037 = vpow.pop %v1036
    %v1038 = vadd.f32 %v1037, 1.0
    %v1039 = vrcp.pop %v1038
    %v1040 = vmul.f32 1.0, %v1039
    %1041 = vrot.lane.b32.xlu0 %v1032, 96
    %v1042 = vpop.permute.xlu0 %1041
    %v1044 = vmul.f32 %v1040, %v1042
    %1046 = vrot.lane.b32.xlu0 %v1044, 32
    %v1047 = vpop.permute.xlu0 %1046
    %v1049 = vadd.f32 %v724, %v1047
    %v1050 = vtanh.pop %v1049
    %v1051 = vsub.f32 1.0, %v1040
    %1053 = vrot.lane.b32.xlu0 %v1050, 112
    %v1054 = vpop.permute.xlu0 %1053
    %v1056 = vmul.f32 %v1051, %v1054
    %v1057 = vrot.slane %v954, 6
    %v1059 = vmul.f32 %v1040, %v1057
    %v1060 = vadd.f32 %v1056, %v1059
    %v1062 = vrot.slane %v1060, 4
    %1063 = vrot.lane.b32.xlu0 %v1062, 112
    %v1064 = vpop.permute.xlu0 %1063
    %v1065 = vsel %vm142, %v1064, 0
    %1067 = vmatprep.subr.mxu0 0.0
    %1068 = vmatpush1.msra.mxu0 %v742
    %1069 = vmatprep.subr.mxu0 0.0
    %1070 = vmatpush1.msra.mxu0 %v743
    %1071 = vmatprep.subr.mxu0 0.0
    %1072 = vmatpush1.msra.mxu0 0.0
    %1073 = vmatprep.subr.mxu0 0.0
    %1074 = vmatpush1.msra.mxu0 0.0
    %1075 = vmatprep.subr.mxu0 0.0
    %1076 = vmatpush1.msra.mxu0 0.0
    %1077 = vmatprep.subr.mxu0 0.0
    %1078 = vmatpush1.msra.mxu0 0.0
    %1079 = vmatprep.subr.mxu0 0.0
    %1080 = vmatpush1.msra.mxu0 0.0
    %1081 = vmatprep.subr.mxu0 0.0
    %1082 = vmatpush1.msra.mxu0 0.0
    %1083 = vmatprep.subr.mxu0 0.0
    %1084 = vmatpush1.msra.mxu0 0.0
    %1085 = vmatprep.subr.mxu0 0.0
    %1086 = vmatpush1.msra.mxu0 0.0
    %1087 = vmatprep.subr.mxu0 0.0
    %1088 = vmatpush1.msra.mxu0 0.0
    %1089 = vmatprep.subr.mxu0 0.0
    %1090 = vmatpush1.msra.mxu0 0.0
    %1091 = vmatprep.subr.mxu0 0.0
    %1092 = vmatpush1.msra.mxu0 0.0
    %1093 = vmatprep.subr.mxu0 0.0
    %1094 = vmatpush1.msra.mxu0 0.0
    %1095 = vmatprep.subr.mxu0 0.0
    %1096 = vmatpush1.msra.mxu0 0.0
    %1097 = vmatprep.subr.mxu0 0.0
    %1098 = vmatpush1.msra.mxu0 0.0
    %1099 = vmatprep.subr.mxu0 0.0
    %1100 = vmatpush1.msra.mxu0 0.0
    %1101 = vmatprep.subr.mxu0 0.0
    %1102 = vmatpush1.msra.mxu0 0.0
    %1103 = vmatprep.subr.mxu0 0.0
    %1104 = vmatpush1.msra.mxu0 0.0
    %1105 = vmatprep.subr.mxu0 0.0
    %1106 = vmatpush1.msra.mxu0 0.0
    %1107 = vmatprep.subr.mxu0 0.0
    %1108 = vmatpush1.msra.mxu0 0.0
    %1109 = vmatprep.subr.mxu0 0.0
    %1110 = vmatpush1.msra.mxu0 0.0
    %1111 = vmatprep.subr.mxu0 0.0
    %1112 = vmatpush1.msra.mxu0 0.0
    %1113 = vmatprep.subr.mxu0 0.0
    %1114 = vmatpush1.msra.mxu0 0.0
    %1115 = vmatprep.subr.mxu0 0.0
    %1116 = vmatpush1.msra.mxu0 0.0
    %1117 = vmatprep.subr.mxu0 0.0
    %1118 = vmatpush1.msra.mxu0 0.0
    %1119 = vmatprep.subr.mxu0 0.0
    %1120 = vmatpush1.msra.mxu0 0.0
    %1121 = vmatprep.subr.mxu0 0.0
    %1122 = vmatpush1.msra.mxu0 0.0
    %1123 = vmatprep.subr.mxu0 0.0
    %1124 = vmatpush1.msra.mxu0 0.0
    %1125 = vmatprep.subr.mxu0 0.0
    %1126 = vmatpush1.msra.mxu0 0.0
    %1127 = vmatprep.subr.mxu0 0.0
    %1128 = vmatpush1.msra.mxu0 0.0
    %1129 = vmatprep.subr.mxu0 0.0
    %1130 = vmatpush1.msra.mxu0 0.0
    %1131 = vmatprep.mubr.f32.mxu0 0.0
    %1132 = vmatmul.mubr.f32.gmra.mrb[0].mxu0 %v1065
    %v1133 = vpop.f32.mrb[0].mxu0
    %v1134 = vadd.f32 %v749, %v1133
    %v1135 = vpop.f32.mrb[0].mxu0
    %1136 = vdwg.mxu0
    %v1138 = vrot.slane %v1134, 2
    %v1140 = vadd.f32 %v724, %v1138
    %v1141 = vxor.u32 %v1140, 2147483648
    %v1142 = vmul.f32 %v1141, 1.442695
    %v1143 = vpow.pop %v1142
    %v1144 = vadd.f32 %v1143, 1.0
    %v1145 = vrcp.pop %v1144
    %v1146 = vmul.f32 1.0, %v1145
    %1147 = vrot.lane.b32.xlu0 %v1138, 96
    %v1148 = vpop.permute.xlu0 %1147
    %v1150 = vmul.f32 %v1146, %v1148
    %1152 = vrot.lane.b32.xlu0 %v1150, 32
    %v1153 = vpop.permute.xlu0 %1152
    %v1155 = vadd.f32 %v724, %v1153
    %v1156 = vtanh.pop %v1155
    %v1157 = vsub.f32 1.0, %v1146
    %1159 = vrot.lane.b32.xlu0 %v1156, 112
    %v1160 = vpop.permute.xlu0 %1159
    %v1162 = vmul.f32 %v1157, %v1160
    %v1163 = vrot.slane %v1060, 6
    %v1165 = vmul.f32 %v1146, %v1163
    %v1166 = vadd.f32 %v1162, %v1165
    %v1168 = vrot.slane %v1166, 6
    %1169 = vrot.lane.b32.xlu0 %v1168, 112
    %v1170 = vpop.permute.xlu0 %1169
    %v1171 = vsel %vm142, %v1170, 0
    %1173 = vmatprep.subr.mxu0 0.0
    %1174 = vmatpush1.msra.mxu0 %v742
    %1175 = vmatprep.subr.mxu0 0.0
    %1176 = vmatpush1.msra.mxu0 %v743
    %1177 = vmatprep.subr.mxu0 0.0
    %1178 = vmatpush1.msra.mxu0 0.0
    %1179 = vmatprep.subr.mxu0 0.0
    %1180 = vmatpush1.msra.mxu0 0.0
    %1181 = vmatprep.subr.mxu0 0.0
    %1182 = vmatpush1.msra.mxu0 0.0
    %1183 = vmatprep.subr.mxu0 0.0
    %1184 = vmatpush1.msra.mxu0 0.0
    %1185 = vmatprep.subr.mxu0 0.0
    %1186 = vmatpush1.msra.mxu0 0.0
    %1187 = vmatprep.subr.mxu0 0.0
    %1188 = vmatpush1.msra.mxu0 0.0
    %1189 = vmatprep.subr.mxu0 0.0
    %1190 = vmatpush1.msra.mxu0 0.0
    %1191 = vmatprep.subr.mxu0 0.0
    %1192 = vmatpush1.msra.mxu0 0.0
    %1193 = vmatprep.subr.mxu0 0.0
    %1194 = vmatpush1.msra.mxu0 0.0
    %1195 = vmatprep.subr.mxu0 0.0
    %1196 = vmatpush1.msra.mxu0 0.0
    %1197 = vmatprep.subr.mxu0 0.0
    %1198 = vmatpush1.msra.mxu0 0.0
    %1199 = vmatprep.subr.mxu0 0.0
    %1200 = vmatpush1.msra.mxu0 0.0
    %1201 = vmatprep.subr.mxu0 0.0
    %1202 = vmatpush1.msra.mxu0 0.0
    %1203 = vmatprep.subr.mxu0 0.0
    %1204 = vmatpush1.msra.mxu0 0.0
    %1205 = vmatprep.subr.mxu0 0.0
    %1206 = vmatpush1.msra.mxu0 0.0
    %1207 = vmatprep.subr.mxu0 0.0
    %1208 = vmatpush1.msra.mxu0 0.0
    %1209 = vmatprep.subr.mxu0 0.0
    %1210 = vmatpush1.msra.mxu0 0.0
    %1211 = vmatprep.subr.mxu0 0.0
    %1212 = vmatpush1.msra.mxu0 0.0
    %1213 = vmatprep.subr.mxu0 0.0
    %1214 = vmatpush1.msra.mxu0 0.0
    %1215 = vmatprep.subr.mxu0 0.0
    %1216 = vmatpush1.msra.mxu0 0.0
    %1217 = vmatprep.subr.mxu0 0.0
    %1218 = vmatpush1.msra.mxu0 0.0
    %1219 = vmatprep.subr.mxu0 0.0
    %1220 = vmatpush1.msra.mxu0 0.0
    %1221 = vmatprep.subr.mxu0 0.0
    %1222 = vmatpush1.msra.mxu0 0.0
    %1223 = vmatprep.subr.mxu0 0.0
    %1224 = vmatpush1.msra.mxu0 0.0
    %1225 = vmatprep.subr.mxu0 0.0
    %1226 = vmatpush1.msra.mxu0 0.0
    %1227 = vmatprep.subr.mxu0 0.0
    %1228 = vmatpush1.msra.mxu0 0.0
    %1229 = vmatprep.subr.mxu0 0.0
    %1230 = vmatpush1.msra.mxu0 0.0
    %1231 = vmatprep.subr.mxu0 0.0
    %1232 = vmatpush1.msra.mxu0 0.0
    %1233 = vmatprep.subr.mxu0 0.0
    %1234 = vmatpush1.msra.mxu0 0.0
    %1235 = vmatprep.subr.mxu0 0.0
    %1236 = vmatpush1.msra.mxu0 0.0
    %1237 = vmatprep.mubr.f32.mxu0 0.0
    %1238 = vmatmul.mubr.f32.gmra.mrb[0].mxu0 %v1171
    %v1239 = vpop.f32.mrb[0].mxu0
    %v1240 = vadd.f32 %v749, %v1239
    %v1241 = vpop.f32.mrb[0].mxu0
    %1242 = vdwg.mxu0
    %v1243 = vadd.f32 %v729, %v1240
    %v1244 = vxor.u32 %v1243, 2147483648
    %v1245 = vmul.f32 %v1244, 1.442695
    %v1246 = vpow.pop %v1245
    %v1247 = vadd.f32 %v1246, 1.0
    %v1248 = vrcp.pop %v1247
    %v1249 = vmul.f32 1.0, %v1248
    %1251 = vrot.lane.b32.xlu0 %v1240, 96
    %v1252 = vpop.permute.xlu0 %1251
    %v1254 = vmul.f32 %v1249, %v1252
    %1256 = vrot.lane.b32.xlu0 %v1254, 32
    %v1257 = vpop.permute.xlu0 %1256
    %v1259 = vadd.f32 %v729, %v1257
    %v1260 = vtanh.pop %v1259
    %v1261 = vsub.f32 1.0, %v1249
    %1263 = vrot.lane.b32.xlu0 %v1260, 112
    %v1264 = vpop.permute.xlu0 %1263
    %v1266 = vmul.f32 %v1261, %v1264
    %v1268 = vmul.f32 %v1249, %v1168
    %v1269 = vadd.f32 %v1266, %v1268
    %1271 = vrot.lane.b32.xlu0 %v1269, 112
    %v1272 = vpop.permute.xlu0 %1271
    %v1273 = vsel %vm142, %v1272, 0
    %1275 = vmatprep.subr.mxu0 0.0
    %1276 = vmatpush1.msra.mxu0 %v742
    %1277 = vmatprep.subr.mxu0 0.0
    %1278 = vmatpush1.msra.mxu0 %v743
    %1279 = vmatprep.subr.mxu0 0.0
    %1280 = vmatpush1.msra.mxu0 0.0
    %1281 = vmatprep.subr.mxu0 0.0
    %1282 = vmatpush1.msra.mxu0 0.0
    %1283 = vmatprep.subr.mxu0 0.0
    %1284 = vmatpush1.msra.mxu0 0.0
    %1285 = vmatprep.subr.mxu0 0.0
    %1286 = vmatpush1.msra.mxu0 0.0
    %1287 = vmatprep.subr.mxu0 0.0
    %1288 = vmatpush1.msra.mxu0 0.0
    %1289 = vmatprep.subr.mxu0 0.0
    %1290 = vmatpush1.msra.mxu0 0.0
    %1291 = vmatprep.subr.mxu0 0.0
    %1292 = vmatpush1.msra.mxu0 0.0
    %1293 = vmatprep.subr.mxu0 0.0
    %1294 = vmatpush1.msra.mxu0 0.0
    %1295 = vmatprep.subr.mxu0 0.0
    %1296 = vmatpush1.msra.mxu0 0.0
    %1297 = vmatprep.subr.mxu0 0.0
    %1298 = vmatpush1.msra.mxu0 0.0
    %1299 = vmatprep.subr.mxu0 0.0
    %1300 = vmatpush1.msra.mxu0 0.0
    %1301 = vmatprep.subr.mxu0 0.0
    %1302 = vmatpush1.msra.mxu0 0.0
    %1303 = vmatprep.subr.mxu0 0.0
    %1304 = vmatpush1.msra.mxu0 0.0
    %1305 = vmatprep.subr.mxu0 0.0
    %1306 = vmatpush1.msra.mxu0 0.0
    %1307 = vmatprep.subr.mxu0 0.0
    %1308 = vmatpush1.msra.mxu0 0.0
    %1309 = vmatprep.subr.mxu0 0.0
    %1310 = vmatpush1.msra.mxu0 0.0
    %1311 = vmatprep.subr.mxu0 0.0
    %1312 = vmatpush1.msra.mxu0 0.0
    %1313 = vmatprep.subr.mxu0 0.0
    %1314 = vmatpush1.msra.mxu0 0.0
    %1315 = vmatprep.subr.mxu0 0.0
    %1316 = vmatpush1.msra.mxu0 0.0
    %1317 = vmatprep.subr.mxu0 0.0
    %1318 = vmatpush1.msra.mxu0 0.0
    %1319 = vmatprep.subr.mxu0 0.0
    %1320 = vmatpush1.msra.mxu0 0.0
    %1321 = vmatprep.subr.mxu0 0.0
    %1322 = vmatpush1.msra.mxu0 0.0
    %1323 = vmatprep.subr.mxu0 0.0
    %1324 = vmatpush1.msra.mxu0 0.0
    %1325 = vmatprep.subr.mxu0 0.0
    %1326 = vmatpush1.msra.mxu0 0.0
    %1327 = vmatprep.subr.mxu0 0.0
    %1328 = vmatpush1.msra.mxu0 0.0
    %1329 = vmatprep.subr.mxu0 0.0
    %1330 = vmatpush1.msra.mxu0 0.0
    %1331 = vmatprep.subr.mxu0 0.0
    %1332 = vmatpush1.msra.mxu0 0.0
    %1333 = vmatprep.subr.mxu0 0.0
    %1334 = vmatpush1.msra.mxu0 0.0
    %1335 = vmatprep.subr.mxu0 0.0
    %1336 = vmatpush1.msra.mxu0 0.0
    %1337 = vmatprep.subr.mxu0 0.0
    %1338 = vmatpush1.msra.mxu0 0.0
    %1339 = vmatprep.mubr.f32.mxu0 0.0
    %1340 = vmatmul.mubr.f32.gmra.mrb[0].mxu0 %v1273
    %v1341 = vpop.f32.mrb[0].mxu0
    %v1342 = vadd.f32 %v749, %v1341
    %v1343 = vpop.f32.mrb[0].mxu0
    %1344 = vdwg.mxu0
    %v1346 = vrot.slane %v1342, 6
    %v1348 = vadd.f32 %v729, %v1346
    %v1349 = vxor.u32 %v1348, 2147483648
    %v1350 = vmul.f32 %v1349, 1.442695
    %v1351 = vpow.pop %v1350
    %v1352 = vadd.f32 %v1351, 1.0
    %v1353 = vrcp.pop %v1352
    %v1354 = vmul.f32 1.0, %v1353
    %1355 = vrot.lane.b32.xlu0 %v1346, 96
    %v1356 = vpop.permute.xlu0 %1355
    %v1358 = vmul.f32 %v1354, %v1356
    %1360 = vrot.lane.b32.xlu0 %v1358, 32
    %v1361 = vpop.permute.xlu0 %1360
    %v1363 = vadd.f32 %v729, %v1361
    %v1364 = vtanh.pop %v1363
    %v1365 = vsub.f32 1.0, %v1354
    %1367 = vrot.lane.b32.xlu0 %v1364, 112
    %v1368 = vpop.permute.xlu0 %1367
    %v1370 = vmul.f32 %v1365, %v1368
    %v1371 = vrot.slane %v1269, 6
    %v1373 = vmul.f32 %v1354, %v1371
    %v1374 = vadd.f32 %v1370, %v1373
    %v1376 = vrot.slane %v1374, 2
    %1377 = vrot.lane.b32.xlu0 %v1376, 112
    %v1378 = vpop.permute.xlu0 %1377
    %v1379 = vsel %vm142, %v1378, 0
    %1381 = vmatprep.subr.mxu0 0.0
    %1382 = vmatpush1.msra.mxu0 %v742
    %1383 = vmatprep.subr.mxu0 0.0
    %1384 = vmatpush1.msra.mxu0 %v743
    %1385 = vmatprep.subr.mxu0 0.0
    %1386 = vmatpush1.msra.mxu0 0.0
    %1387 = vmatprep.subr.mxu0 0.0
    %1388 = vmatpush1.msra.mxu0 0.0
    %1389 = vmatprep.subr.mxu0 0.0
    %1390 = vmatpush1.msra.mxu0 0.0
    %1391 = vmatprep.subr.mxu0 0.0
    %1392 = vmatpush1.msra.mxu0 0.0
    %1393 = vmatprep.subr.mxu0 0.0
    %1394 = vmatpush1.msra.mxu0 0.0
    %1395 = vmatprep.subr.mxu0 0.0
    %1396 = vmatpush1.msra.mxu0 0.0
    %1397 = vmatprep.subr.mxu0 0.0
    %1398 = vmatpush1.msra.mxu0 0.0
    %1399 = vmatprep.subr.mxu0 0.0
    %1400 = vmatpush1.msra.mxu0 0.0
    %1401 = vmatprep.subr.mxu0 0.0
    %1402 = vmatpush1.msra.mxu0 0.0
    %1403 = vmatprep.subr.mxu0 0.0
    %1404 = vmatpush1.msra.mxu0 0.0
    %1405 = vmatprep.subr.mxu0 0.0
    %1406 = vmatpush1.msra.mxu0 0.0
    %1407 = vmatprep.subr.mxu0 0.0
    %1408 = vmatpush1.msra.mxu0 0.0
    %1409 = vmatprep.subr.mxu0 0.0
    %1410 = vmatpush1.msra.mxu0 0.0
    %1411 = vmatprep.subr.mxu0 0.0
    %1412 = vmatpush1.msra.mxu0 0.0
    %1413 = vmatprep.subr.mxu0 0.0
    %1414 = vmatpush1.msra.mxu0 0.0
    %1415 = vmatprep.subr.mxu0 0.0
    %1416 = vmatpush1.msra.mxu0 0.0
    %1417 = vmatprep.subr.mxu0 0.0
    %1418 = vmatpush1.msra.mxu0 0.0
    %1419 = vmatprep.subr.mxu0 0.0
    %1420 = vmatpush1.msra.mxu0 0.0
    %1421 = vmatprep.subr.mxu0 0.0
    %1422 = vmatpush1.msra.mxu0 0.0
    %1423 = vmatprep.subr.mxu0 0.0
    %1424 = vmatpush1.msra.mxu0 0.0
    %1425 = vmatprep.subr.mxu0 0.0
    %1426 = vmatpush1.msra.mxu0 0.0
    %1427 = vmatprep.subr.mxu0 0.0
    %1428 = vmatpush1.msra.mxu0 0.0
    %1429 = vmatprep.subr.mxu0 0.0
    %1430 = vmatpush1.msra.mxu0 0.0
    %1431 = vmatprep.subr.mxu0 0.0
    %1432 = vmatpush1.msra.mxu0 0.0
    %1433 = vmatprep.subr.mxu0 0.0
    %1434 = vmatpush1.msra.mxu0 0.0
    %1435 = vmatprep.subr.mxu0 0.0
    %1436 = vmatpush1.msra.mxu0 0.0
    %1437 = vmatprep.subr.mxu0 0.0
    %1438 = vmatpush1.msra.mxu0 0.0
    %1439 = vmatprep.subr.mxu0 0.0
    %1440 = vmatpush1.msra.mxu0 0.0
    %1441 = vmatprep.subr.mxu0 0.0
    %1442 = vmatpush1.msra.mxu0 0.0
    %1443 = vmatprep.subr.mxu0 0.0
    %1444 = vmatpush1.msra.mxu0 0.0
    %1445 = vmatprep.mubr.f32.mxu0 0.0
    %1446 = vmatmul.mubr.f32.gmra.mrb[0].mxu0 %v1379
    %v1447 = vpop.f32.mrb[0].mxu0
    %v1448 = vadd.f32 %v749, %v1447
    %v1449 = vpop.f32.mrb[0].mxu0
    %1450 = vdwg.mxu0
    %v1452 = vrot.slane %v1448, 4
    %v1454 = vadd.f32 %v729, %v1452
    %v1455 = vxor.u32 %v1454, 2147483648
    %v1456 = vmul.f32 %v1455, 1.442695
    %v1457 = vpow.pop %v1456
    %v1458 = vadd.f32 %v1457, 1.0
    %v1459 = vrcp.pop %v1458
    %v1460 = vmul.f32 1.0, %v1459
    %1461 = vrot.lane.b32.xlu0 %v1452, 96
    %v1462 = vpop.permute.xlu0 %1461
    %v1464 = vmul.f32 %v1460, %v1462
    %1466 = vrot.lane.b32.xlu0 %v1464, 32
    %v1467 = vpop.permute.xlu0 %1466
    %v1469 = vadd.f32 %v729, %v1467
    %v1470 = vtanh.pop %v1469
    %v1471 = vsub.f32 1.0, %v1460
    %1473 = vrot.lane.b32.xlu0 %v1470, 112
    %v1474 = vpop.permute.xlu0 %1473
    %v1476 = vmul.f32 %v1471, %v1474
    %v1477 = vrot.slane %v1374, 6
    %v1479 = vmul.f32 %v1460, %v1477
    %v1480 = vadd.f32 %v1476, %v1479
    %v1482 = vrot.slane %v1480, 4
    %1483 = vrot.lane.b32.xlu0 %v1482, 112
    %v1484 = vpop.permute.xlu0 %1483
    %v1485 = vsel %vm142, %v1484, 0
    %1487 = vmatprep.subr.mxu0 0.0
    %1488 = vmatpush1.msra.mxu0 %v742
    %1489 = vmatprep.subr.mxu0 0.0
    %1490 = vmatpush1.msra.mxu0 %v743
    %1491 = vmatprep.subr.mxu0 0.0
    %1492 = vmatpush1.msra.mxu0 0.0
    %1493 = vmatprep.subr.mxu0 0.0
    %1494 = vmatpush1.msra.mxu0 0.0
    %1495 = vmatprep.subr.mxu0 0.0
    %1496 = vmatpush1.msra.mxu0 0.0
    %1497 = vmatprep.subr.mxu0 0.0
    %1498 = vmatpush1.msra.mxu0 0.0
    %1499 = vmatprep.subr.mxu0 0.0
    %1500 = vmatpush1.msra.mxu0 0.0
    %1501 = vmatprep.subr.mxu0 0.0
    %1502 = vmatpush1.msra.mxu0 0.0
    %1503 = vmatprep.subr.mxu0 0.0
    %1504 = vmatpush1.msra.mxu0 0.0
    %1505 = vmatprep.subr.mxu0 0.0
    %1506 = vmatpush1.msra.mxu0 0.0
    %1507 = vmatprep.subr.mxu0 0.0
    %1508 = vmatpush1.msra.mxu0 0.0
    %1509 = vmatprep.subr.mxu0 0.0
    %1510 = vmatpush1.msra.mxu0 0.0
    %1511 = vmatprep.subr.mxu0 0.0
    %1512 = vmatpush1.msra.mxu0 0.0
    %1513 = vmatprep.subr.mxu0 0.0
    %1514 = vmatpush1.msra.mxu0 0.0
    %1515 = vmatprep.subr.mxu0 0.0
    %1516 = vmatpush1.msra.mxu0 0.0
    %1517 = vmatprep.subr.mxu0 0.0
    %1518 = vmatpush1.msra.mxu0 0.0
    %1519 = vmatprep.subr.mxu0 0.0
    %1520 = vmatpush1.msra.mxu0 0.0
    %1521 = vmatprep.subr.mxu0 0.0
    %1522 = vmatpush1.msra.mxu0 0.0
    %1523 = vmatprep.subr.mxu0 0.0
    %1524 = vmatpush1.msra.mxu0 0.0
    %1525 = vmatprep.subr.mxu0 0.0
    %1526 = vmatpush1.msra.mxu0 0.0
    %1527 = vmatprep.subr.mxu0 0.0
    %1528 = vmatpush1.msra.mxu0 0.0
    %1529 = vmatprep.subr.mxu0 0.0
    %1530 = vmatpush1.msra.mxu0 0.0
    %1531 = vmatprep.subr.mxu0 0.0
    %1532 = vmatpush1.msra.mxu0 0.0
    %1533 = vmatprep.subr.mxu0 0.0
    %1534 = vmatpush1.msra.mxu0 0.0
    %1535 = vmatprep.subr.mxu0 0.0
    %1536 = vmatpush1.msra.mxu0 0.0
    %1537 = vmatprep.subr.mxu0 0.0
    %1538 = vmatpush1.msra.mxu0 0.0
    %1539 = vmatprep.subr.mxu0 0.0
    %1540 = vmatpush1.msra.mxu0 0.0
    %1541 = vmatprep.subr.mxu0 0.0
    %1542 = vmatpush1.msra.mxu0 0.0
    %1543 = vmatprep.subr.mxu0 0.0
    %1544 = vmatpush1.msra.mxu0 0.0
    %1545 = vmatprep.subr.mxu0 0.0
    %1546 = vmatpush1.msra.mxu0 0.0
    %1547 = vmatprep.subr.mxu0 0.0
    %1548 = vmatpush1.msra.mxu0 0.0
    %1549 = vmatprep.subr.mxu0 0.0
    %1550 = vmatpush1.msra.mxu0 0.0
    %1551 = vmatprep.mubr.f32.mxu0 0.0
    %1552 = vmatmul.mubr.f32.gmra.mrb[0].mxu0 %v1485
    %v1553 = vpop.f32.mrb[0].mxu0
    %v1554 = vadd.f32 %v749, %v1553
    %v1555 = vpop.f32.mrb[0].mxu0
    %1556 = vdwg.mxu0
    %v1558 = vrot.slane %v1554, 2
    %v1560 = vadd.f32 %v729, %v1558
    %v1561 = vxor.u32 %v1560, 2147483648
    %v1562 = vmul.f32 %v1561, 1.442695
    %v1563 = vpow.pop %v1562
    %v1564 = vadd.f32 %v1563, 1.0
    %v1565 = vrcp.pop %v1564
    %v1566 = vmul.f32 1.0, %v1565
    %1567 = vrot.lane.b32.xlu0 %v1558, 96
    %v1568 = vpop.permute.xlu0 %1567
    %v1570 = vmul.f32 %v1566, %v1568
    %1572 = vrot.lane.b32.xlu0 %v1570, 32
    %v1573 = vpop.permute.xlu0 %1572
    %v1575 = vadd.f32 %v729, %v1573
    %v1576 = vtanh.pop %v1575
    %v1577 = vsub.f32 1.0, %v1566
    %1579 = vrot.lane.b32.xlu0 %v1576, 112
    %v1580 = vpop.permute.xlu0 %1579
    %v1582 = vmul.f32 %v1577, %v1580
    %v1583 = vrot.slane %v1480, 6
    %v1585 = vmul.f32 %v1566, %v1583
    %v1586 = vadd.f32 %v1582, %v1585
    %v1588 = vrot.slane %v1586, 6
    %1589 = vrot.lane.b32.xlu0 %v1588, 112
    %v1590 = vpop.permute.xlu0 %1589
    %v1591 = vsel %vm142, %v1590, 0
    %1593 = vmatprep.subr.mxu0 0.0
    %1594 = vmatpush1.msra.mxu0 %v742
    %1595 = vmatprep.subr.mxu0 0.0
    %1596 = vmatpush1.msra.mxu0 %v743
    %1597 = vmatprep.subr.mxu0 0.0
    %1598 = vmatpush1.msra.mxu0 0.0
    %1599 = vmatprep.subr.mxu0 0.0
    %1600 = vmatpush1.msra.mxu0 0.0
    %1601 = vmatprep.subr.mxu0 0.0
    %1602 = vmatpush1.msra.mxu0 0.0
    %1603 = vmatprep.subr.mxu0 0.0
    %1604 = vmatpush1.msra.mxu0 0.0
    %1605 = vmatprep.subr.mxu0 0.0
    %1606 = vmatpush1.msra.mxu0 0.0
    %1607 = vmatprep.subr.mxu0 0.0
    %1608 = vmatpush1.msra.mxu0 0.0
    %1609 = vmatprep.subr.mxu0 0.0
    %1610 = vmatpush1.msra.mxu0 0.0
    %1611 = vmatprep.subr.mxu0 0.0
    %1612 = vmatpush1.msra.mxu0 0.0
    %1613 = vmatprep.subr.mxu0 0.0
    %1614 = vmatpush1.msra.mxu0 0.0
    %1615 = vmatprep.subr.mxu0 0.0
    %1616 = vmatpush1.msra.mxu0 0.0
    %1617 = vmatprep.subr.mxu0 0.0
    %1618 = vmatpush1.msra.mxu0 0.0
    %1619 = vmatprep.subr.mxu0 0.0
    %1620 = vmatpush1.msra.mxu0 0.0
    %1621 = vmatprep.subr.mxu0 0.0
    %1622 = vmatpush1.msra.mxu0 0.0
    %1623 = vmatprep.subr.mxu0 0.0
    %1624 = vmatpush1.msra.mxu0 0.0
    %1625 = vmatprep.subr.mxu0 0.0
    %1626 = vmatpush1.msra.mxu0 0.0
    %1627 = vmatprep.subr.mxu0 0.0
    %1628 = vmatpush1.msra.mxu0 0.0
    %1629 = vmatprep.subr.mxu0 0.0
    %1630 = vmatpush1.msra.mxu0 0.0
    %1631 = vmatprep.subr.mxu0 0.0
    %1632 = vmatpush1.msra.mxu0 0.0
    %1633 = vmatprep.subr.mxu0 0.0
    %1634 = vmatpush1.msra.mxu0 0.0
    %1635 = vmatprep.subr.mxu0 0.0
    %1636 = vmatpush1.msra.mxu0 0.0
    %1637 = vmatprep.subr.mxu0 0.0
    %1638 = vmatpush1.msra.mxu0 0.0
    %1639 = vmatprep.subr.mxu0 0.0
    %1640 = vmatpush1.msra.mxu0 0.0
    %1641 = vmatprep.subr.mxu0 0.0
    %1642 = vmatpush1.msra.mxu0 0.0
    %1643 = vmatprep.subr.mxu0 0.0
    %1644 = vmatpush1.msra.mxu0 0.0
    %1645 = vmatprep.subr.mxu0 0.0
    %1646 = vmatpush1.msra.mxu0 0.0
    %1647 = vmatprep.subr.mxu0 0.0
    %1648 = vmatpush1.msra.mxu0 0.0
    %1649 = vmatprep.subr.mxu0 0.0
    %1650 = vmatpush1.msra.mxu0 0.0
    %1651 = vmatprep.subr.mxu0 0.0
    %1652 = vmatpush1.msra.mxu0 0.0
    %1653 = vmatprep.subr.mxu0 0.0
    %1654 = vmatpush1.msra.mxu0 0.0
    %1655 = vmatprep.subr.mxu0 0.0
    %1656 = vmatpush1.msra.mxu0 0.0
    %1657 = vmatprep.mubr.f32.mxu0 0.0
    %1658 = vmatmul.mubr.f32.gmra.mrb[0].mxu0 %v1591
    %v1659 = vpop.f32.mrb[0].mxu0
    %v1660 = vadd.f32 %v749, %v1659
    %v1661 = vpop.f32.mrb[0].mxu0
    %1662 = vdwg.mxu0
    %v1663 = vadd.f32 %v734, %v1660
    %v1664 = vxor.u32 %v1663, 2147483648
    %v1665 = vmul.f32 %v1664, 1.442695
    %v1666 = vpow.pop %v1665
    %v1667 = vadd.f32 %v1666, 1.0
    %v1668 = vrcp.pop %v1667
    %v1669 = vmul.f32 1.0, %v1668
    %1671 = vrot.lane.b32.xlu0 %v1660, 96
    %v1672 = vpop.permute.xlu0 %1671
    %v1674 = vmul.f32 %v1669, %v1672
    %1676 = vrot.lane.b32.xlu0 %v1674, 32
    %v1677 = vpop.permute.xlu0 %1676
    %v1679 = vadd.f32 %v734, %v1677
    %v1680 = vtanh.pop %v1679
    %v1681 = vsub.f32 1.0, %v1669
    %1683 = vrot.lane.b32.xlu0 %v1680, 112
    %v1684 = vpop.permute.xlu0 %1683
    %v1686 = vmul.f32 %v1681, %v1684
    %v1688 = vmul.f32 %v1669, %v1588
    %v1689 = vadd.f32 %v1686, %v1688
    %1691 = vrot.lane.b32.xlu0 %v1689, 112
    %v1692 = vpop.permute.xlu0 %1691
    %v1693 = vsel %vm142, %v1692, 0
    %1695 = vmatprep.subr.mxu0 0.0
    %1696 = vmatpush1.msra.mxu0 %v742
    %1697 = vmatprep.subr.mxu0 0.0
    %1698 = vmatpush1.msra.mxu0 %v743
    %1699 = vmatprep.subr.mxu0 0.0
    %1700 = vmatpush1.msra.mxu0 0.0
    %1701 = vmatprep.subr.mxu0 0.0
    %1702 = vmatpush1.msra.mxu0 0.0
    %1703 = vmatprep.subr.mxu0 0.0
    %1704 = vmatpush1.msra.mxu0 0.0
    %1705 = vmatprep.subr.mxu0 0.0
    %1706 = vmatpush1.msra.mxu0 0.0
    %1707 = vmatprep.subr.mxu0 0.0
    %1708 = vmatpush1.msra.mxu0 0.0
    %1709 = vmatprep.subr.mxu0 0.0
    %1710 = vmatpush1.msra.mxu0 0.0
    %1711 = vmatprep.subr.mxu0 0.0
    %1712 = vmatpush1.msra.mxu0 0.0
    %1713 = vmatprep.subr.mxu0 0.0
    %1714 = vmatpush1.msra.mxu0 0.0
    %1715 = vmatprep.subr.mxu0 0.0
    %1716 = vmatpush1.msra.mxu0 0.0
    %1717 = vmatprep.subr.mxu0 0.0
    %1718 = vmatpush1.msra.mxu0 0.0
    %1719 = vmatprep.subr.mxu0 0.0
    %1720 = vmatpush1.msra.mxu0 0.0
    %1721 = vmatprep.subr.mxu0 0.0
    %1722 = vmatpush1.msra.mxu0 0.0
    %1723 = vmatprep.subr.mxu0 0.0
    %1724 = vmatpush1.msra.mxu0 0.0
    %1725 = vmatprep.subr.mxu0 0.0
    %1726 = vmatpush1.msra.mxu0 0.0
    %1727 = vmatprep.subr.mxu0 0.0
    %1728 = vmatpush1.msra.mxu0 0.0
    %1729 = vmatprep.subr.mxu0 0.0
    %1730 = vmatpush1.msra.mxu0 0.0
    %1731 = vmatprep.subr.mxu0 0.0
    %1732 = vmatpush1.msra.mxu0 0.0
    %1733 = vmatprep.subr.mxu0 0.0
    %1734 = vmatpush1.msra.mxu0 0.0
    %1735 = vmatprep.subr.mxu0 0.0
    %1736 = vmatpush1.msra.mxu0 0.0
    %1737 = vmatprep.subr.mxu0 0.0
    %1738 = vmatpush1.msra.mxu0 0.0
    %1739 = vmatprep.subr.mxu0 0.0
    %1740 = vmatpush1.msra.mxu0 0.0
    %1741 = vmatprep.subr.mxu0 0.0
    %1742 = vmatpush1.msra.mxu0 0.0
    %1743 = vmatprep.subr.mxu0 0.0
    %1744 = vmatpush1.msra.mxu0 0.0
    %1745 = vmatprep.subr.mxu0 0.0
    %1746 = vmatpush1.msra.mxu0 0.0
    %1747 = vmatprep.subr.mxu0 0.0
    %1748 = vmatpush1.msra.mxu0 0.0
    %1749 = vmatprep.subr.mxu0 0.0
    %1750 = vmatpush1.msra.mxu0 0.0
    %1751 = vmatprep.subr.mxu0 0.0
    %1752 = vmatpush1.msra.mxu0 0.0
    %1753 = vmatprep.subr.mxu0 0.0
    %1754 = vmatpush1.msra.mxu0 0.0
    %1755 = vmatprep.subr.mxu0 0.0
    %1756 = vmatpush1.msra.mxu0 0.0
    %1757 = vmatprep.subr.mxu0 0.0
    %1758 = vmatpush1.msra.mxu0 0.0
    %1759 = vmatprep.mubr.f32.mxu0 0.0
    %1760 = vmatmul.mubr.f32.gmra.mrb[0].mxu0 %v1693
    %v1761 = vpop.f32.mrb[0].mxu0
    %v1762 = vadd.f32 %v749, %v1761
    %v1763 = vpop.f32.mrb[0].mxu0
    %1764 = vdwg.mxu0
    %v1766 = vrot.slane %v1762, 6
    %v1768 = vadd.f32 %v734, %v1766
    %v1769 = vxor.u32 %v1768, 2147483648
    %v1770 = vmul.f32 %v1769, 1.442695
    %v1771 = vpow.pop %v1770
    %v1772 = vadd.f32 %v1771, 1.0
    %v1773 = vrcp.pop %v1772
    %v1774 = vmul.f32 1.0, %v1773
    %1775 = vrot.lane.b32.xlu0 %v1766, 96
    %v1776 = vpop.permute.xlu0 %1775
    %v1778 = vmul.f32 %v1774, %v1776
    %1780 = vrot.lane.b32.xlu0 %v1778, 32
    %v1781 = vpop.permute.xlu0 %1780
    %v1783 = vadd.f32 %v734, %v1781
    %v1784 = vtanh.pop %v1783
    %v1785 = vsub.f32 1.0, %v1774
    %1787 = vrot.lane.b32.xlu0 %v1784, 112
    %v1788 = vpop.permute.xlu0 %1787
    %v1790 = vmul.f32 %v1785, %v1788
    %v1791 = vrot.slane %v1689, 6
    %v1793 = vmul.f32 %v1774, %v1791
    %v1794 = vadd.f32 %v1790, %v1793
    %v1796 = vrot.slane %v1794, 2
    %1797 = vrot.lane.b32.xlu0 %v1796, 112
    %v1798 = vpop.permute.xlu0 %1797
    %v1799 = vsel %vm142, %v1798, 0
    %1801 = vmatprep.subr.mxu0 0.0
    %1802 = vmatpush1.msra.mxu0 %v742
    %1803 = vmatprep.subr.mxu0 0.0
    %1804 = vmatpush1.msra.mxu0 %v743
    %1805 = vmatprep.subr.mxu0 0.0
    %1806 = vmatpush1.msra.mxu0 0.0
    %1807 = vmatprep.subr.mxu0 0.0
    %1808 = vmatpush1.msra.mxu0 0.0
    %1809 = vmatprep.subr.mxu0 0.0
    %1810 = vmatpush1.msra.mxu0 0.0
    %1811 = vmatprep.subr.mxu0 0.0
    %1812 = vmatpush1.msra.mxu0 0.0
    %1813 = vmatprep.subr.mxu0 0.0
    %1814 = vmatpush1.msra.mxu0 0.0
    %1815 = vmatprep.subr.mxu0 0.0
    %1816 = vmatpush1.msra.mxu0 0.0
    %1817 = vmatprep.subr.mxu0 0.0
    %1818 = vmatpush1.msra.mxu0 0.0
    %1819 = vmatprep.subr.mxu0 0.0
    %1820 = vmatpush1.msra.mxu0 0.0
    %1821 = vmatprep.subr.mxu0 0.0
    %1822 = vmatpush1.msra.mxu0 0.0
    %1823 = vmatprep.subr.mxu0 0.0
    %1824 = vmatpush1.msra.mxu0 0.0
    %1825 = vmatprep.subr.mxu0 0.0
    %1826 = vmatpush1.msra.mxu0 0.0
    %1827 = vmatprep.subr.mxu0 0.0
    %1828 = vmatpush1.msra.mxu0 0.0
    %1829 = vmatprep.subr.mxu0 0.0
    %1830 = vmatpush1.msra.mxu0 0.0
    %1831 = vmatprep.subr.mxu0 0.0
    %1832 = vmatpush1.msra.mxu0 0.0
    %1833 = vmatprep.subr.mxu0 0.0
    %1834 = vmatpush1.msra.mxu0 0.0
    %1835 = vmatprep.subr.mxu0 0.0
    %1836 = vmatpush1.msra.mxu0 0.0
    %1837 = vmatprep.subr.mxu0 0.0
    %1838 = vmatpush1.msra.mxu0 0.0
    %1839 = vmatprep.subr.mxu0 0.0
    %1840 = vmatpush1.msra.mxu0 0.0
    %1841 = vmatprep.subr.mxu0 0.0
    %1842 = vmatpush1.msra.mxu0 0.0
    %1843 = vmatprep.subr.mxu0 0.0
    %1844 = vmatpush1.msra.mxu0 0.0
    %1845 = vmatprep.subr.mxu0 0.0
    %1846 = vmatpush1.msra.mxu0 0.0
    %1847 = vmatprep.subr.mxu0 0.0
    %1848 = vmatpush1.msra.mxu0 0.0
    %1849 = vmatprep.subr.mxu0 0.0
    %1850 = vmatpush1.msra.mxu0 0.0
    %1851 = vmatprep.subr.mxu0 0.0
    %1852 = vmatpush1.msra.mxu0 0.0
    %1853 = vmatprep.subr.mxu0 0.0
    %1854 = vmatpush1.msra.mxu0 0.0
    %1855 = vmatprep.subr.mxu0 0.0
    %1856 = vmatpush1.msra.mxu0 0.0
    %1857 = vmatprep.subr.mxu0 0.0
    %1858 = vmatpush1.msra.mxu0 0.0
    %1859 = vmatprep.subr.mxu0 0.0
    %1860 = vmatpush1.msra.mxu0 0.0
    %1861 = vmatprep.subr.mxu0 0.0
    %1862 = vmatpush1.msra.mxu0 0.0
    %1863 = vmatprep.subr.mxu0 0.0
    %1864 = vmatpush1.msra.mxu0 0.0
    %1865 = vmatprep.mubr.f32.mxu0 0.0
    %1866 = vmatmul.mubr.f32.gmra.mrb[0].mxu0 %v1799
    %v1867 = vpop.f32.mrb[0].mxu0
    %v1868 = vadd.f32 %v749, %v1867
    %v1869 = vpop.f32.mrb[0].mxu0
    %1870 = vdwg.mxu0
    %v1872 = vrot.slane %v1868, 4
    %v1874 = vadd.f32 %v734, %v1872
    %v1875 = vxor.u32 %v1874, 2147483648
    %v1876 = vmul.f32 %v1875, 1.442695
    %v1877 = vpow.pop %v1876
    %v1878 = vadd.f32 %v1877, 1.0
    %v1879 = vrcp.pop %v1878
    %v1880 = vmul.f32 1.0, %v1879
    %1881 = vrot.lane.b32.xlu0 %v1872, 96
    %v1882 = vpop.permute.xlu0 %1881
    %v1884 = vmul.f32 %v1880, %v1882
    %1886 = vrot.lane.b32.xlu0 %v1884, 32
    %v1887 = vpop.permute.xlu0 %1886
    %v1889 = vadd.f32 %v734, %v1887
    %v1890 = vtanh.pop %v1889
    %v1891 = vsub.f32 1.0, %v1880
    %1893 = vrot.lane.b32.xlu0 %v1890, 112
    %v1894 = vpop.permute.xlu0 %1893
    %v1896 = vmul.f32 %v1891, %v1894
    %v1897 = vrot.slane %v1794, 6
    %v1899 = vmul.f32 %v1880, %v1897
    %v1900 = vadd.f32 %v1896, %v1899
    %v1902 = vrot.slane %v1900, 4
    %1903 = vrot.lane.b32.xlu0 %v1902, 112
    %v1904 = vpop.permute.xlu0 %1903
    %v1905 = vsel %vm142, %v1904, 0
    %1907 = vmatprep.subr.mxu0 0.0
    %1908 = vmatpush1.msra.mxu0 %v742
    %1909 = vmatprep.subr.mxu0 0.0
    %1910 = vmatpush1.msra.mxu0 %v743
    %1911 = vmatprep.subr.mxu0 0.0
    %1912 = vmatpush1.msra.mxu0 0.0
    %1913 = vmatprep.subr.mxu0 0.0
    %1914 = vmatpush1.msra.mxu0 0.0
    %1915 = vmatprep.subr.mxu0 0.0
    %1916 = vmatpush1.msra.mxu0 0.0
    %1917 = vmatprep.subr.mxu0 0.0
    %1918 = vmatpush1.msra.mxu0 0.0
    %1919 = vmatprep.subr.mxu0 0.0
    %1920 = vmatpush1.msra.mxu0 0.0
    %1921 = vmatprep.subr.mxu0 0.0
    %1922 = vmatpush1.msra.mxu0 0.0
    %1923 = vmatprep.subr.mxu0 0.0
    %1924 = vmatpush1.msra.mxu0 0.0
    %1925 = vmatprep.subr.mxu0 0.0
    %1926 = vmatpush1.msra.mxu0 0.0
    %1927 = vmatprep.subr.mxu0 0.0
    %1928 = vmatpush1.msra.mxu0 0.0
    %1929 = vmatprep.subr.mxu0 0.0
    %1930 = vmatpush1.msra.mxu0 0.0
    %1931 = vmatprep.subr.mxu0 0.0
    %1932 = vmatpush1.msra.mxu0 0.0
    %1933 = vmatprep.subr.mxu0 0.0
    %1934 = vmatpush1.msra.mxu0 0.0
    %1935 = vmatprep.subr.mxu0 0.0
    %1936 = vmatpush1.msra.mxu0 0.0
    %1937 = vmatprep.subr.mxu0 0.0
    %1938 = vmatpush1.msra.mxu0 0.0
    %1939 = vmatprep.subr.mxu0 0.0
    %1940 = vmatpush1.msra.mxu0 0.0
    %1941 = vmatprep.subr.mxu0 0.0
    %1942 = vmatpush1.msra.mxu0 0.0
    %1943 = vmatprep.subr.mxu0 0.0
    %1944 = vmatpush1.msra.mxu0 0.0
    %1945 = vmatprep.subr.mxu0 0.0
    %1946 = vmatpush1.msra.mxu0 0.0
    %1947 = vmatprep.subr.mxu0 0.0
    %1948 = vmatpush1.msra.mxu0 0.0
    %1949 = vmatprep.subr.mxu0 0.0
    %1950 = vmatpush1.msra.mxu0 0.0
    %1951 = vmatprep.subr.mxu0 0.0
    %1952 = vmatpush1.msra.mxu0 0.0
    %1953 = vmatprep.subr.mxu0 0.0
    %1954 = vmatpush1.msra.mxu0 0.0
    %1955 = vmatprep.subr.mxu0 0.0
    %1956 = vmatpush1.msra.mxu0 0.0
    %1957 = vmatprep.subr.mxu0 0.0
    %1958 = vmatpush1.msra.mxu0 0.0
    %1959 = vmatprep.subr.mxu0 0.0
    %1960 = vmatpush1.msra.mxu0 0.0
    %1961 = vmatprep.subr.mxu0 0.0
    %1962 = vmatpush1.msra.mxu0 0.0
    %1963 = vmatprep.subr.mxu0 0.0
    %1964 = vmatpush1.msra.mxu0 0.0
    %1965 = vmatprep.subr.mxu0 0.0
    %1966 = vmatpush1.msra.mxu0 0.0
    %1967 = vmatprep.subr.mxu0 0.0
    %1968 = vmatpush1.msra.mxu0 0.0
    %1969 = vmatprep.subr.mxu0 0.0
    %1970 = vmatpush1.msra.mxu0 0.0
    %1971 = vmatprep.mubr.f32.mxu0 0.0
    %1972 = vmatmul.mubr.f32.gmra.mrb[0].mxu0 %v1905
    %v1973 = vpop.f32.mrb[0].mxu0
    %v1974 = vadd.f32 %v749, %v1973
    %v1975 = vpop.f32.mrb[0].mxu0
    %1976 = vdwg.mxu0
    %v1978 = vrot.slane %v1974, 2
    %v1980 = vadd.f32 %v734, %v1978
    %v1981 = vxor.u32 %v1980, 2147483648
    %v1982 = vmul.f32 %v1981, 1.442695
    %v1983 = vpow.pop %v1982
    %v1984 = vadd.f32 %v1983, 1.0
    %v1985 = vrcp.pop %v1984
    %v1986 = vmul.f32 1.0, %v1985
    %1987 = vrot.lane.b32.xlu0 %v1978, 96
    %v1988 = vpop.permute.xlu0 %1987
    %v1990 = vmul.f32 %v1986, %v1988
    %1992 = vrot.lane.b32.xlu0 %v1990, 32
    %v1993 = vpop.permute.xlu0 %1992
    %v1995 = vadd.f32 %v734, %v1993
    %v1996 = vtanh.pop %v1995
    %v1997 = vsub.f32 1.0, %v1986
    %1999 = vrot.lane.b32.xlu0 %v1996, 112
    %v2000 = vpop.permute.xlu0 %1999
    %v2002 = vmul.f32 %v1997, %v2000
    %v2003 = vrot.slane %v1900, 6
    %v2005 = vmul.f32 %v1986, %v2003
    %v2006 = vadd.f32 %v2002, %v2005
    %v2008 = vrot.slane %v2006, 6
    %2009 = vrot.lane.b32.xlu0 %v2008, 112
    %v2010 = vpop.permute.xlu0 %2009
    %v2011 = vsel %vm142, %v2010, 0
    %2013 = vmatprep.subr.mxu0 0.0
    %2014 = vmatpush1.msra.mxu0 %v742
    %2015 = vmatprep.subr.mxu0 0.0
    %2016 = vmatpush1.msra.mxu0 %v743
    %2017 = vmatprep.subr.mxu0 0.0
    %2018 = vmatpush1.msra.mxu0 0.0
    %2019 = vmatprep.subr.mxu0 0.0
    %2020 = vmatpush1.msra.mxu0 0.0
    %2021 = vmatprep.subr.mxu0 0.0
    %2022 = vmatpush1.msra.mxu0 0.0
    %2023 = vmatprep.subr.mxu0 0.0
    %2024 = vmatpush1.msra.mxu0 0.0
    %2025 = vmatprep.subr.mxu0 0.0
    %2026 = vmatpush1.msra.mxu0 0.0
    %2027 = vmatprep.subr.mxu0 0.0
    %2028 = vmatpush1.msra.mxu0 0.0
    %2029 = vmatprep.subr.mxu0 0.0
    %2030 = vmatpush1.msra.mxu0 0.0
    %2031 = vmatprep.subr.mxu0 0.0
    %2032 = vmatpush1.msra.mxu0 0.0
    %2033 = vmatprep.subr.mxu0 0.0
    %2034 = vmatpush1.msra.mxu0 0.0
    %2035 = vmatprep.subr.mxu0 0.0
    %2036 = vmatpush1.msra.mxu0 0.0
    %2037 = vmatprep.subr.mxu0 0.0
    %2038 = vmatpush1.msra.mxu0 0.0
    %2039 = vmatprep.subr.mxu0 0.0
    %2040 = vmatpush1.msra.mxu0 0.0
    %2041 = vmatprep.subr.mxu0 0.0
    %2042 = vmatpush1.msra.mxu0 0.0
    %2043 = vmatprep.subr.mxu0 0.0
    %2044 = vmatpush1.msra.mxu0 0.0
    %2045 = vmatprep.subr.mxu0 0.0
    %2046 = vmatpush1.msra.mxu0 0.0
    %2047 = vmatprep.subr.mxu0 0.0
    %2048 = vmatpush1.msra.mxu0 0.0
    %2049 = vmatprep.subr.mxu0 0.0
    %2050 = vmatpush1.msra.mxu0 0.0
    %2051 = vmatprep.subr.mxu0 0.0
    %2052 = vmatpush1.msra.mxu0 0.0
    %2053 = vmatprep.subr.mxu0 0.0
    %2054 = vmatpush1.msra.mxu0 0.0
    %2055 = vmatprep.subr.mxu0 0.0
    %2056 = vmatpush1.msra.mxu0 0.0
    %2057 = vmatprep.subr.mxu0 0.0
    %2058 = vmatpush1.msra.mxu0 0.0
    %2059 = vmatprep.subr.mxu0 0.0
    %2060 = vmatpush1.msra.mxu0 0.0
    %2061 = vmatprep.subr.mxu0 0.0
    %2062 = vmatpush1.msra.mxu0 0.0
    %2063 = vmatprep.subr.mxu0 0.0
    %2064 = vmatpush1.msra.mxu0 0.0
    %2065 = vmatprep.subr.mxu0 0.0
    %2066 = vmatpush1.msra.mxu0 0.0
    %2067 = vmatprep.subr.mxu0 0.0
    %2068 = vmatpush1.msra.mxu0 0.0
    %2069 = vmatprep.subr.mxu0 0.0
    %2070 = vmatpush1.msra.mxu0 0.0
    %2071 = vmatprep.subr.mxu0 0.0
    %2072 = vmatpush1.msra.mxu0 0.0
    %2073 = vmatprep.subr.mxu0 0.0
    %2074 = vmatpush1.msra.mxu0 0.0
    %2075 = vmatprep.subr.mxu0 0.0
    %2076 = vmatpush1.msra.mxu0 0.0
    %2077 = vmatprep.mubr.f32.mxu0 0.0
    %2078 = vmatmul.mubr.f32.gmra.mrb[0].mxu0 %v2011
    %v2079 = vpop.f32.mrb[0].mxu0
    %v2080 = vadd.f32 %v749, %v2079
    %v2081 = vpop.f32.mrb[0].mxu0
    %2082 = vdwg.mxu0
    %v2083 = vadd.f32 %v739, %v2080
    %v2084 = vxor.u32 %v2083, 2147483648
    %v2085 = vmul.f32 %v2084, 1.442695
    %v2086 = vpow.pop %v2085
    %v2087 = vadd.f32 %v2086, 1.0
    %v2088 = vrcp.pop %v2087
    %v2089 = vmul.f32 1.0, %v2088
    %2091 = vrot.lane.b32.xlu0 %v2080, 96
    %v2092 = vpop.permute.xlu0 %2091
    %v2094 = vmul.f32 %v2089, %v2092
    %2096 = vrot.lane.b32.xlu0 %v2094, 32
    %v2097 = vpop.permute.xlu0 %2096
    %v2099 = vadd.f32 %v739, %v2097
    %v2100 = vtanh.pop %v2099
    %v2101 = vsub.f32 1.0, %v2089
    %2103 = vrot.lane.b32.xlu0 %v2100, 112
    %v2104 = vpop.permute.xlu0 %2103
    %v2106 = vmul.f32 %v2101, %v2104
    %v2108 = vmul.f32 %v2089, %v2008
    %v2109 = vadd.f32 %v2106, %v2108
    %2111 = vrot.lane.b32.xlu0 %v2109, 112
    %v2112 = vpop.permute.xlu0 %2111
    %v2113 = vsel %vm142, %v2112, 0
    %2115 = vmatprep.subr.mxu0 0.0
    %2116 = vmatpush1.msra.mxu0 %v742
    %2117 = vmatprep.subr.mxu0 0.0
    %2118 = vmatpush1.msra.mxu0 %v743
    %2119 = vmatprep.subr.mxu0 0.0
    %2120 = vmatpush1.msra.mxu0 0.0
    %2121 = vmatprep.subr.mxu0 0.0
    %2122 = vmatpush1.msra.mxu0 0.0
    %2123 = vmatprep.subr.mxu0 0.0
    %2124 = vmatpush1.msra.mxu0 0.0
    %2125 = vmatprep.subr.mxu0 0.0
    %2126 = vmatpush1.msra.mxu0 0.0
    %2127 = vmatprep.subr.mxu0 0.0
    %2128 = vmatpush1.msra.mxu0 0.0
    %2129 = vmatprep.subr.mxu0 0.0
    %2130 = vmatpush1.msra.mxu0 0.0
    %2131 = vmatprep.subr.mxu0 0.0
    %2132 = vmatpush1.msra.mxu0 0.0
    %2133 = vmatprep.subr.mxu0 0.0
    %2134 = vmatpush1.msra.mxu0 0.0
    %2135 = vmatprep.subr.mxu0 0.0
    %2136 = vmatpush1.msra.mxu0 0.0
    %2137 = vmatprep.subr.mxu0 0.0
    %2138 = vmatpush1.msra.mxu0 0.0
    %2139 = vmatprep.subr.mxu0 0.0
    %2140 = vmatpush1.msra.mxu0 0.0
    %2141 = vmatprep.subr.mxu0 0.0
    %2142 = vmatpush1.msra.mxu0 0.0
    %2143 = vmatprep.subr.mxu0 0.0
    %2144 = vmatpush1.msra.mxu0 0.0
    %2145 = vmatprep.subr.mxu0 0.0
    %2146 = vmatpush1.msra.mxu0 0.0
    %2147 = vmatprep.subr.mxu0 0.0
    %2148 = vmatpush1.msra.mxu0 0.0
    %2149 = vmatprep.subr.mxu0 0.0
    %2150 = vmatpush1.msra.mxu0 0.0
    %2151 = vmatprep.subr.mxu0 0.0
    %2152 = vmatpush1.msra.mxu0 0.0
    %2153 = vmatprep.subr.mxu0 0.0
    %2154 = vmatpush1.msra.mxu0 0.0
    %2155 = vmatprep.subr.mxu0 0.0
    %2156 = vmatpush1.msra.mxu0 0.0
    %2157 = vmatprep.subr.mxu0 0.0
    %2158 = vmatpush1.msra.mxu0 0.0
    %2159 = vmatprep.subr.mxu0 0.0
    %2160 = vmatpush1.msra.mxu0 0.0
    %2161 = vmatprep.subr.mxu0 0.0
    %2162 = vmatpush1.msra.mxu0 0.0
    %2163 = vmatprep.subr.mxu0 0.0
    %2164 = vmatpush1.msra.mxu0 0.0
    %2165 = vmatprep.subr.mxu0 0.0
    %2166 = vmatpush1.msra.mxu0 0.0
    %2167 = vmatprep.subr.mxu0 0.0
    %2168 = vmatpush1.msra.mxu0 0.0
    %2169 = vmatprep.subr.mxu0 0.0
    %2170 = vmatpush1.msra.mxu0 0.0
    %2171 = vmatprep.subr.mxu0 0.0
    %2172 = vmatpush1.msra.mxu0 0.0
    %2173 = vmatprep.subr.mxu0 0.0
    %2174 = vmatpush1.msra.mxu0 0.0
    %2175 = vmatprep.subr.mxu0 0.0
    %2176 = vmatpush1.msra.mxu0 0.0
    %2177 = vmatprep.subr.mxu0 0.0
    %2178 = vmatpush1.msra.mxu0 0.0
    %2179 = vmatprep.mubr.f32.mxu0 0.0
    %2180 = vmatmul.mubr.f32.gmra.mrb[0].mxu0 %v2113
    %v2181 = vpop.f32.mrb[0].mxu0
    %v2182 = vadd.f32 %v749, %v2181
    %v2183 = vpop.f32.mrb[0].mxu0
    %2184 = vdwg.mxu0
    %v2186 = vrot.slane %v2182, 6
    %v2188 = vadd.f32 %v739, %v2186
    %v2189 = vxor.u32 %v2188, 2147483648
    %v2190 = vmul.f32 %v2189, 1.442695
    %v2191 = vpow.pop %v2190
    %v2192 = vadd.f32 %v2191, 1.0
    %v2193 = vrcp.pop %v2192
    %v2194 = vmul.f32 1.0, %v2193
    %2195 = vrot.lane.b32.xlu0 %v2186, 96
    %v2196 = vpop.permute.xlu0 %2195
    %v2198 = vmul.f32 %v2194, %v2196
    %2200 = vrot.lane.b32.xlu0 %v2198, 32
    %v2201 = vpop.permute.xlu0 %2200
    %v2203 = vadd.f32 %v739, %v2201
    %v2204 = vtanh.pop %v2203
    %v2205 = vsub.f32 1.0, %v2194
    %2207 = vrot.lane.b32.xlu0 %v2204, 112
    %v2208 = vpop.permute.xlu0 %2207
    %v2210 = vmul.f32 %v2205, %v2208
    %v2211 = vrot.slane %v2109, 6
    %v2213 = vmul.f32 %v2194, %v2211
    %v2214 = vadd.f32 %v2210, %v2213
    %v2216 = vrot.slane %v2214, 2
    %2217 = vrot.lane.b32.xlu0 %v2216, 112
    %v2218 = vpop.permute.xlu0 %2217
    %v2219 = vsel %vm142, %v2218, 0
    %2221 = vmatprep.subr.mxu0 0.0
    %2222 = vmatpush1.msra.mxu0 %v742
    %2223 = vmatprep.subr.mxu0 0.0
    %2224 = vmatpush1.msra.mxu0 %v743
    %2225 = vmatprep.subr.mxu0 0.0
    %2226 = vmatpush1.msra.mxu0 0.0
    %2227 = vmatprep.subr.mxu0 0.0
    %2228 = vmatpush1.msra.mxu0 0.0
    %2229 = vmatprep.subr.mxu0 0.0
    %2230 = vmatpush1.msra.mxu0 0.0
    %2231 = vmatprep.subr.mxu0 0.0
    %2232 = vmatpush1.msra.mxu0 0.0
    %2233 = vmatprep.subr.mxu0 0.0
    %2234 = vmatpush1.msra.mxu0 0.0
    %2235 = vmatprep.subr.mxu0 0.0
    %2236 = vmatpush1.msra.mxu0 0.0
    %2237 = vmatprep.subr.mxu0 0.0
    %2238 = vmatpush1.msra.mxu0 0.0
    %2239 = vmatprep.subr.mxu0 0.0
    %2240 = vmatpush1.msra.mxu0 0.0
    %2241 = vmatprep.subr.mxu0 0.0
    %2242 = vmatpush1.msra.mxu0 0.0
    %2243 = vmatprep.subr.mxu0 0.0
    %2244 = vmatpush1.msra.mxu0 0.0
    %2245 = vmatprep.subr.mxu0 0.0
    %2246 = vmatpush1.msra.mxu0 0.0
    %2247 = vmatprep.subr.mxu0 0.0
    %2248 = vmatpush1.msra.mxu0 0.0
    %2249 = vmatprep.subr.mxu0 0.0
    %2250 = vmatpush1.msra.mxu0 0.0
    %2251 = vmatprep.subr.mxu0 0.0
    %2252 = vmatpush1.msra.mxu0 0.0
    %2253 = vmatprep.subr.mxu0 0.0
    %2254 = vmatpush1.msra.mxu0 0.0
    %2255 = vmatprep.subr.mxu0 0.0
    %2256 = vmatpush1.msra.mxu0 0.0
    %2257 = vmatprep.subr.mxu0 0.0
    %2258 = vmatpush1.msra.mxu0 0.0
    %2259 = vmatprep.subr.mxu0 0.0
    %2260 = vmatpush1.msra.mxu0 0.0
    %2261 = vmatprep.subr.mxu0 0.0
    %2262 = vmatpush1.msra.mxu0 0.0
    %2263 = vmatprep.subr.mxu0 0.0
    %2264 = vmatpush1.msra.mxu0 0.0
    %2265 = vmatprep.subr.mxu0 0.0
    %2266 = vmatpush1.msra.mxu0 0.0
    %2267 = vmatprep.subr.mxu0 0.0
    %2268 = vmatpush1.msra.mxu0 0.0
    %2269 = vmatprep.subr.mxu0 0.0
    %2270 = vmatpush1.msra.mxu0 0.0
    %2271 = vmatprep.subr.mxu0 0.0
    %2272 = vmatpush1.msra.mxu0 0.0
    %2273 = vmatprep.subr.mxu0 0.0
    %2274 = vmatpush1.msra.mxu0 0.0
    %2275 = vmatprep.subr.mxu0 0.0
    %2276 = vmatpush1.msra.mxu0 0.0
    %2277 = vmatprep.subr.mxu0 0.0
    %2278 = vmatpush1.msra.mxu0 0.0
    %2279 = vmatprep.subr.mxu0 0.0
    %2280 = vmatpush1.msra.mxu0 0.0
    %2281 = vmatprep.subr.mxu0 0.0
    %2282 = vmatpush1.msra.mxu0 0.0
    %2283 = vmatprep.subr.mxu0 0.0
    %2284 = vmatpush1.msra.mxu0 0.0
    %2285 = vmatprep.mubr.f32.mxu0 0.0
    %2286 = vmatmul.mubr.f32.gmra.mrb[0].mxu0 %v2219
    %v2287 = vpop.f32.mrb[0].mxu0
    %v2288 = vadd.f32 %v749, %v2287
    %v2289 = vpop.f32.mrb[0].mxu0
    %2290 = vdwg.mxu0
    %v2292 = vrot.slane %v2288, 4
    %v2294 = vadd.f32 %v739, %v2292
    %v2295 = vxor.u32 %v2294, 2147483648
    %v2296 = vmul.f32 %v2295, 1.442695
    %v2297 = vpow.pop %v2296
    %v2298 = vadd.f32 %v2297, 1.0
    %v2299 = vrcp.pop %v2298
    %v2300 = vmul.f32 1.0, %v2299
    %2301 = vrot.lane.b32.xlu0 %v2292, 96
    %v2302 = vpop.permute.xlu0 %2301
    %v2304 = vmul.f32 %v2300, %v2302
    %2306 = vrot.lane.b32.xlu0 %v2304, 32
    %v2307 = vpop.permute.xlu0 %2306
    %v2309 = vadd.f32 %v739, %v2307
    %v2310 = vtanh.pop %v2309
    %v2311 = vsub.f32 1.0, %v2300
    %2313 = vrot.lane.b32.xlu0 %v2310, 112
    %v2314 = vpop.permute.xlu0 %2313
    %v2316 = vmul.f32 %v2311, %v2314
    %v2317 = vrot.slane %v2214, 6
    %v2319 = vmul.f32 %v2300, %v2317
    %v2320 = vadd.f32 %v2316, %v2319
    %v2322 = vrot.slane %v2320, 4
    %2323 = vrot.lane.b32.xlu0 %v2322, 112
    %v2324 = vpop.permute.xlu0 %2323
    %v2325 = vsel %vm142, %v2324, 0
    %2327 = vmatprep.subr.mxu0 0.0
    %2328 = vmatpush1.msra.mxu0 %v742
    %2329 = vmatprep.subr.mxu0 0.0
    %2330 = vmatpush1.msra.mxu0 %v743
    %2331 = vmatprep.subr.mxu0 0.0
    %2332 = vmatpush1.msra.mxu0 0.0
    %2333 = vmatprep.subr.mxu0 0.0
    %2334 = vmatpush1.msra.mxu0 0.0
    %2335 = vmatprep.subr.mxu0 0.0
    %2336 = vmatpush1.msra.mxu0 0.0
    %2337 = vmatprep.subr.mxu0 0.0
    %2338 = vmatpush1.msra.mxu0 0.0
    %2339 = vmatprep.subr.mxu0 0.0
    %2340 = vmatpush1.msra.mxu0 0.0
    %2341 = vmatprep.subr.mxu0 0.0
    %2342 = vmatpush1.msra.mxu0 0.0
    %2343 = vmatprep.subr.mxu0 0.0
    %2344 = vmatpush1.msra.mxu0 0.0
    %2345 = vmatprep.subr.mxu0 0.0
    %2346 = vmatpush1.msra.mxu0 0.0
    %2347 = vmatprep.subr.mxu0 0.0
    %2348 = vmatpush1.msra.mxu0 0.0
    %2349 = vmatprep.subr.mxu0 0.0
    %2350 = vmatpush1.msra.mxu0 0.0
    %2351 = vmatprep.subr.mxu0 0.0
    %2352 = vmatpush1.msra.mxu0 0.0
    %2353 = vmatprep.subr.mxu0 0.0
    %2354 = vmatpush1.msra.mxu0 0.0
    %2355 = vmatprep.subr.mxu0 0.0
    %2356 = vmatpush1.msra.mxu0 0.0
    %2357 = vmatprep.subr.mxu0 0.0
    %2358 = vmatpush1.msra.mxu0 0.0
    %2359 = vmatprep.subr.mxu0 0.0
    %2360 = vmatpush1.msra.mxu0 0.0
    %2361 = vmatprep.subr.mxu0 0.0
    %2362 = vmatpush1.msra.mxu0 0.0
    %2363 = vmatprep.subr.mxu0 0.0
    %2364 = vmatpush1.msra.mxu0 0.0
    %2365 = vmatprep.subr.mxu0 0.0
    %2366 = vmatpush1.msra.mxu0 0.0
    %2367 = vmatprep.subr.mxu0 0.0
    %2368 = vmatpush1.msra.mxu0 0.0
    %2369 = vmatprep.subr.mxu0 0.0
    %2370 = vmatpush1.msra.mxu0 0.0
    %2371 = vmatprep.subr.mxu0 0.0
    %2372 = vmatpush1.msra.mxu0 0.0
    %2373 = vmatprep.subr.mxu0 0.0
    %2374 = vmatpush1.msra.mxu0 0.0
    %2375 = vmatprep.subr.mxu0 0.0
    %2376 = vmatpush1.msra.mxu0 0.0
    %2377 = vmatprep.subr.mxu0 0.0
    %2378 = vmatpush1.msra.mxu0 0.0
    %2379 = vmatprep.subr.mxu0 0.0
    %2380 = vmatpush1.msra.mxu0 0.0
    %2381 = vmatprep.subr.mxu0 0.0
    %2382 = vmatpush1.msra.mxu0 0.0
    %2383 = vmatprep.subr.mxu0 0.0
    %2384 = vmatpush1.msra.mxu0 0.0
    %2385 = vmatprep.subr.mxu0 0.0
    %2386 = vmatpush1.msra.mxu0 0.0
    %2387 = vmatprep.subr.mxu0 0.0
    %2388 = vmatpush1.msra.mxu0 0.0
    %2389 = vmatprep.subr.mxu0 0.0
    %2390 = vmatpush1.msra.mxu0 0.0
    %2391 = vmatprep.mubr.f32.mxu0 0.0
    %2392 = vmatmul.mubr.f32.gmra.mrb[0].mxu0 %v2325
    %v2393 = vpop.f32.mrb[0].mxu0
    %v2394 = vadd.f32 %v749, %v2393
    %v2395 = vpop.f32.mrb[0].mxu0
    %2396 = vdwg.mxu0
    %v2398 = vrot.slane %v2394, 2
    %v2400 = vadd.f32 %v739, %v2398
    %v2401 = vxor.u32 %v2400, 2147483648
    %v2402 = vmul.f32 %v2401, 1.442695
    %v2403 = vpow.pop %v2402
    %v2404 = vadd.f32 %v2403, 1.0
    %v2405 = vrcp.pop %v2404
    %v2406 = vmul.f32 1.0, %v2405
    %2407 = vrot.lane.b32.xlu0 %v2398, 96
    %v2408 = vpop.permute.xlu0 %2407
    %v2410 = vmul.f32 %v2406, %v2408
    %2412 = vrot.lane.b32.xlu0 %v2410, 32
    %v2413 = vpop.permute.xlu0 %2412
    %v2415 = vadd.f32 %v739, %v2413
    %v2416 = vtanh.pop %v2415
    %v2417 = vsub.f32 1.0, %v2406
    %2419 = vrot.lane.b32.xlu0 %v2416, 112
    %v2420 = vpop.permute.xlu0 %2419
    %v2422 = vmul.f32 %v2417, %v2420
    %v2423 = vrot.slane %v2320, 6
    %v2425 = vmul.f32 %v2406, %v2423
    %v2426 = vadd.f32 %v2422, %v2425
    %v2428 = vunpack.c.l.s4 1966171168
    %v2429 = vunpack.c.0.s8 %v2428
    %v2430 = vlaneseq
    %v2431 = vshrl.u32 %v2430, 7
    %v2432 = vsub.s32 %v2429, %v2431
    %v2433 = vrot.slane %v849, %v2432
    %v2434 = vcombine.high %v2433, %v2433
    %v2436 = vunpack.c.l.s4 1966171168
    %v2437 = vunpack.c.0.s8 %v2436
    %v2438 = vlaneseq
    %v2439 = vshrl.u32 %v2438, 7
    %v2440 = vsub.s32 %v2437, %v2439
    %v2441 = vrot.slane %v2433, %v2440
    %v2443 = vunpack.c.l.s4 1966171168
    %v2444 = vunpack.c.0.s8 %v2443
    %v2445 = vlaneseq
    %v2446 = vshrl.u32 %v2445, 7
    %v2447 = vsub.s32 %v2444, %v2446
    %v2448 = vrot.slane %v2434, %v2447
    %v2452 = vunpack.c.l.s4 1966171168
    %v2453 = vunpack.c.0.s8 %v2452
    %v2454 = vlaneseq
    %v2455 = vshrl.u32 %v2454, 7
    %v2456 = vsub.s32 %v2453, %v2455
    %v2457 = vrot.slane %v954, %v2456
    %v2458 = vcombine.high %v2457, %v2457
    %v2460 = vunpack.c.l.s4 1966171168
    %v2461 = vunpack.c.0.s8 %v2460
    %v2462 = vlaneseq
    %v2463 = vshrl.u32 %v2462, 7
    %v2464 = vsub.s32 %v2461, %v2463
    %v2465 = vrot.slane %v2457, %v2464
    %v2467 = vunpack.c.l.s4 1966171168
    %v2468 = vunpack.c.0.s8 %v2467
    %v2469 = vlaneseq
    %v2470 = vshrl.u32 %v2469, 7
    %v2471 = vsub.s32 %v2468, %v2470
    %v2472 = vrot.slane %v2458, %v2471
    %v2473 = vcombine.high %v2465, %v2465
    %v2474 = vcombine.high %v2472, %v2472
    %v2475 = vcombine.high %v1060, %v1060
    %v2477 = vunpack.c.l.s4 1966171168
    %v2478 = vunpack.c.0.s8 %v2477
    %v2479 = vlaneseq
    %v2480 = vshrl.u32 %v2479, 7
    %v2481 = vsub.s32 %v2478, %v2480
    %v2482 = vrot.slane %v2475, %v2481
    %v2483 = vcombine.high %v2482, %v2482
    %v2485 = vunpack.c.l.s4 1966171168
    %v2486 = vunpack.c.0.s8 %v2485
    %v2487 = vlaneseq
    %v2488 = vshrl.u32 %v2487, 7
    %v2489 = vsub.s32 %v2486, %v2488
    %v2490 = vrot.slane %v2482, %v2489
    %v2492 = vunpack.c.l.s4 1966171168
    %v2493 = vunpack.c.0.s8 %v2492
    %v2494 = vlaneseq
    %v2495 = vshrl.u32 %v2494, 7
    %v2496 = vsub.s32 %v2493, %v2495
    %v2497 = vrot.slane %v2483, %v2496
    %v2498 = vcombine.high %v1166, %v1166
    %v2500 = vunpack.c.l.s4 1966171168
    %v2501 = vunpack.c.0.s8 %v2500
    %v2502 = vlaneseq
    %v2503 = vshrl.u32 %v2502, 7
    %v2504 = vsub.s32 %v2501, %v2503
    %v2505 = vrot.slane %v2498, %v2504
    %v2506 = vcombine.high %v2505, %v2505
    %v2508 = vunpack.c.l.s4 1966171168
    %v2509 = vunpack.c.0.s8 %v2508
    %v2510 = vlaneseq
    %v2511 = vshrl.u32 %v2510, 7
    %v2512 = vsub.s32 %v2509, %v2511
    %v2513 = vrot.slane %v2505, %v2512
    %v2515 = vunpack.c.l.s4 1966171168
    %v2516 = vunpack.c.0.s8 %v2515
    %v2517 = vlaneseq
    %v2518 = vshrl.u32 %v2517, 7
    %v2519 = vsub.s32 %v2516, %v2518
    %v2520 = vrot.slane %v2506, %v2519
    %v2521 = vcombine.high %v2513, %v2513
    %v2522 = vcombine.high %v2520, %v2520
    %v2524 = vunpack.c.l.s4 1966171168
    %v2525 = vunpack.c.0.s8 %v2524
    %v2526 = vlaneseq
    %v2527 = vshrl.u32 %v2526, 7
    %v2528 = vsub.s32 %v2525, %v2527
    %v2529 = vrot.slane %v1269, %v2528
    %v2530 = vcombine.high %v2529, %v2529
    %v2532 = vunpack.c.l.s4 1966171168
    %v2533 = vunpack.c.0.s8 %v2532
    %v2534 = vlaneseq
    %v2535 = vshrl.u32 %v2534, 7
    %v2536 = vsub.s32 %v2533, %v2535
    %v2537 = vrot.slane %v2529, %v2536
    %v2539 = vunpack.c.l.s4 1966171168
    %v2540 = vunpack.c.0.s8 %v2539
    %v2541 = vlaneseq
    %v2542 = vshrl.u32 %v2541, 7
    %v2543 = vsub.s32 %v2540, %v2542
    %v2544 = vrot.slane %v2530, %v2543
    %v2546 = vunpack.c.l.s4 1966171168
    %v2547 = vunpack.c.0.s8 %v2546
    %v2548 = vlaneseq
    %v2549 = vshrl.u32 %v2548, 7
    %v2550 = vsub.s32 %v2547, %v2549
    %v2551 = vrot.slane %v1374, %v2550
    %v2552 = vcombine.high %v2551, %v2551
    %v2554 = vunpack.c.l.s4 1966171168
    %v2555 = vunpack.c.0.s8 %v2554
    %v2556 = vlaneseq
    %v2557 = vshrl.u32 %v2556, 7
    %v2558 = vsub.s32 %v2555, %v2557
    %v2559 = vrot.slane %v2551, %v2558
    %v2561 = vunpack.c.l.s4 1966171168
    %v2562 = vunpack.c.0.s8 %v2561
    %v2563 = vlaneseq
    %v2564 = vshrl.u32 %v2563, 7
    %v2565 = vsub.s32 %v2562, %v2564
    %v2566 = vrot.slane %v2552, %v2565
    %v2567 = vcombine.high %v2559, %v2559
    %v2568 = vcombine.high %v2566, %v2566
    %v2569 = vcombine.high %v1480, %v1480
    %v2571 = vunpack.c.l.s4 1966171168
    %v2572 = vunpack.c.0.s8 %v2571
    %v2573 = vlaneseq
    %v2574 = vshrl.u32 %v2573, 7
    %v2575 = vsub.s32 %v2572, %v2574
    %v2576 = vrot.slane %v2569, %v2575
    %v2577 = vcombine.high %v2576, %v2576
    %v2579 = vunpack.c.l.s4 1966171168
    %v2580 = vunpack.c.0.s8 %v2579
    %v2581 = vlaneseq
    %v2582 = vshrl.u32 %v2581, 7
    %v2583 = vsub.s32 %v2580, %v2582
    %v2584 = vrot.slane %v2576, %v2583
    %v2586 = vunpack.c.l.s4 1966171168
    %v2587 = vunpack.c.0.s8 %v2586
    %v2588 = vlaneseq
    %v2589 = vshrl.u32 %v2588, 7
    %v2590 = vsub.s32 %v2587, %v2589
    %v2591 = vrot.slane %v2577, %v2590
    %v2592 = vcombine.high %v1586, %v1586
    %v2594 = vunpack.c.l.s4 1966171168
    %v2595 = vunpack.c.0.s8 %v2594
    %v2596 = vlaneseq
    %v2597 = vshrl.u32 %v2596, 7
    %v2598 = vsub.s32 %v2595, %v2597
    %v2599 = vrot.slane %v2592, %v2598
    %v2600 = vcombine.high %v2599, %v2599
    %v2602 = vunpack.c.l.s4 1966171168
    %v2603 = vunpack.c.0.s8 %v2602
    %v2604 = vlaneseq
    %v2605 = vshrl.u32 %v2604, 7
    %v2606 = vsub.s32 %v2603, %v2605
    %v2607 = vrot.slane %v2599, %v2606
    %v2609 = vunpack.c.l.s4 1966171168
    %v2610 = vunpack.c.0.s8 %v2609
    %v2611 = vlaneseq
    %v2612 = vshrl.u32 %v2611, 7
    %v2613 = vsub.s32 %v2610, %v2612
    %v2614 = vrot.slane %v2600, %v2613
    %v2615 = vcombine.high %v2607, %v2607
    %v2616 = vcombine.high %v2614, %v2614
    %v2618 = vunpack.c.l.s4 1966171168
    %v2619 = vunpack.c.0.s8 %v2618
    %v2620 = vlaneseq
    %v2621 = vshrl.u32 %v2620, 7
    %v2622 = vsub.s32 %v2619, %v2621
    %v2623 = vrot.slane %v1689, %v2622
    %v2624 = vcombine.high %v2623, %v2623
    %v2626 = vunpack.c.l.s4 1966171168
    %v2627 = vunpack.c.0.s8 %v2626
    %v2628 = vlaneseq
    %v2629 = vshrl.u32 %v2628, 7
    %v2630 = vsub.s32 %v2627, %v2629
    %v2631 = vrot.slane %v2623, %v2630
    %v2633 = vunpack.c.l.s4 1966171168
    %v2634 = vunpack.c.0.s8 %v2633
    %v2635 = vlaneseq
    %v2636 = vshrl.u32 %v2635, 7
    %v2637 = vsub.s32 %v2634, %v2636
    %v2638 = vrot.slane %v2624, %v2637
    %v2642 = vunpack.c.l.s4 1966171168
    %v2643 = vunpack.c.0.s8 %v2642
    %v2644 = vlaneseq
    %v2645 = vshrl.u32 %v2644, 7
    %v2646 = vsub.s32 %v2643, %v2645
    %v2647 = vrot.slane %v1794, %v2646
    %v2648 = vcombine.high %v2647, %v2647
    %v2650 = vunpack.c.l.s4 1966171168
    %v2651 = vunpack.c.0.s8 %v2650
    %v2652 = vlaneseq
    %v2653 = vshrl.u32 %v2652, 7
    %v2654 = vsub.s32 %v2651, %v2653
    %v2655 = vrot.slane %v2647, %v2654
    %v2657 = vunpack.c.l.s4 1966171168
    %v2658 = vunpack.c.0.s8 %v2657
    %v2659 = vlaneseq
    %v2660 = vshrl.u32 %v2659, 7
    %v2661 = vsub.s32 %v2658, %v2660
    %v2662 = vrot.slane %v2648, %v2661
    %v2663 = vcombine.high %v2655, %v2655
    %v2664 = vcombine.high %v2662, %v2662
    %v2665 = vcombine.high %v1900, %v1900
    %v2667 = vunpack.c.l.s4 1966171168
    %v2668 = vunpack.c.0.s8 %v2667
    %v2669 = vlaneseq
    %v2670 = vshrl.u32 %v2669, 7
    %v2671 = vsub.s32 %v2668, %v2670
    %v2672 = vrot.slane %v2665, %v2671
    %v2673 = vcombine.high %v2672, %v2672
    %v2675 = vunpack.c.l.s4 1966171168
    %v2676 = vunpack.c.0.s8 %v2675
    %v2677 = vlaneseq
    %v2678 = vshrl.u32 %v2677, 7
    %v2679 = vsub.s32 %v2676, %v2678
    %v2680 = vrot.slane %v2672, %v2679
    %v2682 = vunpack.c.l.s4 1966171168
    %v2683 = vunpack.c.0.s8 %v2682
    %v2684 = vlaneseq
    %v2685 = vshrl.u32 %v2684, 7
    %v2686 = vsub.s32 %v2683, %v2685
    %v2687 = vrot.slane %v2673, %v2686
    %v2688 = vcombine.high %v2006, %v2006
    %v2690 = vunpack.c.l.s4 1966171168
    %v2691 = vunpack.c.0.s8 %v2690
    %v2692 = vlaneseq
    %v2693 = vshrl.u32 %v2692, 7
    %v2694 = vsub.s32 %v2691, %v2693
    %v2695 = vrot.slane %v2688, %v2694
    %v2696 = vcombine.high %v2695, %v2695
    %v2698 = vunpack.c.l.s4 1966171168
    %v2699 = vunpack.c.0.s8 %v2698
    %v2700 = vlaneseq
    %v2701 = vshrl.u32 %v2700, 7
    %v2702 = vsub.s32 %v2699, %v2701
    %v2703 = vrot.slane %v2695, %v2702
    %v2705 = vunpack.c.l.s4 1966171168
    %v2706 = vunpack.c.0.s8 %v2705
    %v2707 = vlaneseq
    %v2708 = vshrl.u32 %v2707, 7
    %v2709 = vsub.s32 %v2706, %v2708
    %v2710 = vrot.slane %v2696, %v2709
    %v2711 = vcombine.high %v2703, %v2703
    %v2712 = vcombine.high %v2710, %v2710
    %v2714 = vunpack.c.l.s4 1966171168
    %v2715 = vunpack.c.0.s8 %v2714
    %v2716 = vlaneseq
    %v2717 = vshrl.u32 %v2716, 7
    %v2718 = vsub.s32 %v2715, %v2717
    %v2719 = vrot.slane %v2109, %v2718
    %v2720 = vcombine.high %v2719, %v2719
    %v2722 = vunpack.c.l.s4 1966171168
    %v2723 = vunpack.c.0.s8 %v2722
    %v2724 = vlaneseq
    %v2725 = vshrl.u32 %v2724, 7
    %v2726 = vsub.s32 %v2723, %v2725
    %v2727 = vrot.slane %v2719, %v2726
    %v2729 = vunpack.c.l.s4 1966171168
    %v2730 = vunpack.c.0.s8 %v2729
    %v2731 = vlaneseq
    %v2732 = vshrl.u32 %v2731, 7
    %v2733 = vsub.s32 %v2730, %v2732
    %v2734 = vrot.slane %v2720, %v2733
    %v2736 = vunpack.c.l.s4 1966171168
    %v2737 = vunpack.c.0.s8 %v2736
    %v2738 = vlaneseq
    %v2739 = vshrl.u32 %v2738, 7
    %v2740 = vsub.s32 %v2737, %v2739
    %v2741 = vrot.slane %v2214, %v2740
    %v2742 = vcombine.high %v2741, %v2741
    %v2744 = vunpack.c.l.s4 1966171168
    %v2745 = vunpack.c.0.s8 %v2744
    %v2746 = vlaneseq
    %v2747 = vshrl.u32 %v2746, 7
    %v2748 = vsub.s32 %v2745, %v2747
    %v2749 = vrot.slane %v2741, %v2748
    %v2751 = vunpack.c.l.s4 1966171168
    %v2752 = vunpack.c.0.s8 %v2751
    %v2753 = vlaneseq
    %v2754 = vshrl.u32 %v2753, 7
    %v2755 = vsub.s32 %v2752, %v2754
    %v2756 = vrot.slane %v2742, %v2755
    %v2757 = vcombine.high %v2749, %v2749
    %v2758 = vcombine.high %v2756, %v2756
    %v2759 = vcombine.high %v2320, %v2320
    %v2761 = vunpack.c.l.s4 1966171168
    %v2762 = vunpack.c.0.s8 %v2761
    %v2763 = vlaneseq
    %v2764 = vshrl.u32 %v2763, 7
    %v2765 = vsub.s32 %v2762, %v2764
    %v2766 = vrot.slane %v2759, %v2765
    %v2767 = vcombine.high %v2766, %v2766
    %v2769 = vunpack.c.l.s4 1966171168
    %v2770 = vunpack.c.0.s8 %v2769
    %v2771 = vlaneseq
    %v2772 = vshrl.u32 %v2771, 7
    %v2773 = vsub.s32 %v2770, %v2772
    %v2774 = vrot.slane %v2766, %v2773
    %v2776 = vunpack.c.l.s4 1966171168
    %v2777 = vunpack.c.0.s8 %v2776
    %v2778 = vlaneseq
    %v2779 = vshrl.u32 %v2778, 7
    %v2780 = vsub.s32 %v2777, %v2779
    %v2781 = vrot.slane %v2767, %v2780
    %v2783 = vcombine.high %v2426, %v2426
    %v2785 = vunpack.c.l.s4 1966171168
    %v2786 = vunpack.c.0.s8 %v2785
    %v2787 = vlaneseq
    %v2788 = vshrl.u32 %v2787, 7
    %v2789 = vsub.s32 %v2786, %v2788
    %v2790 = vrot.slane %v2783, %v2789
    %v2791 = vcombine.high %v2790, %v2790
    %v2793 = vunpack.c.l.s4 1966171168
    %v2794 = vunpack.c.0.s8 %v2793
    %v2795 = vlaneseq
    %v2796 = vshrl.u32 %v2795, 7
    %v2797 = vsub.s32 %v2794, %v2796
    %v2798 = vrot.slane %v2790, %v2797
    %v2800 = vunpack.c.l.s4 1966171168
    %v2801 = vunpack.c.0.s8 %v2800
    %v2802 = vlaneseq
    %v2803 = vshrl.u32 %v2802, 7
    %v2804 = vsub.s32 %v2801, %v2803
    %v2805 = vrot.slane %v2791, %v2804
    %v2806 = vcombine.high %v2798, %v2798
    %v2807 = vcombine.high %v2805, %v2805
    %v2808 = vlaneseq
    %v2809 = vshrl.u32 %v2808, 7
    %v2810 = vsub.s32 0, %v2809
    %v2811 = vrot.slane %v2473, %v2810
    %v2812 = vlaneseq
    %v2813 = vshrl.u32 %v2812, 7
    %v2814 = vsub.s32 0, %v2813
    %v2815 = vrot.slane %v2474, %v2814
    %v2818 = vlaneseq
    %v2819 = vshrl.u32 %v2818, 7
    %v2820 = vsub.s32 0, %v2819
    %v2821 = vrot.slane %v2490, %v2820
    %v2822 = vlaneseq
    %v2823 = vshrl.u32 %v2822, 7
    %v2824 = vsub.s32 0, %v2823
    %v2825 = vrot.slane %v2497, %v2824
    %v2828 = vlaneseq
    %v2829 = vshrl.u32 %v2828, 7
    %v2830 = vsub.s32 0, %v2829
    %v2831 = vrot.slane %v2521, %v2830
    %v2832 = vlaneseq
    %v2833 = vshrl.u32 %v2832, 7
    %v2834 = vsub.s32 0, %v2833
    %v2835 = vrot.slane %v2522, %v2834
    %v2838 = vlaneseq
    %v2839 = vshrl.u32 %v2838, 7
    %v2840 = vsub.s32 0, %v2839
    %v2841 = vrot.slane %v2537, %v2840
    %v2842 = vlaneseq
    %v2843 = vshrl.u32 %v2842, 7
    %v2844 = vsub.s32 0, %v2843
    %v2845 = vrot.slane %v2544, %v2844
    %v2848 = vlaneseq
    %v2849 = vshrl.u32 %v2848, 7
    %v2850 = vsub.s32 0, %v2849
    %v2851 = vrot.slane %v2567, %v2850
    %v2852 = vlaneseq
    %v2853 = vshrl.u32 %v2852, 7
    %v2854 = vsub.s32 0, %v2853
    %v2855 = vrot.slane %v2568, %v2854
    %v2858 = vlaneseq
    %v2859 = vshrl.u32 %v2858, 7
    %v2860 = vsub.s32 0, %v2859
    %v2861 = vrot.slane %v2584, %v2860
    %v2862 = vlaneseq
    %v2863 = vshrl.u32 %v2862, 7
    %v2864 = vsub.s32 0, %v2863
    %v2865 = vrot.slane %v2591, %v2864
    %v2868 = vlaneseq
    %v2869 = vshrl.u32 %v2868, 7
    %v2870 = vsub.s32 0, %v2869
    %v2871 = vrot.slane %v2615, %v2870
    %v2872 = vlaneseq
    %v2873 = vshrl.u32 %v2872, 7
    %v2874 = vsub.s32 0, %v2873
    %v2875 = vrot.slane %v2616, %v2874
    %v2878 = vlaneseq
    %v2879 = vshrl.u32 %v2878, 7
    %v2880 = vsub.s32 0, %v2879
    %v2881 = vrot.slane %v2663, %v2880
    %v2882 = vlaneseq
    %v2883 = vshrl.u32 %v2882, 7
    %v2884 = vsub.s32 0, %v2883
    %v2885 = vrot.slane %v2664, %v2884
    %v2888 = vlaneseq
    %v2889 = vshrl.u32 %v2888, 7
    %v2890 = vsub.s32 0, %v2889
    %v2891 = vrot.slane %v2680, %v2890
    %v2892 = vlaneseq
    %v2893 = vshrl.u32 %v2892, 7
    %v2894 = vsub.s32 0, %v2893
    %v2895 = vrot.slane %v2687, %v2894
    %v2898 = vlaneseq
    %v2899 = vshrl.u32 %v2898, 7
    %v2900 = vsub.s32 0, %v2899
    %v2901 = vrot.slane %v2711, %v2900
    %v2902 = vlaneseq
    %v2903 = vshrl.u32 %v2902, 7
    %v2904 = vsub.s32 0, %v2903
    %v2905 = vrot.slane %v2712, %v2904
    %v2908 = vlaneseq
    %v2909 = vshrl.u32 %v2908, 7
    %v2910 = vsub.s32 0, %v2909
    %v2911 = vrot.slane %v2727, %v2910
    %v2912 = vlaneseq
    %v2913 = vshrl.u32 %v2912, 7
    %v2914 = vsub.s32 0, %v2913
    %v2915 = vrot.slane %v2734, %v2914
    %v2918 = vlaneseq
    %v2919 = vshrl.u32 %v2918, 7
    %v2920 = vsub.s32 0, %v2919
    %v2921 = vrot.slane %v2757, %v2920
    %v2922 = vlaneseq
    %v2923 = vshrl.u32 %v2922, 7
    %v2924 = vsub.s32 0, %v2923
    %v2925 = vrot.slane %v2758, %v2924
    %v2928 = vlaneseq
    %v2929 = vshrl.u32 %v2928, 7
    %v2930 = vsub.s32 0, %v2929
    %v2931 = vrot.slane %v2774, %v2930
    %v2932 = vlaneseq
    %v2933 = vshrl.u32 %v2932, 7
    %v2934 = vsub.s32 0, %v2933
    %v2935 = vrot.slane %v2781, %v2934
    %v2938 = vlaneseq
    %v2939 = vshrl.u32 %v2938, 7
    %v2940 = vsub.s32 0, %v2939
    %v2941 = vrot.slane %v2806, %v2940
    %v2942 = vlaneseq
    %v2943 = vshrl.u32 %v2942, 7
    %v2944 = vsub.s32 0, %v2943
    %v2945 = vrot.slane %v2807, %v2944
    %vm2948 = vcmask 1040384
    %v2949 = vsel %vm2948, %v2441, %v2811
    %v2950 = vsel %vm2948, %v2448, %v2815
    %vm2951 = vcmask 1041408
    %v2952 = vsel %vm2951, %v2949, %v2821
    %v2953 = vsel %vm2951, %v2950, %v2825
    %vm2954 = vcmask 1042432
    %v2955 = vsel %vm2954, %v2952, %v2831
    %v2956 = vsel %vm2954, %v2953, %v2835
    %vm2957 = vcmask 1043456
    %v2958 = vsel %vm2957, %v2955, %v2841
    %v2959 = vsel %vm2957, %v2956, %v2845
    %vm2960 = vcmask 1044480
    %v2961 = vsel %vm2960, %v2958, %v2851
    %v2962 = vsel %vm2960, %v2959, %v2855
    %vm2963 = vcmask 1045504
    %v2964 = vsel %vm2963, %v2961, %v2861
    %v2965 = vsel %vm2963, %v2962, %v2865
    %vm2966 = vcmask 1046528
    %v2967 = vsel %vm2966, %v2964, %v2871
    %v2968 = vsel %vm2966, %v2965, %v2875
    %v2969 = vsel %vm2948, %v2631, %v2881
    %v2970 = vsel %vm2948, %v2638, %v2885
    %v2971 = vsel %vm2951, %v2969, %v2891
    %v2972 = vsel %vm2951, %v2970, %v2895
    %v2973 = vsel %vm2954, %v2971, %v2901
    %v2974 = vsel %vm2954, %v2972, %v2905
    %v2975 = vsel %vm2957, %v2973, %v2911
    %v2976 = vsel %vm2957, %v2974, %v2915
    %v2977 = vsel %vm2960, %v2975, %v2921
    %v2978 = vsel %vm2960, %v2976, %v2925
    %v2979 = vsel %vm2963, %v2977, %v2931
    %v2980 = vsel %vm2963, %v2978, %v2935
    %v2981 = vsel %vm2966, %v2979, %v2941
    %v2982 = vsel %vm2966, %v2980, %v2945
    %v2983 = vld [vmem:[%s13] sm:$0xff]
    %v2984 = vld [vmem:[%s13 + $0x8] sm:$0xff]
    %v2985 = vld [vmem:[%s13 + $0x10] sm:$0xff]
    %v2986 = vld [vmem:[%s13 + $0x18] sm:$0xff]
    %v2987 = vld [vmem:[%s1] sm:$0xff]
    %v2989 = vsel %vm147, %v2987, 0
    %2991 = vmatprep.subr.mxu0 0.0
    %2992 = vmatpush1.msra.mxu0 %v2983
    %2993 = vmatprep.subr.mxu0 0.0
    %2994 = vmatpush1.msra.mxu0 %v2984
    %2995 = vmatprep.subr.mxu0 0.0
    %2996 = vmatpush1.msra.mxu0 %v2985
    %2997 = vmatprep.subr.mxu0 0.0
    %2998 = vmatpush1.msra.mxu0 %v2986
    %2999 = vmatprep.subr.mxu0 0.0
    %3000 = vmatpush1.msra.mxu0 0.0
    %3001 = vmatprep.subr.mxu0 0.0
    %3002 = vmatpush1.msra.mxu0 0.0
    %3003 = vmatprep.subr.mxu0 0.0
    %3004 = vmatpush1.msra.mxu0 0.0
    %3005 = vmatprep.subr.mxu0 0.0
    %3006 = vmatpush1.msra.mxu0 0.0
    %3007 = vmatprep.subr.mxu0 0.0
    %3008 = vmatpush1.msra.mxu0 0.0
    %3009 = vmatprep.subr.mxu0 0.0
    %3010 = vmatpush1.msra.mxu0 0.0
    %3011 = vmatprep.subr.mxu0 0.0
    %3012 = vmatpush1.msra.mxu0 0.0
    %3013 = vmatprep.subr.mxu0 0.0
    %3014 = vmatpush1.msra.mxu0 0.0
    %3015 = vmatprep.subr.mxu0 0.0
    %3016 = vmatpush1.msra.mxu0 0.0
    %3017 = vmatprep.subr.mxu0 0.0
    %3018 = vmatpush1.msra.mxu0 0.0
    %3019 = vmatprep.subr.mxu0 0.0
    %3020 = vmatpush1.msra.mxu0 0.0
    %3021 = vmatprep.subr.mxu0 0.0
    %3022 = vmatpush1.msra.mxu0 0.0
    %3023 = vmatprep.subr.mxu0 0.0
    %3024 = vmatpush1.msra.mxu0 0.0
    %3025 = vmatprep.subr.mxu0 0.0
    %3026 = vmatpush1.msra.mxu0 0.0
    %3027 = vmatprep.subr.mxu0 0.0
    %3028 = vmatpush1.msra.mxu0 0.0
    %3029 = vmatprep.subr.mxu0 0.0
    %3030 = vmatpush1.msra.mxu0 0.0
    %3031 = vmatprep.subr.mxu0 0.0
    %3032 = vmatpush1.msra.mxu0 0.0
    %3033 = vmatprep.subr.mxu0 0.0
    %3034 = vmatpush1.msra.mxu0 0.0
    %3035 = vmatprep.subr.mxu0 0.0
    %3036 = vmatpush1.msra.mxu0 0.0
    %3037 = vmatprep.subr.mxu0 0.0
    %3038 = vmatpush1.msra.mxu0 0.0
    %3039 = vmatprep.subr.mxu0 0.0
    %3040 = vmatpush1.msra.mxu0 0.0
    %3041 = vmatprep.subr.mxu0 0.0
    %3042 = vmatpush1.msra.mxu0 0.0
    %3043 = vmatprep.subr.mxu0 0.0
    %3044 = vmatpush1.msra.mxu0 0.0
    %3045 = vmatprep.subr.mxu0 0.0
    %3046 = vmatpush1.msra.mxu0 0.0
    %3047 = vmatprep.subr.mxu0 0.0
    %3048 = vmatpush1.msra.mxu0 0.0
    %3049 = vmatprep.subr.mxu0 0.0
    %3050 = vmatpush1.msra.mxu0 0.0
    %3051 = vmatprep.subr.mxu0 0.0
    %3052 = vmatpush1.msra.mxu0 0.0
    %3053 = vmatprep.subr.mxu0 0.0
    %3054 = vmatpush1.msra.mxu0 0.0
    %3055 = vmatprep.mubr.f32.mxu0 0.0
    %3056 = vmatmul.mubr.f32.gmra.mrb[0].mxu0 %v2989
    %v3057 = vpop.f32.mrb[0].mxu0
    %v3058 = vadd.f32 0.0, %v3057
    %v3059 = vpop.f32.mrb[0].mxu0
    %3060 = vdwg.mxu0
    %3063 = vrot.lane.b32.xlu0 %v2967, 112
    %v3064 = vpop.permute.xlu0 %3063
    %3065 = vrot.lane.b32.xlu0 %v2981, 112
    %v3066 = vpop.permute.xlu0 %3065
    %vm3067 = vcmask 64512
    %v3069 = vsel %vm3067, %v3058, 0
    %v3071 = vsel %vm3067, %v3064, 0
    %v3073 = vsel %vm3067, %v3066, 0
    %3075 = vmatprep.subr.mxu0 0.0
    %3076 = vmatpush1.xpose.msra.mxu0 %v3071
    %3077 = vmatprep.subr.mxu0 0.0
    %3078 = vmatpush1.xpose.msra.mxu0 %v3073
    %3079 = vmatprep.subr.mxu0 0.0
    %3080 = vmatpush1.xpose.msra.mxu0 0.0
    %3081 = vmatprep.subr.mxu0 0.0
    %3082 = vmatpush1.xpose.msra.mxu0 0.0
    %3083 = vmatprep.subr.mxu0 0.0
    %3084 = vmatpush1.xpose.msra.mxu0 0.0
    %3085 = vmatprep.subr.mxu0 0.0
    %3086 = vmatpush1.xpose.msra.mxu0 0.0
    %3087 = vmatprep.subr.mxu0 0.0
    %3088 = vmatpush1.xpose.msra.mxu0 0.0
    %3089 = vmatprep.subr.mxu0 0.0
    %3090 = vmatpush1.xpose.msra.mxu0 0.0
    %3091 = vmatprep.subr.mxu0 0.0
    %3092 = vmatpush1.xpose.msra.mxu0 0.0
    %3093 = vmatprep.subr.mxu0 0.0
    %3094 = vmatpush1.xpose.msra.mxu0 0.0
    %3095 = vmatprep.subr.mxu0 0.0
    %3096 = vmatpush1.xpose.msra.mxu0 0.0
    %3097 = vmatprep.subr.mxu0 0.0
    %3098 = vmatpush1.xpose.msra.mxu0 0.0
    %3099 = vmatprep.subr.mxu0 0.0
    %3100 = vmatpush1.xpose.msra.mxu0 0.0
    %3101 = vmatprep.subr.mxu0 0.0
    %3102 = vmatpush1.xpose.msra.mxu0 0.0
    %3103 = vmatprep.subr.mxu0 0.0
    %3104 = vmatpush1.xpose.msra.mxu0 0.0
    %3105 = vmatprep.subr.mxu0 0.0
    %3106 = vmatpush1.xpose.msra.mxu0 0.0
    %3107 = vmatprep.subr.mxu0 0.0
    %3108 = vmatpush1.xpose.msra.mxu0 0.0
    %3109 = vmatprep.subr.mxu0 0.0
    %3110 = vmatpush1.xpose.msra.mxu0 0.0
    %3111 = vmatprep.subr.mxu0 0.0
    %3112 = vmatpush1.xpose.msra.mxu0 0.0
    %3113 = vmatprep.subr.mxu0 0.0
    %3114 = vmatpush1.xpose.msra.mxu0 0.0
    %3115 = vmatprep.subr.mxu0 0.0
    %3116 = vmatpush1.xpose.msra.mxu0 0.0
    %3117 = vmatprep.subr.mxu0 0.0
    %3118 = vmatpush1.xpose.msra.mxu0 0.0
    %3119 = vmatprep.subr.mxu0 0.0
    %3120 = vmatpush1.xpose.msra.mxu0 0.0
    %3121 = vmatprep.subr.mxu0 0.0
    %3122 = vmatpush1.xpose.msra.mxu0 0.0
    %3123 = vmatprep.subr.mxu0 0.0
    %3124 = vmatpush1.xpose.msra.mxu0 0.0
    %3125 = vmatprep.subr.mxu0 0.0
    %3126 = vmatpush1.xpose.msra.mxu0 0.0
    %3127 = vmatprep.subr.mxu0 0.0
    %3128 = vmatpush1.xpose.msra.mxu0 0.0
    %3129 = vmatprep.subr.mxu0 0.0
    %3130 = vmatpush1.xpose.msra.mxu0 0.0
    %3131 = vmatprep.subr.mxu0 0.0
    %3132 = vmatpush1.xpose.msra.mxu0 0.0
    %3133 = vmatprep.subr.mxu0 0.0
    %3134 = vmatpush1.xpose.msra.mxu0 0.0
    %3135 = vmatprep.subr.mxu0 0.0
    %3136 = vmatpush1.xpose.msra.mxu0 0.0
    %3137 = vmatprep.subr.mxu0 0.0
    %3138 = vmatpush1.xpose.msra.mxu0 0.0
    %3139 = vmatprep.mubr.f32.mxu0 0.0
    %3140 = vmatmul.mubr.f32.gmra.mrb[0].mxu0 %v3069
    %v3141 = vpop.f32.mrb[0].mxu0
    %v3142 = vadd.f32 0.0, %v3141
    %v3143 = vpop.f32.mrb[0].mxu0
    %3144 = vdwg.mxu0
    %v3145 = vld [vmem:[%s2] sm:$0xff]
    %vm3146 = vcmp.eq.f32.partialorder %v3145, 0.0
    %v3147 = vsel %vm3146, 1e-09, %v3142
    %v3148 = vsel %vm142, %v3147, -inf
    %3149 = vmax.xlane.f32.xlu0 %v3148
    %v3150 = vpop.xlane.xlu0 %3149
    %v3151 = vsub.f32 %v3147, %v3150
    %v3152 = vmul.f32 %v3151, 1.442695
    %v3153 = vpow.pop %v3152
    %v3154 = vsel %vm142, %v3153, 0.0
    %3155 = vadd.xlane.f32.xlu0 %v3154
    %v3156 = vpop.xlane.xlu0 %3155
    %v3157 = vrcp.pop %v3156
    %v3158 = vmul.f32 %v3153, %v3157
    %3159 = vrot.lane.b32.xlu0 %v2967, 104
    %v3160 = vpop.permute.xlu0 %3159
    %3161 = vrot.lane.b32.xlu0 %v2981, 104
    %v3162 = vpop.permute.xlu0 %3161
    %v3166 = vsel %vm142, %v3158, 0
    %3168 = vmatprep.subr.mxu0 0.0
    %3169 = vmatpush1.msra.mxu0 %v3160
    %3170 = vmatprep.subr.mxu0 0.0
    %3171 = vmatpush1.msra.mxu0 %v3162
    %3172 = vmatprep.subr.mxu0 0.0
    %3173 = vmatpush1.msra.mxu0 0.0
    %3174 = vmatprep.subr.mxu0 0.0
    %3175 = vmatpush1.msra.mxu0 0.0
    %3176 = vmatprep.subr.mxu0 0.0
    %3177 = vmatpush1.msra.mxu0 0.0
    %3178 = vmatprep.subr.mxu0 0.0
    %3179 = vmatpush1.msra.mxu0 0.0
    %3180 = vmatprep.subr.mxu0 0.0
    %3181 = vmatpush1.msra.mxu0 0.0
    %3182 = vmatprep.subr.mxu0 0.0
    %3183 = vmatpush1.msra.mxu0 0.0
    %3184 = vmatprep.subr.mxu0 0.0
    %3185 = vmatpush1.msra.mxu0 0.0
    %3186 = vmatprep.subr.mxu0 0.0
    %3187 = vmatpush1.msra.mxu0 0.0
    %3188 = vmatprep.subr.mxu0 0.0
    %3189 = vmatpush1.msra.mxu0 0.0
    %3190 = vmatprep.subr.mxu0 0.0
    %3191 = vmatpush1.msra.mxu0 0.0
    %3192 = vmatprep.subr.mxu0 0.0
    %3193 = vmatpush1.msra.mxu0 0.0
    %3194 = vmatprep.subr.mxu0 0.0
    %3195 = vmatpush1.msra.mxu0 0.0
    %3196 = vmatprep.subr.mxu0 0.0
    %3197 = vmatpush1.msra.mxu0 0.0
    %3198 = vmatprep.subr.mxu0 0.0
    %3199 = vmatpush1.msra.mxu0 0.0
    %3200 = vmatprep.subr.mxu0 0.0
    %3201 = vmatpush1.msra.mxu0 0.0
    %3202 = vmatprep.subr.mxu0 0.0
    %3203 = vmatpush1.msra.mxu0 0.0
    %3204 = vmatprep.subr.mxu0 0.0
    %3205 = vmatpush1.msra.mxu0 0.0
    %3206 = vmatprep.subr.mxu0 0.0
    %3207 = vmatpush1.msra.mxu0 0.0
    %3208 = vmatprep.subr.mxu0 0.0
    %3209 = vmatpush1.msra.mxu0 0.0
    %3210 = vmatprep.subr.mxu0 0.0
    %3211 = vmatpush1.msra.mxu0 0.0
    %3212 = vmatprep.subr.mxu0 0.0
    %3213 = vmatpush1.msra.mxu0 0.0
    %3214 = vmatprep.subr.mxu0 0.0
    %3215 = vmatpush1.msra.mxu0 0.0
    %3216 = vmatprep.subr.mxu0 0.0
    %3217 = vmatpush1.msra.mxu0 0.0
    %3218 = vmatprep.subr.mxu0 0.0
    %3219 = vmatpush1.msra.mxu0 0.0
    %3220 = vmatprep.subr.mxu0 0.0
    %3221 = vmatpush1.msra.mxu0 0.0
    %3222 = vmatprep.subr.mxu0 0.0
    %3223 = vmatpush1.msra.mxu0 0.0
    %3224 = vmatprep.subr.mxu0 0.0
    %3225 = vmatpush1.msra.mxu0 0.0
    %3226 = vmatprep.subr.mxu0 0.0
    %3227 = vmatpush1.msra.mxu0 0.0
    %3228 = vmatprep.subr.mxu0 0.0
    %3229 = vmatpush1.msra.mxu0 0.0
    %3230 = vmatprep.subr.mxu0 0.0
    %3231 = vmatpush1.msra.mxu0 0.0
    %3232 = vmatprep.mubr.f32.mxu0 0.0
    %3233 = vmatmul.mubr.f32.gmra.mrb[0].mxu0 %v3166
    %v3234 = vpop.f32.mrb[0].mxu0
    %v3235 = vadd.f32 0.0, %v3234
    %v3236 = vpop.f32.mrb[0].mxu0
    %3237 = vdwg.mxu0
    %v3238 = vmax.f32 %v3235, 0.0
    %3239 = vst.msk [vmem:[#allocation2] sm:$0xff] %vm3067, %v3238
    %3240 = vst.msk [vmem:[#allocation4] sm:$0xff] %vm142, %v3158
    %s3241 = scalar_lea.vmem %s1, 8
    %v3242 = vld [vmem:[%s3241] sm:$0xff]
    %v3244 = vsel %vm147, %v3242, 0
    %3246 = vmatprep.subr.mxu0 0.0
    %3247 = vmatpush1.msra.mxu0 %v2983
    %3248 = vmatprep.subr.mxu0 0.0
    %3249 = vmatpush1.msra.mxu0 %v2984
    %3250 = vmatprep.subr.mxu0 0.0
    %3251 = vmatpush1.msra.mxu0 %v2985
    %3252 = vmatprep.subr.mxu0 0.0
    %3253 = vmatpush1.msra.mxu0 %v2986
    %3254 = vmatprep.subr.mxu0 0.0
    %3255 = vmatpush1.msra.mxu0 0.0
    %3256 = vmatprep.subr.mxu0 0.0
    %3257 = vmatpush1.msra.mxu0 0.0
    %3258 = vmatprep.subr.mxu0 0.0
    %3259 = vmatpush1.msra.mxu0 0.0
    %3260 = vmatprep.subr.mxu0 0.0
    %3261 = vmatpush1.msra.mxu0 0.0
    %3262 = vmatprep.subr.mxu0 0.0
    %3263 = vmatpush1.msra.mxu0 0.0
    %3264 = vmatprep.subr.mxu0 0.0
    %3265 = vmatpush1.msra.mxu0 0.0
    %3266 = vmatprep.subr.mxu0 0.0
    %3267 = vmatpush1.msra.mxu0 0.0
    %3268 = vmatprep.subr.mxu0 0.0
    %3269 = vmatpush1.msra.mxu0 0.0
    %3270 = vmatprep.subr.mxu0 0.0
    %3271 = vmatpush1.msra.mxu0 0.0
    %3272 = vmatprep.subr.mxu0 0.0
    %3273 = vmatpush1.msra.mxu0 0.0
    %3274 = vmatprep.subr.mxu0 0.0
    %3275 = vmatpush1.msra.mxu0 0.0
    %3276 = vmatprep.subr.mxu0 0.0
    %3277 = vmatpush1.msra.mxu0 0.0
    %3278 = vmatprep.subr.mxu0 0.0
    %3279 = vmatpush1.msra.mxu0 0.0
    %3280 = vmatprep.subr.mxu0 0.0
    %3281 = vmatpush1.msra.mxu0 0.0
    %3282 = vmatprep.subr.mxu0 0.0
    %3283 = vmatpush1.msra.mxu0 0.0
    %3284 = vmatprep.subr.mxu0 0.0
    %3285 = vmatpush1.msra.mxu0 0.0
    %3286 = vmatprep.subr.mxu0 0.0
    %3287 = vmatpush1.msra.mxu0 0.0
    %3288 = vmatprep.subr.mxu0 0.0
    %3289 = vmatpush1.msra.mxu0 0.0
    %3290 = vmatprep.subr.mxu0 0.0
    %3291 = vmatpush1.msra.mxu0 0.0
    %3292 = vmatprep.subr.mxu0 0.0
    %3293 = vmatpush1.msra.mxu0 0.0
    %3294 = vmatprep.subr.mxu0 0.0
    %3295 = vmatpush1.msra.mxu0 0.0
    %3296 = vmatprep.subr.mxu0 0.0
    %3297 = vmatpush1.msra.mxu0 0.0
    %3298 = vmatprep.subr.mxu0 0.0
    %3299 = vmatpush1.msra.mxu0 0.0
    %3300 = vmatprep.subr.mxu0 0.0
    %3301 = vmatpush1.msra.mxu0 0.0
    %3302 = vmatprep.subr.mxu0 0.0
    %3303 = vmatpush1.msra.mxu0 0.0
    %3304 = vmatprep.subr.mxu0 0.0
    %3305 = vmatpush1.msra.mxu0 0.0
    %3306 = vmatprep.subr.mxu0 0.0
    %3307 = vmatpush1.msra.mxu0 0.0
    %3308 = vmatprep.subr.mxu0 0.0
    %3309 = vmatpush1.msra.mxu0 0.0
    %3310 = vmatprep.mubr.f32.mxu0 0.0
    %3311 = vmatmul.mubr.f32.gmra.mrb[0].mxu0 %v3244
    %v3312 = vpop.f32.mrb[0].mxu0
    %v3313 = vadd.f32 0.0, %v3312
    %v3314 = vpop.f32.mrb[0].mxu0
    %3315 = vdwg.mxu0
    %3318 = vrot.lane.b32.xlu0 %v2968, 112
    %v3319 = vpop.permute.xlu0 %3318
    %3320 = vrot.lane.b32.xlu0 %v2982, 112
    %v3321 = vpop.permute.xlu0 %3320
    %v3323 = vsel %vm3067, %v3313, 0
    %v3325 = vsel %vm3067, %v3319, 0
    %v3327 = vsel %vm3067, %v3321, 0
    %3329 = vmatprep.subr.mxu0 0.0
    %3330 = vmatpush1.xpose.msra.mxu0 %v3325
    %3331 = vmatprep.subr.mxu0 0.0
    %3332 = vmatpush1.xpose.msra.mxu0 %v3327
    %3333 = vmatprep.subr.mxu0 0.0
    %3334 = vmatpush1.xpose.msra.mxu0 0.0
    %3335 = vmatprep.subr.mxu0 0.0
    %3336 = vmatpush1.xpose.msra.mxu0 0.0
    %3337 = vmatprep.subr.mxu0 0.0
    %3338 = vmatpush1.xpose.msra.mxu0 0.0
    %3339 = vmatprep.subr.mxu0 0.0
    %3340 = vmatpush1.xpose.msra.mxu0 0.0
    %3341 = vmatprep.subr.mxu0 0.0
    %3342 = vmatpush1.xpose.msra.mxu0 0.0
    %3343 = vmatprep.subr.mxu0 0.0
    %3344 = vmatpush1.xpose.msra.mxu0 0.0
    %3345 = vmatprep.subr.mxu0 0.0
    %3346 = vmatpush1.xpose.msra.mxu0 0.0
    %3347 = vmatprep.subr.mxu0 0.0
    %3348 = vmatpush1.xpose.msra.mxu0 0.0
    %3349 = vmatprep.subr.mxu0 0.0
    %3350 = vmatpush1.xpose.msra.mxu0 0.0
    %3351 = vmatprep.subr.mxu0 0.0
    %3352 = vmatpush1.xpose.msra.mxu0 0.0
    %3353 = vmatprep.subr.mxu0 0.0
    %3354 = vmatpush1.xpose.msra.mxu0 0.0
    %3355 = vmatprep.subr.mxu0 0.0
    %3356 = vmatpush1.xpose.msra.mxu0 0.0
    %3357 = vmatprep.subr.mxu0 0.0
    %3358 = vmatpush1.xpose.msra.mxu0 0.0
    %3359 = vmatprep.subr.mxu0 0.0
    %3360 = vmatpush1.xpose.msra.mxu0 0.0
    %3361 = vmatprep.subr.mxu0 0.0
    %3362 = vmatpush1.xpose.msra.mxu0 0.0
    %3363 = vmatprep.subr.mxu0 0.0
    %3364 = vmatpush1.xpose.msra.mxu0 0.0
    %3365 = vmatprep.subr.mxu0 0.0
    %3366 = vmatpush1.xpose.msra.mxu0 0.0
    %3367 = vmatprep.subr.mxu0 0.0
    %3368 = vmatpush1.xpose.msra.mxu0 0.0
    %3369 = vmatprep.subr.mxu0 0.0
    %3370 = vmatpush1.xpose.msra.mxu0 0.0
    %3371 = vmatprep.subr.mxu0 0.0
    %3372 = vmatpush1.xpose.msra.mxu0 0.0
    %3373 = vmatprep.subr.mxu0 0.0
    %3374 = vmatpush1.xpose.msra.mxu0 0.0
    %3375 = vmatprep.subr.mxu0 0.0
    %3376 = vmatpush1.xpose.msra.mxu0 0.0
    %3377 = vmatprep.subr.mxu0 0.0
    %3378 = vmatpush1.xpose.msra.mxu0 0.0
    %3379 = vmatprep.subr.mxu0 0.0
    %3380 = vmatpush1.xpose.msra.mxu0 0.0
    %3381 = vmatprep.subr.mxu0 0.0
    %3382 = vmatpush1.xpose.msra.mxu0 0.0
    %3383 = vmatprep.subr.mxu0 0.0
    %3384 = vmatpush1.xpose.msra.mxu0 0.0
    %3385 = vmatprep.subr.mxu0 0.0
    %3386 = vmatpush1.xpose.msra.mxu0 0.0
    %3387 = vmatprep.subr.mxu0 0.0
    %3388 = vmatpush1.xpose.msra.mxu0 0.0
    %3389 = vmatprep.subr.mxu0 0.0
    %3390 = vmatpush1.xpose.msra.mxu0 0.0
    %3391 = vmatprep.subr.mxu0 0.0
    %3392 = vmatpush1.xpose.msra.mxu0 0.0
    %3393 = vmatprep.mubr.f32.mxu0 0.0
    %3394 = vmatmul.mubr.f32.gmra.mrb[0].mxu0 %v3323
    %v3395 = vpop.f32.mrb[0].mxu0
    %v3396 = vadd.f32 0.0, %v3395
    %v3397 = vpop.f32.mrb[0].mxu0
    %3398 = vdwg.mxu0
    %s3399 = scalar_lea.vmem %s2, 8
    %v3400 = vld [vmem:[%s3399] sm:$0xff]
    %vm3401 = vcmp.eq.f32.partialorder %v3400, 0.0
    %v3402 = vsel %vm3401, 1e-09, %v3396
    %v3403 = vsel %vm142, %v3402, -inf
    %3404 = vmax.xlane.f32.xlu0 %v3403
    %v3405 = vpop.xlane.xlu0 %3404
    %v3406 = vsub.f32 %v3402, %v3405
    %v3407 = vmul.f32 %v3406, 1.442695
    %v3408 = vpow.pop %v3407
    %v3409 = vsel %vm142, %v3408, 0.0
    %3410 = vadd.xlane.f32.xlu0 %v3409
    %v3411 = vpop.xlane.xlu0 %3410
    %v3412 = vrcp.pop %v3411
    %v3413 = vmul.f32 %v3408, %v3412
    %3414 = vrot.lane.b32.xlu0 %v2968, 104
    %v3415 = vpop.permute.xlu0 %3414
    %3416 = vrot.lane.b32.xlu0 %v2982, 104
    %v3417 = vpop.permute.xlu0 %3416
    %v3421 = vsel %vm142, %v3413, 0
    %3423 = vmatprep.subr.mxu0 0.0
    %3424 = vmatpush1.msra.mxu0 %v3415
    %3425 = vmatprep.subr.mxu0 0.0
    %3426 = vmatpush1.msra.mxu0 %v3417
    %3427 = vmatprep.subr.mxu0 0.0
    %3428 = vmatpush1.msra.mxu0 0.0
    %3429 = vmatprep.subr.mxu0 0.0
    %3430 = vmatpush1.msra.mxu0 0.0
    %3431 = vmatprep.subr.mxu0 0.0
    %3432 = vmatpush1.msra.mxu0 0.0
    %3433 = vmatprep.subr.mxu0 0.0
    %3434 = vmatpush1.msra.mxu0 0.0
    %3435 = vmatprep.subr.mxu0 0.0
    %3436 = vmatpush1.msra.mxu0 0.0
    %3437 = vmatprep.subr.mxu0 0.0
    %3438 = vmatpush1.msra.mxu0 0.0
    %3439 = vmatprep.subr.mxu0 0.0
    %3440 = vmatpush1.msra.mxu0 0.0
    %3441 = vmatprep.subr.mxu0 0.0
    %3442 = vmatpush1.msra.mxu0 0.0
    %3443 = vmatprep.subr.mxu0 0.0
    %3444 = vmatpush1.msra.mxu0 0.0
    %3445 = vmatprep.subr.mxu0 0.0
    %3446 = vmatpush1.msra.mxu0 0.0
    %3447 = vmatprep.subr.mxu0 0.0
    %3448 = vmatpush1.msra.mxu0 0.0
    %3449 = vmatprep.subr.mxu0 0.0
    %3450 = vmatpush1.msra.mxu0 0.0
    %3451 = vmatprep.subr.mxu0 0.0
    %3452 = vmatpush1.msra.mxu0 0.0
    %3453 = vmatprep.subr.mxu0 0.0
    %3454 = vmatpush1.msra.mxu0 0.0
    %3455 = vmatprep.subr.mxu0 0.0
    %3456 = vmatpush1.msra.mxu0 0.0
    %3457 = vmatprep.subr.mxu0 0.0
    %3458 = vmatpush1.msra.mxu0 0.0
    %3459 = vmatprep.subr.mxu0 0.0
    %3460 = vmatpush1.msra.mxu0 0.0
    %3461 = vmatprep.subr.mxu0 0.0
    %3462 = vmatpush1.msra.mxu0 0.0
    %3463 = vmatprep.subr.mxu0 0.0
    %3464 = vmatpush1.msra.mxu0 0.0
    %3465 = vmatprep.subr.mxu0 0.0
    %3466 = vmatpush1.msra.mxu0 0.0
    %3467 = vmatprep.subr.mxu0 0.0
    %3468 = vmatpush1.msra.mxu0 0.0
    %3469 = vmatprep.subr.mxu0 0.0
    %3470 = vmatpush1.msra.mxu0 0.0
    %3471 = vmatprep.subr.mxu0 0.0
    %3472 = vmatpush1.msra.mxu0 0.0
    %3473 = vmatprep.subr.mxu0 0.0
    %3474 = vmatpush1.msra.mxu0 0.0
    %3475 = vmatprep.subr.mxu0 0.0
    %3476 = vmatpush1.msra.mxu0 0.0
    %3477 = vmatprep.subr.mxu0 0.0
    %3478 = vmatpush1.msra.mxu0 0.0
    %3479 = vmatprep.subr.mxu0 0.0
    %3480 = vmatpush1.msra.mxu0 0.0
    %3481 = vmatprep.subr.mxu0 0.0
    %3482 = vmatpush1.msra.mxu0 0.0
    %3483 = vmatprep.subr.mxu0 0.0
    %3484 = vmatpush1.msra.mxu0 0.0
    %3485 = vmatprep.subr.mxu0 0.0
    %3486 = vmatpush1.msra.mxu0 0.0
    %3487 = vmatprep.mubr.f32.mxu0 0.0
    %3488 = vmatmul.mubr.f32.gmra.mrb[0].mxu0 %v3421
    %v3489 = vpop.f32.mrb[0].mxu0
    %v3490 = vadd.f32 0.0, %v3489
    %v3491 = vpop.f32.mrb[0].mxu0
    %3492 = vdwg.mxu0
    %v3493 = vmax.f32 %v3490, 0.0
    %s3494 = scalar_lea.vmem [#allocation2], 8
    %3495 = vst.msk [vmem:[%s3494] sm:$0xff] %vm3067, %v3493
    %s3496 = scalar_lea.vmem [#allocation4], 8
    %3497 = vst.msk [vmem:[%s3496] sm:$0xff] %vm142, %v3413
    // Predicated region
    $region58: #{text_side_prosody_encoder.1} parent=1 // pred_check
      _
    $region59: #{text_side_prosody_encoder.1} parent=1 // pred_check_branch
      %3499 = sbr.rel (0) target = $region61
    $region60: #{text_side_prosody_encoder.1} parent=1 // pred_region
      %s3501 = ssub.s32 256, 256
      %3502 = vsyncadd [#allocation3], %s3501
      %s3503 = sshll.u32 [#allocation2], 4
      %s3504 = int_to_ptr.vmem [resolvable:$true] %s3503
      %3509 = dma.vmem_to_hbm [thread:$0]  %s3504, 256, %s14, [#allocation3], 128, 128, 8
    $region61: #{text_side_prosody_encoder.1} parent=1 // pred_fallthru
      _
    // Predicated region
    $region62: #{text_side_prosody_encoder.1} parent=1 // pred_check
      _
    $region63: #{text_side_prosody_encoder.1} parent=1 // pred_check_branch
      %3511 = sbr.rel (0) target = $region65
    $region64: #{text_side_prosody_encoder.1} parent=1 // pred_region
      %s3513 = ssub.s32 256, 256
      %3514 = vsyncadd [#allocation5], %s3513
      %s3515 = sshll.u32 [#allocation4], 4
      %s3516 = int_to_ptr.vmem [resolvable:$true] %s3515
      %3521 = dma.vmem_to_hbm [thread:$0]  %s3516, 256, %s15, [#allocation5], 128, 128, 8
    $region65: #{text_side_prosody_encoder.1} parent=1 // pred_fallthru
      _
    // Predicated region
    $region66: #{text_side_prosody_encoder.1} parent=1 // pred_check
      _
    $region67: #{text_side_prosody_encoder.1} parent=1 // pred_check_branch
      %3523 = sbr.rel (0) target = $region69
    $region68: #{text_side_prosody_encoder.1} parent=1 // pred_region
      %3524 = dma.done [#allocation3], 256
    $region69: #{text_side_prosody_encoder.1} parent=1 // pred_fallthru
      _
    // Predicated region
    $region70: #{text_side_prosody_encoder.1} parent=1 // pred_check
      _
    $region71: #{text_side_prosody_encoder.1} parent=1 // pred_check_branch
      %3526 = sbr.rel (0) target = $region73
    $region72: #{text_side_prosody_encoder.1} parent=1 // pred_region
      %3527 = dma.done [#allocation5], 256
    $region73: #{text_side_prosody_encoder.1} parent=1 // pred_fallthru
      _
    %3528 = vsyncpa [#allocation3], 1
    %3529 = vsyncpa [#allocation5], 1

</llo_original>
